<compile_context>
chip_gen: v7x
topology: tpu7x:2x2x1
jax: 0.10.0
libtpu: 0.0.40
codegen_flags: <defaults>
</compile_context>

<pallas_src>
import functools

import jax
import jax.numpy as jnp
from jax.experimental import pallas as pl
from jax.experimental.pallas import tpu as pltpu


# ------------------------------------------------------------------
# Fused forward kernel: n_layers GRU layers + Linear->Linear head.
# Single grid point; the time recurrence is a fully-unrolled static loop.
# ------------------------------------------------------------------
def tsnet_kernel(x_ref, *refs, n_layers, seq_len, batch, hidden):
    # refs layout:
    #   [w_ih (in,3H), w_hh (H,3H), b_ih (1,3H), b_hh (1,3H)] * n_layers,
    #   fc_w1 (H,F1), fc_b1 (1,F1), fc_w2 (F1,F2), fc_b2 (1,F2),
    #   out_ref (T*B, F2), gi_scratch (T*B, 3H), y_scratch (T*B, H)
    y_scratch = refs[-1]
    gi_scratch = refs[-2]
    out_ref = refs[-3]
    params = refs[:-3]
    w1_ref, b1_ref, w2_ref, b2_ref = params[4 * n_layers:4 * n_layers + 4]

    B = batch
    H = hidden

    y = x_ref[...]                       # (T*B, in) current layer input
    for layer in range(n_layers):
        w_ih = params[4 * layer][...]    # (in, 3H)   columns = [r | z | n]
        w_hh = params[4 * layer + 1][...]  # (H, 3H)
        b_ih = params[4 * layer + 2][...]  # (1, 3H)
        b_hh = params[4 * layer + 3][...]  # (1, 3H)

        # Hoisted input projection: one lane-dense matmul for all time steps.
        gi_scratch[...] = (
            jnp.dot(y, w_ih, preferred_element_type=jnp.float32) + b_ih)

        h = jnp.zeros((B, H), jnp.float32)   # hn = None in the PyTorch forward
        for t in range(seq_len):             # static trip count -> fully unrolled
            r0 = t * B                       # sublane-aligned (B % 8 == 0)
            gi_r = gi_scratch[r0:r0 + B, 0 * H:1 * H]
            gi_z = gi_scratch[r0:r0 + B, 1 * H:2 * H]
            gi_n = gi_scratch[r0:r0 + B, 2 * H:3 * H]

            # Only the hidden-state projection stays inside the recurrence.
            gh = jnp.dot(h, w_hh, preferred_element_type=jnp.float32) + b_hh
            gh_r = gh[:, 0 * H:1 * H]
            gh_z = gh[:, 1 * H:2 * H]
            gh_n = gh[:, 2 * H:3 * H]

            r = jax.nn.sigmoid(gi_r + gh_r)
            z = jax.nn.sigmoid(gi_z + gh_z)
            n = jnp.tanh(gi_n + r * gh_n)      # r * (W_hn h + b_hn), as in torch
            h = (1.0 - z) * n + z * h

            y_scratch[r0:r0 + B, :] = h
        y = y_scratch[...]                    # (T*B, H) layer output

    # Fused FC head: nn.Sequential(Linear, Linear) on the flattened sequence.
    y = jnp.dot(y, w1_ref[...], preferred_element_type=jnp.float32) + b1_ref[...]
    y = jnp.dot(y, w2_ref[...], preferred_element_type=jnp.float32) + b2_ref[...]
    # F2=1 output -> narrow-lane masked store; negligible at this size.
    out_ref[...] = y.astype(out_ref.dtype)


# ------------------------------------------------------------------
# Wrapper: pad batch to a sublane multiple, flatten time*batch, launch once.
# ------------------------------------------------------------------
def tsnet_forward(x, gru_params, fc_params, dropout=0.0):
    """x: (T, B, I).  gru_params: list of (w_ih (in,3H), w_hh (H,3H),
    b_ih (1,3H), b_hh (1,3H)).  fc_params: (w1, b1, w2, b2)."""
    if dropout != 0.0:
        # TODO(synk): stochastic dropout (p>0) not implemented in the kernel.
        raise NotImplementedError("Only dropout=0.0 (identity) is supported.")

    T, B, I = x.shape
    n_layers = len(gru_params)
    H = gru_params[0][1].shape[0]        # w_hh: (H, 3H)
    w1, b1, w2, b2 = fc_params
    F2 = w2.shape[1]

    # Pad batch up to a multiple of 8 so every row slice in-kernel is
    # sublane-aligned (padded rows are sliced off after the call).
    Bp = max(8, ((B + 7) // 8) * 8)
    if Bp != B:
        x = jnp.pad(x, ((0, 0), (0, Bp - B), (0, 0)))
    x2d = x.reshape(T * Bp, I).astype(jnp.float32)

    flat_inputs = [x2d]
    for p in gru_params:
        flat_inputs.extend(p)
    flat_inputs.extend(fc_params)
    # Every operand is 2-D and loaded whole into VMEM (single grid point).
    in_specs = [pl.BlockSpec(a.shape, lambda i: (0, 0)) for a in flat_inputs]

    grid_spec = pltpu.PrefetchScalarGridSpec(
        num_scalar_prefetch=0,
        grid=(1,),
        in_specs=in_specs,
        out_specs=pl.BlockSpec((T * Bp, F2), lambda i: (0, 0)),
        scratch_shapes=[
            pltpu.VMEM((T * Bp, 3 * H), jnp.float32),   # hoisted gate projection
            pltpu.VMEM((T * Bp, H), jnp.float32),       # per-layer GRU outputs
        ],
    )

    kernel = functools.partial(
        tsnet_kernel, n_layers=n_layers, seq_len=T, batch=Bp, hidden=H)

    out2d = pl.pallas_call(
        kernel,
        out_shape=jax.ShapeDtypeStruct((T * Bp, F2), jnp.float32),
        grid_spec=grid_spec,
        compiler_params=pltpu.CompilerParams(
            dimension_semantics=("arbitrary",)),
    )(*flat_inputs)

    return out2d.reshape(T, Bp, F2)[:, :B, :]


# ------------------------------------------------------------------
# Pure-JAX reference (for correctness check of the Pallas kernel).
# ------------------------------------------------------------------
def gru_layer_ref(x, w_ih, w_hh, b_ih, b_hh):
    B = x.shape[1]
    H = w_hh.shape[0]

    def step(h, xt):
        gi = xt @ w_ih + b_ih
        gh = h @ w_hh + b_hh
        r = jax.nn.sigmoid(gi[:, :H] + gh[:, :H])
        z = jax.nn.sigmoid(gi[:, H:2 * H] + gh[:, H:2 * H])
        n = jnp.tanh(gi[:, 2 * H:] + r * gh[:, 2 * H:])
        h_new = (1.0 - z) * n + z * h
        return h_new, h_new

    h0 = jnp.zeros((B, H), jnp.float32)
    _, ys = jax.lax.scan(step, h0, x)
    return ys


def tsnet_forward_ref(x, gru_params, fc_params):
    y = x
    for (w_ih, w_hh, b_ih, b_hh) in gru_params:
        y = gru_layer_ref(y, w_ih, w_hh, b_ih, b_hh)
    w1, b1, w2, b2 = fc_params
    y = y @ w1 + b1
    y = y @ w2 + b2
    return y


# ------------------------------------------------------------------
# Deterministic parameter construction (PyTorch-style uniform init),
# already in the concatenated-gate kernel layout: columns = [r | z | n].
# ------------------------------------------------------------------
def init_params(key, input_size, hidden_size, n_layers, linear_sizes):
    gru_params = []
    s = 1.0 / jnp.sqrt(hidden_size)
    for layer in range(n_layers):
        isz = input_size if layer == 0 else hidden_size
        key, k1, k2, k3, k4 = jax.random.split(key, 5)
        w_ih = jax.random.uniform(k1, (isz, 3 * hidden_size), jnp.float32, -s, s)
        w_hh = jax.random.uniform(k2, (hidden_size, 3 * hidden_size), jnp.float32, -s, s)
        b_ih = jax.random.uniform(k3, (1, 3 * hidden_size), jnp.float32, -s, s)
        b_hh = jax.random.uniform(k4, (1, 3 * hidden_size), jnp.float32, -s, s)
        gru_params.append((w_ih, w_hh, b_ih, b_hh))

    fc_params = []
    for (fin, fout) in linear_sizes:
        key, kw, kb = jax.random.split(key, 3)
        sl = 1.0 / jnp.sqrt(fin)
        w = jax.random.uniform(kw, (fin, fout), jnp.float32, -sl, sl)
        b = jax.random.uniform(kb, (1, fout), jnp.float32, -sl, sl)
        fc_params.extend([w, b])
    return gru_params, tuple(fc_params)


if __name__ == "__main__":
    # Small shapes consistent with the module's forward:
    #   input_features: (seq_len=8, batch=2, input_size=16)
    #   GRU hidden=128 (lane-aligned, per perf guidance), n_layers=2
    #   FC stack: 128 -> 16 -> 1
    T, B, I, H, NL = 8, 2, 16, 128, 2
    linear_sizes = [(H, 16), (16, 1)]

    key = jax.random.PRNGKey(0)
    key, kx = jax.random.split(key)
    x = jax.random.normal(kx, (T, B, I), dtype=jnp.float32)

    gru_params, fc_params = init_params(key, I, H, NL, linear_sizes)

    out = tsnet_forward(x, gru_params, fc_params, dropout=0.0)
    out = jax.block_until_ready(out)

    ref = tsnet_forward_ref(x, gru_params, fc_params)
    assert out.shape == (T, B, 1), out.shape
    assert jnp.allclose(out, ref, atol=1e-4, rtol=1e-4), (
        float(jnp.max(jnp.abs(out - ref))))

    print("KERNEL_OK")
</pallas_src>

<mosaic_0001>
module attributes {stable_mosaic.version = 11 : i64} {
  func.func @tsnet_kernel(%arg0: i32, %arg1: memref<64x16xf32, #tpu.memory_space<vmem>>, %arg2: memref<16x384xf32, #tpu.memory_space<vmem>>, %arg3: memref<128x384xf32, #tpu.memory_space<vmem>>, %arg4: memref<1x384xf32, #tpu.memory_space<vmem>>, %arg5: memref<1x384xf32, #tpu.memory_space<vmem>>, %arg6: memref<128x384xf32, #tpu.memory_space<vmem>>, %arg7: memref<128x384xf32, #tpu.memory_space<vmem>>, %arg8: memref<1x384xf32, #tpu.memory_space<vmem>>, %arg9: memref<1x384xf32, #tpu.memory_space<vmem>>, %arg10: memref<128x16xf32, #tpu.memory_space<vmem>>, %arg11: memref<1x16xf32, #tpu.memory_space<vmem>>, %arg12: memref<16x1xf32, #tpu.memory_space<vmem>>, %arg13: memref<1x1xf32, #tpu.memory_space<vmem>>, %arg14: memref<64x1xf32, #tpu.memory_space<vmem>>, %arg15: memref<64x384xf32, #tpu.memory_space<vmem>>, %arg16: memref<64x128xf32, #tpu.memory_space<vmem>>) attributes {dimension_semantics = [#tpu.dimension_semantics<arbitrary>], iteration_bounds = array<i64: 1>, scalar_prefetch = 0 : i64, scratch_operands = 2 : i64, tpu.core_type = #tpu.core_type<tc>, window_params = [{pipeline_mode = #tpu.pipeline_mode<synchronous>, transform_indices = @transform_0, window_bounds = array<i64: 64, 16>}, {pipeline_mode = #tpu.pipeline_mode<synchronous>, transform_indices = @transform_1, window_bounds = array<i64: 16, 384>}, {pipeline_mode = #tpu.pipeline_mode<synchronous>, transform_indices = @transform_2, window_bounds = array<i64: 128, 384>}, {pipeline_mode = #tpu.pipeline_mode<synchronous>, transform_indices = @transform_3, window_bounds = array<i64: 1, 384>}, {pipeline_mode = #tpu.pipeline_mode<synchronous>, transform_indices = @transform_4, window_bounds = array<i64: 1, 384>}, {pipeline_mode = #tpu.pipeline_mode<synchronous>, transform_indices = @transform_5, window_bounds = array<i64: 128, 384>}, {pipeline_mode = #tpu.pipeline_mode<synchronous>, transform_indices = @transform_6, window_bounds = array<i64: 128, 384>}, {pipeline_mode = #tpu.pipeline_mode<synchronous>, transform_indices = @transform_7, window_bounds = array<i64: 1, 384>}, {pipeline_mode = #tpu.pipeline_mode<synchronous>, transform_indices = @transform_8, window_bounds = array<i64: 1, 384>}, {pipeline_mode = #tpu.pipeline_mode<synchronous>, transform_indices = @transform_9, window_bounds = array<i64: 128, 16>}, {pipeline_mode = #tpu.pipeline_mode<synchronous>, transform_indices = @transform_10, window_bounds = array<i64: 1, 16>}, {pipeline_mode = #tpu.pipeline_mode<synchronous>, transform_indices = @transform_11, window_bounds = array<i64: 16, 1>}, {pipeline_mode = #tpu.pipeline_mode<synchronous>, transform_indices = @transform_12, window_bounds = array<i64: 1, 1>}, {pipeline_mode = #tpu.pipeline_mode<synchronous>, transform_indices = @transform_13, window_bounds = array<i64: 64, 1>}]} {
    %c0 = arith.constant 0 : index
    %c0_0 = arith.constant 0 : index
    %0 = vector.load %arg1[%c0, %c0_0] : memref<64x16xf32, #tpu.memory_space<vmem>>, vector<64x16xf32>
    %c0_1 = arith.constant 0 : index
    %c0_2 = arith.constant 0 : index
    %1 = vector.load %arg2[%c0_1, %c0_2] : memref<16x384xf32, #tpu.memory_space<vmem>>, vector<16x384xf32>
    %c0_3 = arith.constant 0 : index
    %c0_4 = arith.constant 0 : index
    %2 = vector.load %arg3[%c0_3, %c0_4] : memref<128x384xf32, #tpu.memory_space<vmem>>, vector<128x384xf32>
    %c0_5 = arith.constant 0 : index
    %c0_6 = arith.constant 0 : index
    %3 = vector.load %arg4[%c0_5, %c0_6] : memref<1x384xf32, #tpu.memory_space<vmem>>, vector<1x384xf32>
    %c0_7 = arith.constant 0 : index
    %c0_8 = arith.constant 0 : index
    %4 = vector.load %arg5[%c0_7, %c0_8] : memref<1x384xf32, #tpu.memory_space<vmem>>, vector<1x384xf32>
    %cst = arith.constant dense<0.000000e+00> : vector<64x384xf32>
    %5 = tpu.matmul %0, %1, %cst {dimension_numbers = #tpu.dot_dimension_numbers<[1], [0], [0], [1], [0, 0, 1, 1], [], []>} : vector<64x16xf32>, vector<16x384xf32>, vector<64x384xf32> -> vector<64x384xf32>
    %6 = vector.broadcast %3 : vector<1x384xf32> to vector<64x384xf32>
    %7 = arith.addf %5, %6 : vector<64x384xf32>
    %c0_9 = arith.constant 0 : index
    %c0_10 = arith.constant 0 : index
    %8 = vector.load %arg15[%c0_9, %c0_10] : memref<64x384xf32, #tpu.memory_space<vmem>>, vector<64x384xf32>
    tpu.vector_store %arg15[%c0_9, %c0_10], %7 {strides = array<i32>} : memref<64x384xf32, #tpu.memory_space<vmem>>, vector<64x384xf32>,
    %cst_11 = arith.constant 0.000000e+00 : f32
    %9 = vector.broadcast %cst_11 : f32 to vector<8x128xf32>
    %c0_12 = arith.constant 0 : index
    %c0_13 = arith.constant 0 : index
    %10 = vector.load %arg15[%c0_12, %c0_13] : memref<64x384xf32, #tpu.memory_space<vmem>>, vector<8x128xf32>
    %c0_14 = arith.constant 0 : index
    %c128 = arith.constant 128 : index
    %11 = vector.load %arg15[%c0_14, %c128] : memref<64x384xf32, #tpu.memory_space<vmem>>, vector<8x128xf32>
    %c0_15 = arith.constant 0 : index
    %c256 = arith.constant 256 : index
    %12 = vector.load %arg15[%c0_15, %c256] : memref<64x384xf32, #tpu.memory_space<vmem>>, vector<8x128xf32>
    %cst_16 = arith.constant dense<0.000000e+00> : vector<8x384xf32>
    %13 = tpu.matmul %9, %2, %cst_16 {dimension_numbers = #tpu.dot_dimension_numbers<[1], [0], [0], [1], [0, 0, 1, 1], [], []>} : vector<8x128xf32>, vector<128x384xf32>, vector<8x384xf32> -> vector<8x384xf32>
    %14 = vector.broadcast %4 : vector<1x384xf32> to vector<8x384xf32>
    %15 = arith.addf %13, %14 : vector<8x384xf32>
    %16 = vector.extract_strided_slice %15 {offsets = [0, 0], sizes = [8, 128], strides = [1, 1]} : vector<8x384xf32> to vector<8x128xf32>
    %17 = vector.extract_strided_slice %15 {offsets = [0, 128], sizes = [8, 128], strides = [1, 1]} : vector<8x384xf32> to vector<8x128xf32>
    %18 = vector.extract_strided_slice %15 {offsets = [0, 256], sizes = [8, 128], strides = [1, 1]} : vector<8x384xf32> to vector<8x128xf32>
    %19 = arith.addf %10, %16 : vector<8x128xf32>
    %20 = arith.negf %19 : vector<8x128xf32>
    %21 = math.exp %20 : vector<8x128xf32>
    %cst_17 = arith.constant 1.000000e+00 : f32
    %22 = vector.broadcast %cst_17 : f32 to vector<8x128xf32>
    %23 = arith.addf %22, %21 : vector<8x128xf32>
    %24 = arith.divf %22, %23 : vector<8x128xf32>
    %25 = arith.addf %11, %17 : vector<8x128xf32>
    %26 = arith.negf %25 : vector<8x128xf32>
    %27 = math.exp %26 : vector<8x128xf32>
    %cst_18 = arith.constant 1.000000e+00 : f32
    %28 = vector.broadcast %cst_18 : f32 to vector<8x128xf32>
    %29 = arith.addf %28, %27 : vector<8x128xf32>
    %30 = arith.divf %28, %29 : vector<8x128xf32>
    %31 = arith.mulf %24, %18 : vector<8x128xf32>
    %32 = arith.addf %12, %31 : vector<8x128xf32>
    %33 = math.tanh %32 : vector<8x128xf32>
    %cst_19 = arith.constant 1.000000e+00 : f32
    %34 = vector.broadcast %cst_19 : f32 to vector<8x128xf32>
    %35 = arith.subf %34, %30 : vector<8x128xf32>
    %36 = arith.mulf %35, %33 : vector<8x128xf32>
    %37 = arith.mulf %30, %9 : vector<8x128xf32>
    %38 = arith.addf %36, %37 : vector<8x128xf32>
    %c0_20 = arith.constant 0 : index
    %c0_21 = arith.constant 0 : index
    %39 = vector.load %arg16[%c0_20, %c0_21] : memref<64x128xf32, #tpu.memory_space<vmem>>, vector<8x128xf32>
    tpu.vector_store %arg16[%c0_20, %c0_21], %38 {strides = array<i32>} : memref<64x128xf32, #tpu.memory_space<vmem>>, vector<8x128xf32>,
    %c8 = arith.constant 8 : index
    %c0_22 = arith.constant 0 : index
    %40 = vector.load %arg15[%c8, %c0_22] : memref<64x384xf32, #tpu.memory_space<vmem>>, vector<8x128xf32>
    %c8_23 = arith.constant 8 : index
    %c128_24 = arith.constant 128 : index
    %41 = vector.load %arg15[%c8_23, %c128_24] : memref<64x384xf32, #tpu.memory_space<vmem>>, vector<8x128xf32>
    %c8_25 = arith.constant 8 : index
    %c256_26 = arith.constant 256 : index
    %42 = vector.load %arg15[%c8_25, %c256_26] : memref<64x384xf32, #tpu.memory_space<vmem>>, vector<8x128xf32>
    %cst_27 = arith.constant dense<0.000000e+00> : vector<8x384xf32>
    %43 = tpu.matmul %38, %2, %cst_27 {dimension_numbers = #tpu.dot_dimension_numbers<[1], [0], [0], [1], [0, 0, 1, 1], [], []>} : vector<8x128xf32>, vector<128x384xf32>, vector<8x384xf32> -> vector<8x384xf32>
    %44 = vector.broadcast %4 : vector<1x384xf32> to vector<8x384xf32>
    %45 = arith.addf %43, %44 : vector<8x384xf32>
    %46 = vector.extract_strided_slice %45 {offsets = [0, 0], sizes = [8, 128], strides = [1, 1]} : vector<8x384xf32> to vector<8x128xf32>
    %47 = vector.extract_strided_slice %45 {offsets = [0, 128], sizes = [8, 128], strides = [1, 1]} : vector<8x384xf32> to vector<8x128xf32>
    %48 = vector.extract_strided_slice %45 {offsets = [0, 256], sizes = [8, 128], strides = [1, 1]} : vector<8x384xf32> to vector<8x128xf32>
    %49 = arith.addf %40, %46 : vector<8x128xf32>
    %50 = arith.negf %49 : vector<8x128xf32>
    %51 = math.exp %50 : vector<8x128xf32>
    %cst_28 = arith.constant 1.000000e+00 : f32
    %52 = vector.broadcast %cst_28 : f32 to vector<8x128xf32>
    %53 = arith.addf %52, %51 : vector<8x128xf32>
    %54 = arith.divf %52, %53 : vector<8x128xf32>
    %55 = arith.addf %41, %47 : vector<8x128xf32>
    %56 = arith.negf %55 : vector<8x128xf32>
    %57 = math.exp %56 : vector<8x128xf32>
    %cst_29 = arith.constant 1.000000e+00 : f32
    %58 = vector.broadcast %cst_29 : f32 to vector<8x128xf32>
    %59 = arith.addf %58, %57 : vector<8x128xf32>
    %60 = arith.divf %58, %59 : vector<8x128xf32>
    %61 = arith.mulf %54, %48 : vector<8x128xf32>
    %62 = arith.addf %42, %61 : vector<8x128xf32>
    %63 = math.tanh %62 : vector<8x128xf32>
    %cst_30 = arith.constant 1.000000e+00 : f32
    %64 = vector.broadcast %cst_30 : f32 to vector<8x128xf32>
    %65 = arith.subf %64, %60 : vector<8x128xf32>
    %66 = arith.mulf %65, %63 : vector<8x128xf32>
    %67 = arith.mulf %60, %38 : vector<8x128xf32>
    %68 = arith.addf %66, %67 : vector<8x128xf32>
    %c8_31 = arith.constant 8 : index
    %c0_32 = arith.constant 0 : index
    %69 = vector.load %arg16[%c8_31, %c0_32] : memref<64x128xf32, #tpu.memory_space<vmem>>, vector<8x128xf32>
    tpu.vector_store %arg16[%c8_31, %c0_32], %68 {strides = array<i32>} : memref<64x128xf32, #tpu.memory_space<vmem>>, vector<8x128xf32>,
    %c16 = arith.constant 16 : index
    %c0_33 = arith.constant 0 : index
    %70 = vector.load %arg15[%c16, %c0_33] : memref<64x384xf32, #tpu.memory_space<vmem>>, vector<8x128xf32>
    %c16_34 = arith.constant 16 : index
    %c128_35 = arith.constant 128 : index
    %71 = vector.load %arg15[%c16_34, %c128_35] : memref<64x384xf32, #tpu.memory_space<vmem>>, vector<8x128xf32>
    %c16_36 = arith.constant 16 : index
    %c256_37 = arith.constant 256 : index
    %72 = vector.load %arg15[%c16_36, %c256_37] : memref<64x384xf32, #tpu.memory_space<vmem>>, vector<8x128xf32>
    %cst_38 = arith.constant dense<0.000000e+00> : vector<8x384xf32>
    %73 = tpu.matmul %68, %2, %cst_38 {dimension_numbers = #tpu.dot_dimension_numbers<[1], [0], [0], [1], [0, 0, 1, 1], [], []>} : vector<8x128xf32>, vector<128x384xf32>, vector<8x384xf32> -> vector<8x384xf32>
    %74 = vector.broadcast %4 : vector<1x384xf32> to vector<8x384xf32>
    %75 = arith.addf %73, %74 : vector<8x384xf32>
    %76 = vector.extract_strided_slice %75 {offsets = [0, 0], sizes = [8, 128], strides = [1, 1]} : vector<8x384xf32> to vector<8x128xf32>
    %77 = vector.extract_strided_slice %75 {offsets = [0, 128], sizes = [8, 128], strides = [1, 1]} : vector<8x384xf32> to vector<8x128xf32>
    %78 = vector.extract_strided_slice %75 {offsets = [0, 256], sizes = [8, 128], strides = [1, 1]} : vector<8x384xf32> to vector<8x128xf32>
    %79 = arith.addf %70, %76 : vector<8x128xf32>
    %80 = arith.negf %79 : vector<8x128xf32>
    %81 = math.exp %80 : vector<8x128xf32>
    %cst_39 = arith.constant 1.000000e+00 : f32
    %82 = vector.broadcast %cst_39 : f32 to vector<8x128xf32>
    %83 = arith.addf %82, %81 : vector<8x128xf32>
    %84 = arith.divf %82, %83 : vector<8x128xf32>
    %85 = arith.addf %71, %77 : vector<8x128xf32>
    %86 = arith.negf %85 : vector<8x128xf32>
    %87 = math.exp %86 : vector<8x128xf32>
    %cst_40 = arith.constant 1.000000e+00 : f32
    %88 = vector.broadcast %cst_40 : f32 to vector<8x128xf32>
    %89 = arith.addf %88, %87 : vector<8x128xf32>
    %90 = arith.divf %88, %89 : vector<8x128xf32>
    %91 = arith.mulf %84, %78 : vector<8x128xf32>
    %92 = arith.addf %72, %91 : vector<8x128xf32>
    %93 = math.tanh %92 : vector<8x128xf32>
    %cst_41 = arith.constant 1.000000e+00 : f32
    %94 = vector.broadcast %cst_41 : f32 to vector<8x128xf32>
    %95 = arith.subf %94, %90 : vector<8x128xf32>
    %96 = arith.mulf %95, %93 : vector<8x128xf32>
    %97 = arith.mulf %90, %68 : vector<8x128xf32>
    %98 = arith.addf %96, %97 : vector<8x128xf32>
    %c16_42 = arith.constant 16 : index
    %c0_43 = arith.constant 0 : index
    %99 = vector.load %arg16[%c16_42, %c0_43] : memref<64x128xf32, #tpu.memory_space<vmem>>, vector<8x128xf32>
    tpu.vector_store %arg16[%c16_42, %c0_43], %98 {strides = array<i32>} : memref<64x128xf32, #tpu.memory_space<vmem>>, vector<8x128xf32>,
    %c24 = arith.constant 24 : index
    %c0_44 = arith.constant 0 : index
    %100 = vector.load %arg15[%c24, %c0_44] : memref<64x384xf32, #tpu.memory_space<vmem>>, vector<8x128xf32>
    %c24_45 = arith.constant 24 : index
    %c128_46 = arith.constant 128 : index
    %101 = vector.load %arg15[%c24_45, %c128_46] : memref<64x384xf32, #tpu.memory_space<vmem>>, vector<8x128xf32>
    %c24_47 = arith.constant 24 : index
    %c256_48 = arith.constant 256 : index
    %102 = vector.load %arg15[%c24_47, %c256_48] : memref<64x384xf32, #tpu.memory_space<vmem>>, vector<8x128xf32>
    %cst_49 = arith.constant dense<0.000000e+00> : vector<8x384xf32>
    %103 = tpu.matmul %98, %2, %cst_49 {dimension_numbers = #tpu.dot_dimension_numbers<[1], [0], [0], [1], [0, 0, 1, 1], [], []>} : vector<8x128xf32>, vector<128x384xf32>, vector<8x384xf32> -> vector<8x384xf32>
    %104 = vector.broadcast %4 : vector<1x384xf32> to vector<8x384xf32>
    %105 = arith.addf %103, %104 : vector<8x384xf32>
    %106 = vector.extract_strided_slice %105 {offsets = [0, 0], sizes = [8, 128], strides = [1, 1]} : vector<8x384xf32> to vector<8x128xf32>
    %107 = vector.extract_strided_slice %105 {offsets = [0, 128], sizes = [8, 128], strides = [1, 1]} : vector<8x384xf32> to vector<8x128xf32>
    %108 = vector.extract_strided_slice %105 {offsets = [0, 256], sizes = [8, 128], strides = [1, 1]} : vector<8x384xf32> to vector<8x128xf32>
    %109 = arith.addf %100, %106 : vector<8x128xf32>
    %110 = arith.negf %109 : vector<8x128xf32>
    %111 = math.exp %110 : vector<8x128xf32>
    %cst_50 = arith.constant 1.000000e+00 : f32
    %112 = vector.broadcast %cst_50 : f32 to vector<8x128xf32>
    %113 = arith.addf %112, %111 : vector<8x128xf32>
    %114 = arith.divf %112, %113 : vector<8x128xf32>
    %115 = arith.addf %101, %107 : vector<8x128xf32>
    %116 = arith.negf %115 : vector<8x128xf32>
    %117 = math.exp %116 : vector<8x128xf32>
    %cst_51 = arith.constant 1.000000e+00 : f32
    %118 = vector.broadcast %cst_51 : f32 to vector<8x128xf32>
    %119 = arith.addf %118, %117 : vector<8x128xf32>
    %120 = arith.divf %118, %119 : vector<8x128xf32>
    %121 = arith.mulf %114, %108 : vector<8x128xf32>
    %122 = arith.addf %102, %121 : vector<8x128xf32>
    %123 = math.tanh %122 : vector<8x128xf32>
    %cst_52 = arith.constant 1.000000e+00 : f32
    %124 = vector.broadcast %cst_52 : f32 to vector<8x128xf32>
    %125 = arith.subf %124, %120 : vector<8x128xf32>
    %126 = arith.mulf %125, %123 : vector<8x128xf32>
    %127 = arith.mulf %120, %98 : vector<8x128xf32>
    %128 = arith.addf %126, %127 : vector<8x128xf32>
    %c24_53 = arith.constant 24 : index
    %c0_54 = arith.constant 0 : index
    %129 = vector.load %arg16[%c24_53, %c0_54] : memref<64x128xf32, #tpu.memory_space<vmem>>, vector<8x128xf32>
    tpu.vector_store %arg16[%c24_53, %c0_54], %128 {strides = array<i32>} : memref<64x128xf32, #tpu.memory_space<vmem>>, vector<8x128xf32>,
    %c32 = arith.constant 32 : index
    %c0_55 = arith.constant 0 : index
    %130 = vector.load %arg15[%c32, %c0_55] : memref<64x384xf32, #tpu.memory_space<vmem>>, vector<8x128xf32>
    %c32_56 = arith.constant 32 : index
    %c128_57 = arith.constant 128 : index
    %131 = vector.load %arg15[%c32_56, %c128_57] : memref<64x384xf32, #tpu.memory_space<vmem>>, vector<8x128xf32>
    %c32_58 = arith.constant 32 : index
    %c256_59 = arith.constant 256 : index
    %132 = vector.load %arg15[%c32_58, %c256_59] : memref<64x384xf32, #tpu.memory_space<vmem>>, vector<8x128xf32>
    %cst_60 = arith.constant dense<0.000000e+00> : vector<8x384xf32>
    %133 = tpu.matmul %128, %2, %cst_60 {dimension_numbers = #tpu.dot_dimension_numbers<[1], [0], [0], [1], [0, 0, 1, 1], [], []>} : vector<8x128xf32>, vector<128x384xf32>, vector<8x384xf32> -> vector<8x384xf32>
    %134 = vector.broadcast %4 : vector<1x384xf32> to vector<8x384xf32>
    %135 = arith.addf %133, %134 : vector<8x384xf32>
    %136 = vector.extract_strided_slice %135 {offsets = [0, 0], sizes = [8, 128], strides = [1, 1]} : vector<8x384xf32> to vector<8x128xf32>
    %137 = vector.extract_strided_slice %135 {offsets = [0, 128], sizes = [8, 128], strides = [1, 1]} : vector<8x384xf32> to vector<8x128xf32>
    %138 = vector.extract_strided_slice %135 {offsets = [0, 256], sizes = [8, 128], strides = [1, 1]} : vector<8x384xf32> to vector<8x128xf32>
    %139 = arith.addf %130, %136 : vector<8x128xf32>
    %140 = arith.negf %139 : vector<8x128xf32>
    %141 = math.exp %140 : vector<8x128xf32>
    %cst_61 = arith.constant 1.000000e+00 : f32
    %142 = vector.broadcast %cst_61 : f32 to vector<8x128xf32>
    %143 = arith.addf %142, %141 : vector<8x128xf32>
    %144 = arith.divf %142, %143 : vector<8x128xf32>
    %145 = arith.addf %131, %137 : vector<8x128xf32>
    %146 = arith.negf %145 : vector<8x128xf32>
    %147 = math.exp %146 : vector<8x128xf32>
    %cst_62 = arith.constant 1.000000e+00 : f32
    %148 = vector.broadcast %cst_62 : f32 to vector<8x128xf32>
    %149 = arith.addf %148, %147 : vector<8x128xf32>
    %150 = arith.divf %148, %149 : vector<8x128xf32>
    %151 = arith.mulf %144, %138 : vector<8x128xf32>
    %152 = arith.addf %132, %151 : vector<8x128xf32>
    %153 = math.tanh %152 : vector<8x128xf32>
    %cst_63 = arith.constant 1.000000e+00 : f32
    %154 = vector.broadcast %cst_63 : f32 to vector<8x128xf32>
    %155 = arith.subf %154, %150 : vector<8x128xf32>
    %156 = arith.mulf %155, %153 : vector<8x128xf32>
    %157 = arith.mulf %150, %128 : vector<8x128xf32>
    %158 = arith.addf %156, %157 : vector<8x128xf32>
    %c32_64 = arith.constant 32 : index
    %c0_65 = arith.constant 0 : index
    %159 = vector.load %arg16[%c32_64, %c0_65] : memref<64x128xf32, #tpu.memory_space<vmem>>, vector<8x128xf32>
    tpu.vector_store %arg16[%c32_64, %c0_65], %158 {strides = array<i32>} : memref<64x128xf32, #tpu.memory_space<vmem>>, vector<8x128xf32>,
    %c40 = arith.constant 40 : index
    %c0_66 = arith.constant 0 : index
    %160 = vector.load %arg15[%c40, %c0_66] : memref<64x384xf32, #tpu.memory_space<vmem>>, vector<8x128xf32>
    %c40_67 = arith.constant 40 : index
    %c128_68 = arith.constant 128 : index
    %161 = vector.load %arg15[%c40_67, %c128_68] : memref<64x384xf32, #tpu.memory_space<vmem>>, vector<8x128xf32>
    %c40_69 = arith.constant 40 : index
    %c256_70 = arith.constant 256 : index
    %162 = vector.load %arg15[%c40_69, %c256_70] : memref<64x384xf32, #tpu.memory_space<vmem>>, vector<8x128xf32>
    %cst_71 = arith.constant dense<0.000000e+00> : vector<8x384xf32>
    %163 = tpu.matmul %158, %2, %cst_71 {dimension_numbers = #tpu.dot_dimension_numbers<[1], [0], [0], [1], [0, 0, 1, 1], [], []>} : vector<8x128xf32>, vector<128x384xf32>, vector<8x384xf32> -> vector<8x384xf32>
    %164 = vector.broadcast %4 : vector<1x384xf32> to vector<8x384xf32>
    %165 = arith.addf %163, %164 : vector<8x384xf32>
    %166 = vector.extract_strided_slice %165 {offsets = [0, 0], sizes = [8, 128], strides = [1, 1]} : vector<8x384xf32> to vector<8x128xf32>
    %167 = vector.extract_strided_slice %165 {offsets = [0, 128], sizes = [8, 128], strides = [1, 1]} : vector<8x384xf32> to vector<8x128xf32>
    %168 = vector.extract_strided_slice %165 {offsets = [0, 256], sizes = [8, 128], strides = [1, 1]} : vector<8x384xf32> to vector<8x128xf32>
    %169 = arith.addf %160, %166 : vector<8x128xf32>
    %170 = arith.negf %169 : vector<8x128xf32>
    %171 = math.exp %170 : vector<8x128xf32>
    %cst_72 = arith.constant 1.000000e+00 : f32
    %172 = vector.broadcast %cst_72 : f32 to vector<8x128xf32>
    %173 = arith.addf %172, %171 : vector<8x128xf32>
    %174 = arith.divf %172, %173 : vector<8x128xf32>
    %175 = arith.addf %161, %167 : vector<8x128xf32>
    %176 = arith.negf %175 : vector<8x128xf32>
    %177 = math.exp %176 : vector<8x128xf32>
    %cst_73 = arith.constant 1.000000e+00 : f32
    %178 = vector.broadcast %cst_73 : f32 to vector<8x128xf32>
    %179 = arith.addf %178, %177 : vector<8x128xf32>
    %180 = arith.divf %178, %179 : vector<8x128xf32>
    %181 = arith.mulf %174, %168 : vector<8x128xf32>
    %182 = arith.addf %162, %181 : vector<8x128xf32>
    %183 = math.tanh %182 : vector<8x128xf32>
    %cst_74 = arith.constant 1.000000e+00 : f32
    %184 = vector.broadcast %cst_74 : f32 to vector<8x128xf32>
    %185 = arith.subf %184, %180 : vector<8x128xf32>
    %186 = arith.mulf %185, %183 : vector<8x128xf32>
    %187 = arith.mulf %180, %158 : vector<8x128xf32>
    %188 = arith.addf %186, %187 : vector<8x128xf32>
    %c40_75 = arith.constant 40 : index
    %c0_76 = arith.constant 0 : index
    %189 = vector.load %arg16[%c40_75, %c0_76] : memref<64x128xf32, #tpu.memory_space<vmem>>, vector<8x128xf32>
    tpu.vector_store %arg16[%c40_75, %c0_76], %188 {strides = array<i32>} : memref<64x128xf32, #tpu.memory_space<vmem>>, vector<8x128xf32>,
    %c48 = arith.constant 48 : index
    %c0_77 = arith.constant 0 : index
    %190 = vector.load %arg15[%c48, %c0_77] : memref<64x384xf32, #tpu.memory_space<vmem>>, vector<8x128xf32>
    %c48_78 = arith.constant 48 : index
    %c128_79 = arith.constant 128 : index
    %191 = vector.load %arg15[%c48_78, %c128_79] : memref<64x384xf32, #tpu.memory_space<vmem>>, vector<8x128xf32>
    %c48_80 = arith.constant 48 : index
    %c256_81 = arith.constant 256 : index
    %192 = vector.load %arg15[%c48_80, %c256_81] : memref<64x384xf32, #tpu.memory_space<vmem>>, vector<8x128xf32>
    %cst_82 = arith.constant dense<0.000000e+00> : vector<8x384xf32>
    %193 = tpu.matmul %188, %2, %cst_82 {dimension_numbers = #tpu.dot_dimension_numbers<[1], [0], [0], [1], [0, 0, 1, 1], [], []>} : vector<8x128xf32>, vector<128x384xf32>, vector<8x384xf32> -> vector<8x384xf32>
    %194 = vector.broadcast %4 : vector<1x384xf32> to vector<8x384xf32>
    %195 = arith.addf %193, %194 : vector<8x384xf32>
    %196 = vector.extract_strided_slice %195 {offsets = [0, 0], sizes = [8, 128], strides = [1, 1]} : vector<8x384xf32> to vector<8x128xf32>
    %197 = vector.extract_strided_slice %195 {offsets = [0, 128], sizes = [8, 128], strides = [1, 1]} : vector<8x384xf32> to vector<8x128xf32>
    %198 = vector.extract_strided_slice %195 {offsets = [0, 256], sizes = [8, 128], strides = [1, 1]} : vector<8x384xf32> to vector<8x128xf32>
    %199 = arith.addf %190, %196 : vector<8x128xf32>
    %200 = arith.negf %199 : vector<8x128xf32>
    %201 = math.exp %200 : vector<8x128xf32>
    %cst_83 = arith.constant 1.000000e+00 : f32
    %202 = vector.broadcast %cst_83 : f32 to vector<8x128xf32>
    %203 = arith.addf %202, %201 : vector<8x128xf32>
    %204 = arith.divf %202, %203 : vector<8x128xf32>
    %205 = arith.addf %191, %197 : vector<8x128xf32>
    %206 = arith.negf %205 : vector<8x128xf32>
    %207 = math.exp %206 : vector<8x128xf32>
    %cst_84 = arith.constant 1.000000e+00 : f32
    %208 = vector.broadcast %cst_84 : f32 to vector<8x128xf32>
    %209 = arith.addf %208, %207 : vector<8x128xf32>
    %210 = arith.divf %208, %209 : vector<8x128xf32>
    %211 = arith.mulf %204, %198 : vector<8x128xf32>
    %212 = arith.addf %192, %211 : vector<8x128xf32>
    %213 = math.tanh %212 : vector<8x128xf32>
    %cst_85 = arith.constant 1.000000e+00 : f32
    %214 = vector.broadcast %cst_85 : f32 to vector<8x128xf32>
    %215 = arith.subf %214, %210 : vector<8x128xf32>
    %216 = arith.mulf %215, %213 : vector<8x128xf32>
    %217 = arith.mulf %210, %188 : vector<8x128xf32>
    %218 = arith.addf %216, %217 : vector<8x128xf32>
    %c48_86 = arith.constant 48 : index
    %c0_87 = arith.constant 0 : index
    %219 = vector.load %arg16[%c48_86, %c0_87] : memref<64x128xf32, #tpu.memory_space<vmem>>, vector<8x128xf32>
    tpu.vector_store %arg16[%c48_86, %c0_87], %218 {strides = array<i32>} : memref<64x128xf32, #tpu.memory_space<vmem>>, vector<8x128xf32>,
    %c56 = arith.constant 56 : index
    %c0_88 = arith.constant 0 : index
    %220 = vector.load %arg15[%c56, %c0_88] : memref<64x384xf32, #tpu.memory_space<vmem>>, vector<8x128xf32>
    %c56_89 = arith.constant 56 : index
    %c128_90 = arith.constant 128 : index
    %221 = vector.load %arg15[%c56_89, %c128_90] : memref<64x384xf32, #tpu.memory_space<vmem>>, vector<8x128xf32>
    %c56_91 = arith.constant 56 : index
    %c256_92 = arith.constant 256 : index
    %222 = vector.load %arg15[%c56_91, %c256_92] : memref<64x384xf32, #tpu.memory_space<vmem>>, vector<8x128xf32>
    %cst_93 = arith.constant dense<0.000000e+00> : vector<8x384xf32>
    %223 = tpu.matmul %218, %2, %cst_93 {dimension_numbers = #tpu.dot_dimension_numbers<[1], [0], [0], [1], [0, 0, 1, 1], [], []>} : vector<8x128xf32>, vector<128x384xf32>, vector<8x384xf32> -> vector<8x384xf32>
    %224 = vector.broadcast %4 : vector<1x384xf32> to vector<8x384xf32>
    %225 = arith.addf %223, %224 : vector<8x384xf32>
    %226 = vector.extract_strided_slice %225 {offsets = [0, 0], sizes = [8, 128], strides = [1, 1]} : vector<8x384xf32> to vector<8x128xf32>
    %227 = vector.extract_strided_slice %225 {offsets = [0, 128], sizes = [8, 128], strides = [1, 1]} : vector<8x384xf32> to vector<8x128xf32>
    %228 = vector.extract_strided_slice %225 {offsets = [0, 256], sizes = [8, 128], strides = [1, 1]} : vector<8x384xf32> to vector<8x128xf32>
    %229 = arith.addf %220, %226 : vector<8x128xf32>
    %230 = arith.negf %229 : vector<8x128xf32>
    %231 = math.exp %230 : vector<8x128xf32>
    %cst_94 = arith.constant 1.000000e+00 : f32
    %232 = vector.broadcast %cst_94 : f32 to vector<8x128xf32>
    %233 = arith.addf %232, %231 : vector<8x128xf32>
    %234 = arith.divf %232, %233 : vector<8x128xf32>
    %235 = arith.addf %221, %227 : vector<8x128xf32>
    %236 = arith.negf %235 : vector<8x128xf32>
    %237 = math.exp %236 : vector<8x128xf32>
    %cst_95 = arith.constant 1.000000e+00 : f32
    %238 = vector.broadcast %cst_95 : f32 to vector<8x128xf32>
    %239 = arith.addf %238, %237 : vector<8x128xf32>
    %240 = arith.divf %238, %239 : vector<8x128xf32>
    %241 = arith.mulf %234, %228 : vector<8x128xf32>
    %242 = arith.addf %222, %241 : vector<8x128xf32>
    %243 = math.tanh %242 : vector<8x128xf32>
    %cst_96 = arith.constant 1.000000e+00 : f32
    %244 = vector.broadcast %cst_96 : f32 to vector<8x128xf32>
    %245 = arith.subf %244, %240 : vector<8x128xf32>
    %246 = arith.mulf %245, %243 : vector<8x128xf32>
    %247 = arith.mulf %240, %218 : vector<8x128xf32>
    %248 = arith.addf %246, %247 : vector<8x128xf32>
    %c56_97 = arith.constant 56 : index
    %c0_98 = arith.constant 0 : index
    %249 = vector.load %arg16[%c56_97, %c0_98] : memref<64x128xf32, #tpu.memory_space<vmem>>, vector<8x128xf32>
    tpu.vector_store %arg16[%c56_97, %c0_98], %248 {strides = array<i32>} : memref<64x128xf32, #tpu.memory_space<vmem>>, vector<8x128xf32>,
    %c0_99 = arith.constant 0 : index
    %c0_100 = arith.constant 0 : index
    %250 = vector.load %arg16[%c0_99, %c0_100] : memref<64x128xf32, #tpu.memory_space<vmem>>, vector<64x128xf32>
    %c0_101 = arith.constant 0 : index
    %c0_102 = arith.constant 0 : index
    %251 = vector.load %arg6[%c0_101, %c0_102] : memref<128x384xf32, #tpu.memory_space<vmem>>, vector<128x384xf32>
    %c0_103 = arith.constant 0 : index
    %c0_104 = arith.constant 0 : index
    %252 = vector.load %arg7[%c0_103, %c0_104] : memref<128x384xf32, #tpu.memory_space<vmem>>, vector<128x384xf32>
    %c0_105 = arith.constant 0 : index
    %c0_106 = arith.constant 0 : index
    %253 = vector.load %arg8[%c0_105, %c0_106] : memref<1x384xf32, #tpu.memory_space<vmem>>, vector<1x384xf32>
    %c0_107 = arith.constant 0 : index
    %c0_108 = arith.constant 0 : index
    %254 = vector.load %arg9[%c0_107, %c0_108] : memref<1x384xf32, #tpu.memory_space<vmem>>, vector<1x384xf32>
    %cst_109 = arith.constant dense<0.000000e+00> : vector<64x384xf32>
    %255 = tpu.matmul %250, %251, %cst_109 {dimension_numbers = #tpu.dot_dimension_numbers<[1], [0], [0], [1], [0, 0, 1, 1], [], []>} : vector<64x128xf32>, vector<128x384xf32>, vector<64x384xf32> -> vector<64x384xf32>
    %256 = vector.broadcast %253 : vector<1x384xf32> to vector<64x384xf32>
    %257 = arith.addf %255, %256 : vector<64x384xf32>
    %c0_110 = arith.constant 0 : index
    %c0_111 = arith.constant 0 : index
    %258 = vector.load %arg15[%c0_110, %c0_111] : memref<64x384xf32, #tpu.memory_space<vmem>>, vector<64x384xf32>
    tpu.vector_store %arg15[%c0_110, %c0_111], %257 {strides = array<i32>} : memref<64x384xf32, #tpu.memory_space<vmem>>, vector<64x384xf32>,
    %cst_112 = arith.constant 0.000000e+00 : f32
    %259 = vector.broadcast %cst_112 : f32 to vector<8x128xf32>
    %c0_113 = arith.constant 0 : index
    %c0_114 = arith.constant 0 : index
    %260 = vector.load %arg15[%c0_113, %c0_114] : memref<64x384xf32, #tpu.memory_space<vmem>>, vector<8x128xf32>
    %c0_115 = arith.constant 0 : index
    %c128_116 = arith.constant 128 : index
    %261 = vector.load %arg15[%c0_115, %c128_116] : memref<64x384xf32, #tpu.memory_space<vmem>>, vector<8x128xf32>
    %c0_117 = arith.constant 0 : index
    %c256_118 = arith.constant 256 : index
    %262 = vector.load %arg15[%c0_117, %c256_118] : memref<64x384xf32, #tpu.memory_space<vmem>>, vector<8x128xf32>
    %cst_119 = arith.constant dense<0.000000e+00> : vector<8x384xf32>
    %263 = tpu.matmul %259, %252, %cst_119 {dimension_numbers = #tpu.dot_dimension_numbers<[1], [0], [0], [1], [0, 0, 1, 1], [], []>} : vector<8x128xf32>, vector<128x384xf32>, vector<8x384xf32> -> vector<8x384xf32>
    %264 = vector.broadcast %254 : vector<1x384xf32> to vector<8x384xf32>
    %265 = arith.addf %263, %264 : vector<8x384xf32>
    %266 = vector.extract_strided_slice %265 {offsets = [0, 0], sizes = [8, 128], strides = [1, 1]} : vector<8x384xf32> to vector<8x128xf32>
    %267 = vector.extract_strided_slice %265 {offsets = [0, 128], sizes = [8, 128], strides = [1, 1]} : vector<8x384xf32> to vector<8x128xf32>
    %268 = vector.extract_strided_slice %265 {offsets = [0, 256], sizes = [8, 128], strides = [1, 1]} : vector<8x384xf32> to vector<8x128xf32>
    %269 = arith.addf %260, %266 : vector<8x128xf32>
    %270 = arith.negf %269 : vector<8x128xf32>
    %271 = math.exp %270 : vector<8x128xf32>
    %cst_120 = arith.constant 1.000000e+00 : f32
    %272 = vector.broadcast %cst_120 : f32 to vector<8x128xf32>
    %273 = arith.addf %272, %271 : vector<8x128xf32>
    %274 = arith.divf %272, %273 : vector<8x128xf32>
    %275 = arith.addf %261, %267 : vector<8x128xf32>
    %276 = arith.negf %275 : vector<8x128xf32>
    %277 = math.exp %276 : vector<8x128xf32>
    %cst_121 = arith.constant 1.000000e+00 : f32
    %278 = vector.broadcast %cst_121 : f32 to vector<8x128xf32>
    %279 = arith.addf %278, %277 : vector<8x128xf32>
    %280 = arith.divf %278, %279 : vector<8x128xf32>
    %281 = arith.mulf %274, %268 : vector<8x128xf32>
    %282 = arith.addf %262, %281 : vector<8x128xf32>
    %283 = math.tanh %282 : vector<8x128xf32>
    %cst_122 = arith.constant 1.000000e+00 : f32
    %284 = vector.broadcast %cst_122 : f32 to vector<8x128xf32>
    %285 = arith.subf %284, %280 : vector<8x128xf32>
    %286 = arith.mulf %285, %283 : vector<8x128xf32>
    %287 = arith.mulf %280, %259 : vector<8x128xf32>
    %288 = arith.addf %286, %287 : vector<8x128xf32>
    %c0_123 = arith.constant 0 : index
    %c0_124 = arith.constant 0 : index
    %289 = vector.load %arg16[%c0_123, %c0_124] : memref<64x128xf32, #tpu.memory_space<vmem>>, vector<8x128xf32>
    tpu.vector_store %arg16[%c0_123, %c0_124], %288 {strides = array<i32>} : memref<64x128xf32, #tpu.memory_space<vmem>>, vector<8x128xf32>,
    %c8_125 = arith.constant 8 : index
    %c0_126 = arith.constant 0 : index
    %290 = vector.load %arg15[%c8_125, %c0_126] : memref<64x384xf32, #tpu.memory_space<vmem>>, vector<8x128xf32>
    %c8_127 = arith.constant 8 : index
    %c128_128 = arith.constant 128 : index
    %291 = vector.load %arg15[%c8_127, %c128_128] : memref<64x384xf32, #tpu.memory_space<vmem>>, vector<8x128xf32>
    %c8_129 = arith.constant 8 : index
    %c256_130 = arith.constant 256 : index
    %292 = vector.load %arg15[%c8_129, %c256_130] : memref<64x384xf32, #tpu.memory_space<vmem>>, vector<8x128xf32>
    %cst_131 = arith.constant dense<0.000000e+00> : vector<8x384xf32>
    %293 = tpu.matmul %288, %252, %cst_131 {dimension_numbers = #tpu.dot_dimension_numbers<[1], [0], [0], [1], [0, 0, 1, 1], [], []>} : vector<8x128xf32>, vector<128x384xf32>, vector<8x384xf32> -> vector<8x384xf32>
    %294 = vector.broadcast %254 : vector<1x384xf32> to vector<8x384xf32>
    %295 = arith.addf %293, %294 : vector<8x384xf32>
    %296 = vector.extract_strided_slice %295 {offsets = [0, 0], sizes = [8, 128], strides = [1, 1]} : vector<8x384xf32> to vector<8x128xf32>
    %297 = vector.extract_strided_slice %295 {offsets = [0, 128], sizes = [8, 128], strides = [1, 1]} : vector<8x384xf32> to vector<8x128xf32>
    %298 = vector.extract_strided_slice %295 {offsets = [0, 256], sizes = [8, 128], strides = [1, 1]} : vector<8x384xf32> to vector<8x128xf32>
    %299 = arith.addf %290, %296 : vector<8x128xf32>
    %300 = arith.negf %299 : vector<8x128xf32>
    %301 = math.exp %300 : vector<8x128xf32>
    %cst_132 = arith.constant 1.000000e+00 : f32
    %302 = vector.broadcast %cst_132 : f32 to vector<8x128xf32>
    %303 = arith.addf %302, %301 : vector<8x128xf32>
    %304 = arith.divf %302, %303 : vector<8x128xf32>
    %305 = arith.addf %291, %297 : vector<8x128xf32>
    %306 = arith.negf %305 : vector<8x128xf32>
    %307 = math.exp %306 : vector<8x128xf32>
    %cst_133 = arith.constant 1.000000e+00 : f32
    %308 = vector.broadcast %cst_133 : f32 to vector<8x128xf32>
    %309 = arith.addf %308, %307 : vector<8x128xf32>
    %310 = arith.divf %308, %309 : vector<8x128xf32>
    %311 = arith.mulf %304, %298 : vector<8x128xf32>
    %312 = arith.addf %292, %311 : vector<8x128xf32>
    %313 = math.tanh %312 : vector<8x128xf32>
    %cst_134 = arith.constant 1.000000e+00 : f32
    %314 = vector.broadcast %cst_134 : f32 to vector<8x128xf32>
    %315 = arith.subf %314, %310 : vector<8x128xf32>
    %316 = arith.mulf %315, %313 : vector<8x128xf32>
    %317 = arith.mulf %310, %288 : vector<8x128xf32>
    %318 = arith.addf %316, %317 : vector<8x128xf32>
    %c8_135 = arith.constant 8 : index
    %c0_136 = arith.constant 0 : index
    %319 = vector.load %arg16[%c8_135, %c0_136] : memref<64x128xf32, #tpu.memory_space<vmem>>, vector<8x128xf32>
    tpu.vector_store %arg16[%c8_135, %c0_136], %318 {strides = array<i32>} : memref<64x128xf32, #tpu.memory_space<vmem>>, vector<8x128xf32>,
    %c16_137 = arith.constant 16 : index
    %c0_138 = arith.constant 0 : index
    %320 = vector.load %arg15[%c16_137, %c0_138] : memref<64x384xf32, #tpu.memory_space<vmem>>, vector<8x128xf32>
    %c16_139 = arith.constant 16 : index
    %c128_140 = arith.constant 128 : index
    %321 = vector.load %arg15[%c16_139, %c128_140] : memref<64x384xf32, #tpu.memory_space<vmem>>, vector<8x128xf32>
    %c16_141 = arith.constant 16 : index
    %c256_142 = arith.constant 256 : index
    %322 = vector.load %arg15[%c16_141, %c256_142] : memref<64x384xf32, #tpu.memory_space<vmem>>, vector<8x128xf32>
    %cst_143 = arith.constant dense<0.000000e+00> : vector<8x384xf32>
    %323 = tpu.matmul %318, %252, %cst_143 {dimension_numbers = #tpu.dot_dimension_numbers<[1], [0], [0], [1], [0, 0, 1, 1], [], []>} : vector<8x128xf32>, vector<128x384xf32>, vector<8x384xf32> -> vector<8x384xf32>
    %324 = vector.broadcast %254 : vector<1x384xf32> to vector<8x384xf32>
    %325 = arith.addf %323, %324 : vector<8x384xf32>
    %326 = vector.extract_strided_slice %325 {offsets = [0, 0], sizes = [8, 128], strides = [1, 1]} : vector<8x384xf32> to vector<8x128xf32>
    %327 = vector.extract_strided_slice %325 {offsets = [0, 128], sizes = [8, 128], strides = [1, 1]} : vector<8x384xf32> to vector<8x128xf32>
    %328 = vector.extract_strided_slice %325 {offsets = [0, 256], sizes = [8, 128], strides = [1, 1]} : vector<8x384xf32> to vector<8x128xf32>
    %329 = arith.addf %320, %326 : vector<8x128xf32>
    %330 = arith.negf %329 : vector<8x128xf32>
    %331 = math.exp %330 : vector<8x128xf32>
    %cst_144 = arith.constant 1.000000e+00 : f32
    %332 = vector.broadcast %cst_144 : f32 to vector<8x128xf32>
    %333 = arith.addf %332, %331 : vector<8x128xf32>
    %334 = arith.divf %332, %333 : vector<8x128xf32>
    %335 = arith.addf %321, %327 : vector<8x128xf32>
    %336 = arith.negf %335 : vector<8x128xf32>
    %337 = math.exp %336 : vector<8x128xf32>
    %cst_145 = arith.constant 1.000000e+00 : f32
    %338 = vector.broadcast %cst_145 : f32 to vector<8x128xf32>
    %339 = arith.addf %338, %337 : vector<8x128xf32>
    %340 = arith.divf %338, %339 : vector<8x128xf32>
    %341 = arith.mulf %334, %328 : vector<8x128xf32>
    %342 = arith.addf %322, %341 : vector<8x128xf32>
    %343 = math.tanh %342 : vector<8x128xf32>
    %cst_146 = arith.constant 1.000000e+00 : f32
    %344 = vector.broadcast %cst_146 : f32 to vector<8x128xf32>
    %345 = arith.subf %344, %340 : vector<8x128xf32>
    %346 = arith.mulf %345, %343 : vector<8x128xf32>
    %347 = arith.mulf %340, %318 : vector<8x128xf32>
    %348 = arith.addf %346, %347 : vector<8x128xf32>
    %c16_147 = arith.constant 16 : index
    %c0_148 = arith.constant 0 : index
    %349 = vector.load %arg16[%c16_147, %c0_148] : memref<64x128xf32, #tpu.memory_space<vmem>>, vector<8x128xf32>
    tpu.vector_store %arg16[%c16_147, %c0_148], %348 {strides = array<i32>} : memref<64x128xf32, #tpu.memory_space<vmem>>, vector<8x128xf32>,
    %c24_149 = arith.constant 24 : index
    %c0_150 = arith.constant 0 : index
    %350 = vector.load %arg15[%c24_149, %c0_150] : memref<64x384xf32, #tpu.memory_space<vmem>>, vector<8x128xf32>
    %c24_151 = arith.constant 24 : index
    %c128_152 = arith.constant 128 : index
    %351 = vector.load %arg15[%c24_151, %c128_152] : memref<64x384xf32, #tpu.memory_space<vmem>>, vector<8x128xf32>
    %c24_153 = arith.constant 24 : index
    %c256_154 = arith.constant 256 : index
    %352 = vector.load %arg15[%c24_153, %c256_154] : memref<64x384xf32, #tpu.memory_space<vmem>>, vector<8x128xf32>
    %cst_155 = arith.constant dense<0.000000e+00> : vector<8x384xf32>
    %353 = tpu.matmul %348, %252, %cst_155 {dimension_numbers = #tpu.dot_dimension_numbers<[1], [0], [0], [1], [0, 0, 1, 1], [], []>} : vector<8x128xf32>, vector<128x384xf32>, vector<8x384xf32> -> vector<8x384xf32>
    %354 = vector.broadcast %254 : vector<1x384xf32> to vector<8x384xf32>
    %355 = arith.addf %353, %354 : vector<8x384xf32>
    %356 = vector.extract_strided_slice %355 {offsets = [0, 0], sizes = [8, 128], strides = [1, 1]} : vector<8x384xf32> to vector<8x128xf32>
    %357 = vector.extract_strided_slice %355 {offsets = [0, 128], sizes = [8, 128], strides = [1, 1]} : vector<8x384xf32> to vector<8x128xf32>
    %358 = vector.extract_strided_slice %355 {offsets = [0, 256], sizes = [8, 128], strides = [1, 1]} : vector<8x384xf32> to vector<8x128xf32>
    %359 = arith.addf %350, %356 : vector<8x128xf32>
    %360 = arith.negf %359 : vector<8x128xf32>
    %361 = math.exp %360 : vector<8x128xf32>
    %cst_156 = arith.constant 1.000000e+00 : f32
    %362 = vector.broadcast %cst_156 : f32 to vector<8x128xf32>
    %363 = arith.addf %362, %361 : vector<8x128xf32>
    %364 = arith.divf %362, %363 : vector<8x128xf32>
    %365 = arith.addf %351, %357 : vector<8x128xf32>
    %366 = arith.negf %365 : vector<8x128xf32>
    %367 = math.exp %366 : vector<8x128xf32>
    %cst_157 = arith.constant 1.000000e+00 : f32
    %368 = vector.broadcast %cst_157 : f32 to vector<8x128xf32>
    %369 = arith.addf %368, %367 : vector<8x128xf32>
    %370 = arith.divf %368, %369 : vector<8x128xf32>
    %371 = arith.mulf %364, %358 : vector<8x128xf32>
    %372 = arith.addf %352, %371 : vector<8x128xf32>
    %373 = math.tanh %372 : vector<8x128xf32>
    %cst_158 = arith.constant 1.000000e+00 : f32
    %374 = vector.broadcast %cst_158 : f32 to vector<8x128xf32>
    %375 = arith.subf %374, %370 : vector<8x128xf32>
    %376 = arith.mulf %375, %373 : vector<8x128xf32>
    %377 = arith.mulf %370, %348 : vector<8x128xf32>
    %378 = arith.addf %376, %377 : vector<8x128xf32>
    %c24_159 = arith.constant 24 : index
    %c0_160 = arith.constant 0 : index
    %379 = vector.load %arg16[%c24_159, %c0_160] : memref<64x128xf32, #tpu.memory_space<vmem>>, vector<8x128xf32>
    tpu.vector_store %arg16[%c24_159, %c0_160], %378 {strides = array<i32>} : memref<64x128xf32, #tpu.memory_space<vmem>>, vector<8x128xf32>,
    %c32_161 = arith.constant 32 : index
    %c0_162 = arith.constant 0 : index
    %380 = vector.load %arg15[%c32_161, %c0_162] : memref<64x384xf32, #tpu.memory_space<vmem>>, vector<8x128xf32>
    %c32_163 = arith.constant 32 : index
    %c128_164 = arith.constant 128 : index
    %381 = vector.load %arg15[%c32_163, %c128_164] : memref<64x384xf32, #tpu.memory_space<vmem>>, vector<8x128xf32>
    %c32_165 = arith.constant 32 : index
    %c256_166 = arith.constant 256 : index
    %382 = vector.load %arg15[%c32_165, %c256_166] : memref<64x384xf32, #tpu.memory_space<vmem>>, vector<8x128xf32>
    %cst_167 = arith.constant dense<0.000000e+00> : vector<8x384xf32>
    %383 = tpu.matmul %378, %252, %cst_167 {dimension_numbers = #tpu.dot_dimension_numbers<[1], [0], [0], [1], [0, 0, 1, 1], [], []>} : vector<8x128xf32>, vector<128x384xf32>, vector<8x384xf32> -> vector<8x384xf32>
    %384 = vector.broadcast %254 : vector<1x384xf32> to vector<8x384xf32>
    %385 = arith.addf %383, %384 : vector<8x384xf32>
    %386 = vector.extract_strided_slice %385 {offsets = [0, 0], sizes = [8, 128], strides = [1, 1]} : vector<8x384xf32> to vector<8x128xf32>
    %387 = vector.extract_strided_slice %385 {offsets = [0, 128], sizes = [8, 128], strides = [1, 1]} : vector<8x384xf32> to vector<8x128xf32>
    %388 = vector.extract_strided_slice %385 {offsets = [0, 256], sizes = [8, 128], strides = [1, 1]} : vector<8x384xf32> to vector<8x128xf32>
    %389 = arith.addf %380, %386 : vector<8x128xf32>
    %390 = arith.negf %389 : vector<8x128xf32>
    %391 = math.exp %390 : vector<8x128xf32>
    %cst_168 = arith.constant 1.000000e+00 : f32
    %392 = vector.broadcast %cst_168 : f32 to vector<8x128xf32>
    %393 = arith.addf %392, %391 : vector<8x128xf32>
    %394 = arith.divf %392, %393 : vector<8x128xf32>
    %395 = arith.addf %381, %387 : vector<8x128xf32>
    %396 = arith.negf %395 : vector<8x128xf32>
    %397 = math.exp %396 : vector<8x128xf32>
    %cst_169 = arith.constant 1.000000e+00 : f32
    %398 = vector.broadcast %cst_169 : f32 to vector<8x128xf32>
    %399 = arith.addf %398, %397 : vector<8x128xf32>
    %400 = arith.divf %398, %399 : vector<8x128xf32>
    %401 = arith.mulf %394, %388 : vector<8x128xf32>
    %402 = arith.addf %382, %401 : vector<8x128xf32>
    %403 = math.tanh %402 : vector<8x128xf32>
    %cst_170 = arith.constant 1.000000e+00 : f32
    %404 = vector.broadcast %cst_170 : f32 to vector<8x128xf32>
    %405 = arith.subf %404, %400 : vector<8x128xf32>
    %406 = arith.mulf %405, %403 : vector<8x128xf32>
    %407 = arith.mulf %400, %378 : vector<8x128xf32>
    %408 = arith.addf %406, %407 : vector<8x128xf32>
    %c32_171 = arith.constant 32 : index
    %c0_172 = arith.constant 0 : index
    %409 = vector.load %arg16[%c32_171, %c0_172] : memref<64x128xf32, #tpu.memory_space<vmem>>, vector<8x128xf32>
    tpu.vector_store %arg16[%c32_171, %c0_172], %408 {strides = array<i32>} : memref<64x128xf32, #tpu.memory_space<vmem>>, vector<8x128xf32>,
    %c40_173 = arith.constant 40 : index
    %c0_174 = arith.constant 0 : index
    %410 = vector.load %arg15[%c40_173, %c0_174] : memref<64x384xf32, #tpu.memory_space<vmem>>, vector<8x128xf32>
    %c40_175 = arith.constant 40 : index
    %c128_176 = arith.constant 128 : index
    %411 = vector.load %arg15[%c40_175, %c128_176] : memref<64x384xf32, #tpu.memory_space<vmem>>, vector<8x128xf32>
    %c40_177 = arith.constant 40 : index
    %c256_178 = arith.constant 256 : index
    %412 = vector.load %arg15[%c40_177, %c256_178] : memref<64x384xf32, #tpu.memory_space<vmem>>, vector<8x128xf32>
    %cst_179 = arith.constant dense<0.000000e+00> : vector<8x384xf32>
    %413 = tpu.matmul %408, %252, %cst_179 {dimension_numbers = #tpu.dot_dimension_numbers<[1], [0], [0], [1], [0, 0, 1, 1], [], []>} : vector<8x128xf32>, vector<128x384xf32>, vector<8x384xf32> -> vector<8x384xf32>
    %414 = vector.broadcast %254 : vector<1x384xf32> to vector<8x384xf32>
    %415 = arith.addf %413, %414 : vector<8x384xf32>
    %416 = vector.extract_strided_slice %415 {offsets = [0, 0], sizes = [8, 128], strides = [1, 1]} : vector<8x384xf32> to vector<8x128xf32>
    %417 = vector.extract_strided_slice %415 {offsets = [0, 128], sizes = [8, 128], strides = [1, 1]} : vector<8x384xf32> to vector<8x128xf32>
    %418 = vector.extract_strided_slice %415 {offsets = [0, 256], sizes = [8, 128], strides = [1, 1]} : vector<8x384xf32> to vector<8x128xf32>
    %419 = arith.addf %410, %416 : vector<8x128xf32>
    %420 = arith.negf %419 : vector<8x128xf32>
    %421 = math.exp %420 : vector<8x128xf32>
    %cst_180 = arith.constant 1.000000e+00 : f32
    %422 = vector.broadcast %cst_180 : f32 to vector<8x128xf32>
    %423 = arith.addf %422, %421 : vector<8x128xf32>
    %424 = arith.divf %422, %423 : vector<8x128xf32>
    %425 = arith.addf %411, %417 : vector<8x128xf32>
    %426 = arith.negf %425 : vector<8x128xf32>
    %427 = math.exp %426 : vector<8x128xf32>
    %cst_181 = arith.constant 1.000000e+00 : f32
    %428 = vector.broadcast %cst_181 : f32 to vector<8x128xf32>
    %429 = arith.addf %428, %427 : vector<8x128xf32>
    %430 = arith.divf %428, %429 : vector<8x128xf32>
    %431 = arith.mulf %424, %418 : vector<8x128xf32>
    %432 = arith.addf %412, %431 : vector<8x128xf32>
    %433 = math.tanh %432 : vector<8x128xf32>
    %cst_182 = arith.constant 1.000000e+00 : f32
    %434 = vector.broadcast %cst_182 : f32 to vector<8x128xf32>
    %435 = arith.subf %434, %430 : vector<8x128xf32>
    %436 = arith.mulf %435, %433 : vector<8x128xf32>
    %437 = arith.mulf %430, %408 : vector<8x128xf32>
    %438 = arith.addf %436, %437 : vector<8x128xf32>
    %c40_183 = arith.constant 40 : index
    %c0_184 = arith.constant 0 : index
    %439 = vector.load %arg16[%c40_183, %c0_184] : memref<64x128xf32, #tpu.memory_space<vmem>>, vector<8x128xf32>
    tpu.vector_store %arg16[%c40_183, %c0_184], %438 {strides = array<i32>} : memref<64x128xf32, #tpu.memory_space<vmem>>, vector<8x128xf32>,
    %c48_185 = arith.constant 48 : index
    %c0_186 = arith.constant 0 : index
    %440 = vector.load %arg15[%c48_185, %c0_186] : memref<64x384xf32, #tpu.memory_space<vmem>>, vector<8x128xf32>
    %c48_187 = arith.constant 48 : index
    %c128_188 = arith.constant 128 : index
    %441 = vector.load %arg15[%c48_187, %c128_188] : memref<64x384xf32, #tpu.memory_space<vmem>>, vector<8x128xf32>
    %c48_189 = arith.constant 48 : index
    %c256_190 = arith.constant 256 : index
    %442 = vector.load %arg15[%c48_189, %c256_190] : memref<64x384xf32, #tpu.memory_space<vmem>>, vector<8x128xf32>
    %cst_191 = arith.constant dense<0.000000e+00> : vector<8x384xf32>
    %443 = tpu.matmul %438, %252, %cst_191 {dimension_numbers = #tpu.dot_dimension_numbers<[1], [0], [0], [1], [0, 0, 1, 1], [], []>} : vector<8x128xf32>, vector<128x384xf32>, vector<8x384xf32> -> vector<8x384xf32>
    %444 = vector.broadcast %254 : vector<1x384xf32> to vector<8x384xf32>
    %445 = arith.addf %443, %444 : vector<8x384xf32>
    %446 = vector.extract_strided_slice %445 {offsets = [0, 0], sizes = [8, 128], strides = [1, 1]} : vector<8x384xf32> to vector<8x128xf32>
    %447 = vector.extract_strided_slice %445 {offsets = [0, 128], sizes = [8, 128], strides = [1, 1]} : vector<8x384xf32> to vector<8x128xf32>
    %448 = vector.extract_strided_slice %445 {offsets = [0, 256], sizes = [8, 128], strides = [1, 1]} : vector<8x384xf32> to vector<8x128xf32>
    %449 = arith.addf %440, %446 : vector<8x128xf32>
    %450 = arith.negf %449 : vector<8x128xf32>
    %451 = math.exp %450 : vector<8x128xf32>
    %cst_192 = arith.constant 1.000000e+00 : f32
    %452 = vector.broadcast %cst_192 : f32 to vector<8x128xf32>
    %453 = arith.addf %452, %451 : vector<8x128xf32>
    %454 = arith.divf %452, %453 : vector<8x128xf32>
    %455 = arith.addf %441, %447 : vector<8x128xf32>
    %456 = arith.negf %455 : vector<8x128xf32>
    %457 = math.exp %456 : vector<8x128xf32>
    %cst_193 = arith.constant 1.000000e+00 : f32
    %458 = vector.broadcast %cst_193 : f32 to vector<8x128xf32>
    %459 = arith.addf %458, %457 : vector<8x128xf32>
    %460 = arith.divf %458, %459 : vector<8x128xf32>
    %461 = arith.mulf %454, %448 : vector<8x128xf32>
    %462 = arith.addf %442, %461 : vector<8x128xf32>
    %463 = math.tanh %462 : vector<8x128xf32>
    %cst_194 = arith.constant 1.000000e+00 : f32
    %464 = vector.broadcast %cst_194 : f32 to vector<8x128xf32>
    %465 = arith.subf %464, %460 : vector<8x128xf32>
    %466 = arith.mulf %465, %463 : vector<8x128xf32>
    %467 = arith.mulf %460, %438 : vector<8x128xf32>
    %468 = arith.addf %466, %467 : vector<8x128xf32>
    %c48_195 = arith.constant 48 : index
    %c0_196 = arith.constant 0 : index
    %469 = vector.load %arg16[%c48_195, %c0_196] : memref<64x128xf32, #tpu.memory_space<vmem>>, vector<8x128xf32>
    tpu.vector_store %arg16[%c48_195, %c0_196], %468 {strides = array<i32>} : memref<64x128xf32, #tpu.memory_space<vmem>>, vector<8x128xf32>,
    %c56_197 = arith.constant 56 : index
    %c0_198 = arith.constant 0 : index
    %470 = vector.load %arg15[%c56_197, %c0_198] : memref<64x384xf32, #tpu.memory_space<vmem>>, vector<8x128xf32>
    %c56_199 = arith.constant 56 : index
    %c128_200 = arith.constant 128 : index
    %471 = vector.load %arg15[%c56_199, %c128_200] : memref<64x384xf32, #tpu.memory_space<vmem>>, vector<8x128xf32>
    %c56_201 = arith.constant 56 : index
    %c256_202 = arith.constant 256 : index
    %472 = vector.load %arg15[%c56_201, %c256_202] : memref<64x384xf32, #tpu.memory_space<vmem>>, vector<8x128xf32>
    %cst_203 = arith.constant dense<0.000000e+00> : vector<8x384xf32>
    %473 = tpu.matmul %468, %252, %cst_203 {dimension_numbers = #tpu.dot_dimension_numbers<[1], [0], [0], [1], [0, 0, 1, 1], [], []>} : vector<8x128xf32>, vector<128x384xf32>, vector<8x384xf32> -> vector<8x384xf32>
    %474 = vector.broadcast %254 : vector<1x384xf32> to vector<8x384xf32>
    %475 = arith.addf %473, %474 : vector<8x384xf32>
    %476 = vector.extract_strided_slice %475 {offsets = [0, 0], sizes = [8, 128], strides = [1, 1]} : vector<8x384xf32> to vector<8x128xf32>
    %477 = vector.extract_strided_slice %475 {offsets = [0, 128], sizes = [8, 128], strides = [1, 1]} : vector<8x384xf32> to vector<8x128xf32>
    %478 = vector.extract_strided_slice %475 {offsets = [0, 256], sizes = [8, 128], strides = [1, 1]} : vector<8x384xf32> to vector<8x128xf32>
    %479 = arith.addf %470, %476 : vector<8x128xf32>
    %480 = arith.negf %479 : vector<8x128xf32>
    %481 = math.exp %480 : vector<8x128xf32>
    %cst_204 = arith.constant 1.000000e+00 : f32
    %482 = vector.broadcast %cst_204 : f32 to vector<8x128xf32>
    %483 = arith.addf %482, %481 : vector<8x128xf32>
    %484 = arith.divf %482, %483 : vector<8x128xf32>
    %485 = arith.addf %471, %477 : vector<8x128xf32>
    %486 = arith.negf %485 : vector<8x128xf32>
    %487 = math.exp %486 : vector<8x128xf32>
    %cst_205 = arith.constant 1.000000e+00 : f32
    %488 = vector.broadcast %cst_205 : f32 to vector<8x128xf32>
    %489 = arith.addf %488, %487 : vector<8x128xf32>
    %490 = arith.divf %488, %489 : vector<8x128xf32>
    %491 = arith.mulf %484, %478 : vector<8x128xf32>
    %492 = arith.addf %472, %491 : vector<8x128xf32>
    %493 = math.tanh %492 : vector<8x128xf32>
    %cst_206 = arith.constant 1.000000e+00 : f32
    %494 = vector.broadcast %cst_206 : f32 to vector<8x128xf32>
    %495 = arith.subf %494, %490 : vector<8x128xf32>
    %496 = arith.mulf %495, %493 : vector<8x128xf32>
    %497 = arith.mulf %490, %468 : vector<8x128xf32>
    %498 = arith.addf %496, %497 : vector<8x128xf32>
    %c56_207 = arith.constant 56 : index
    %c0_208 = arith.constant 0 : index
    %499 = vector.load %arg16[%c56_207, %c0_208] : memref<64x128xf32, #tpu.memory_space<vmem>>, vector<8x128xf32>
    tpu.vector_store %arg16[%c56_207, %c0_208], %498 {strides = array<i32>} : memref<64x128xf32, #tpu.memory_space<vmem>>, vector<8x128xf32>,
    %c0_209 = arith.constant 0 : index
    %c0_210 = arith.constant 0 : index
    %500 = vector.load %arg16[%c0_209, %c0_210] : memref<64x128xf32, #tpu.memory_space<vmem>>, vector<64x128xf32>
    %c0_211 = arith.constant 0 : index
    %c0_212 = arith.constant 0 : index
    %501 = vector.load %arg10[%c0_211, %c0_212] : memref<128x16xf32, #tpu.memory_space<vmem>>, vector<128x16xf32>
    %cst_213 = arith.constant dense<0.000000e+00> : vector<64x16xf32>
    %502 = tpu.matmul %500, %501, %cst_213 {dimension_numbers = #tpu.dot_dimension_numbers<[1], [0], [0], [1], [0, 0, 1, 1], [], []>} : vector<64x128xf32>, vector<128x16xf32>, vector<64x16xf32> -> vector<64x16xf32>
    %c0_214 = arith.constant 0 : index
    %c0_215 = arith.constant 0 : index
    %503 = vector.load %arg11[%c0_214, %c0_215] : memref<1x16xf32, #tpu.memory_space<vmem>>, vector<1x16xf32>
    %504 = vector.broadcast %503 : vector<1x16xf32> to vector<64x16xf32>
    %505 = arith.addf %502, %504 : vector<64x16xf32>
    %c0_216 = arith.constant 0 : index
    %c0_217 = arith.constant 0 : index
    %506 = vector.load %arg12[%c0_216, %c0_217] : memref<16x1xf32, #tpu.memory_space<vmem>>, vector<16x1xf32>
    %cst_218 = arith.constant dense<0.000000e+00> : vector<64x1xf32>
    %507 = tpu.matmul %505, %506, %cst_218 {dimension_numbers = #tpu.dot_dimension_numbers<[1], [0], [0], [1], [0, 0, 1, 1], [], []>} : vector<64x16xf32>, vector<16x1xf32>, vector<64x1xf32> -> vector<64x1xf32>
    %c0_219 = arith.constant 0 : index
    %c0_220 = arith.constant 0 : index
    %508 = vector.load %arg13[%c0_219, %c0_220] : memref<1x1xf32, #tpu.memory_space<vmem>>, vector<1x1xf32>
    %509 = vector.broadcast %508 : vector<1x1xf32> to vector<64x1xf32>
    %510 = arith.addf %507, %509 : vector<64x1xf32>
    %c0_221 = arith.constant 0 : index
    %c0_222 = arith.constant 0 : index
    %511 = vector.load %arg14[%c0_221, %c0_222] : memref<64x1xf32, #tpu.memory_space<vmem>>, vector<64x1xf32>
    tpu.vector_store %arg14[%c0_221, %c0_222], %510 {strides = array<i32>} : memref<64x1xf32, #tpu.memory_space<vmem>>, vector<64x1xf32>,
    return
  }
  func.func @transform_0(%arg0: i32) -> (i32, i32) {
    %c0_i32 = arith.constant 0 : i32
    %c0_i32_0 = arith.constant 0 : i32
    %c0_i32_1 = arith.constant 0 : i32
    return %c0_i32, %c0_i32_0 : i32, i32
  }
  func.func @transform_1(%arg0: i32) -> (i32, i32) {
    %c0_i32 = arith.constant 0 : i32
    %c0_i32_0 = arith.constant 0 : i32
    %c0_i32_1 = arith.constant 0 : i32
    return %c0_i32, %c0_i32_0 : i32, i32
  }
  func.func @transform_2(%arg0: i32) -> (i32, i32) {
    %c0_i32 = arith.constant 0 : i32
    %c0_i32_0 = arith.constant 0 : i32
    %c0_i32_1 = arith.constant 0 : i32
    return %c0_i32, %c0_i32_0 : i32, i32
  }
  func.func @transform_3(%arg0: i32) -> (i32, i32) {
    %c0_i32 = arith.constant 0 : i32
    %c0_i32_0 = arith.constant 0 : i32
    %c0_i32_1 = arith.constant 0 : i32
    return %c0_i32, %c0_i32_0 : i32, i32
  }
  func.func @transform_4(%arg0: i32) -> (i32, i32) {
    %c0_i32 = arith.constant 0 : i32
    %c0_i32_0 = arith.constant 0 : i32
    %c0_i32_1 = arith.constant 0 : i32
    return %c0_i32, %c0_i32_0 : i32, i32
  }
  func.func @transform_5(%arg0: i32) -> (i32, i32) {
    %c0_i32 = arith.constant 0 : i32
    %c0_i32_0 = arith.constant 0 : i32
    %c0_i32_1 = arith.constant 0 : i32
    return %c0_i32, %c0_i32_0 : i32, i32
  }
  func.func @transform_6(%arg0: i32) -> (i32, i32) {
    %c0_i32 = arith.constant 0 : i32
    %c0_i32_0 = arith.constant 0 : i32
    %c0_i32_1 = arith.constant 0 : i32
    return %c0_i32, %c0_i32_0 : i32, i32
  }
  func.func @transform_7(%arg0: i32) -> (i32, i32) {
    %c0_i32 = arith.constant 0 : i32
    %c0_i32_0 = arith.constant 0 : i32
    %c0_i32_1 = arith.constant 0 : i32
    return %c0_i32, %c0_i32_0 : i32, i32
  }
  func.func @transform_8(%arg0: i32) -> (i32, i32) {
    %c0_i32 = arith.constant 0 : i32
    %c0_i32_0 = arith.constant 0 : i32
    %c0_i32_1 = arith.constant 0 : i32
    return %c0_i32, %c0_i32_0 : i32, i32
  }
  func.func @transform_9(%arg0: i32) -> (i32, i32) {
    %c0_i32 = arith.constant 0 : i32
    %c0_i32_0 = arith.constant 0 : i32
    %c0_i32_1 = arith.constant 0 : i32
    return %c0_i32, %c0_i32_0 : i32, i32
  }
  func.func @transform_10(%arg0: i32) -> (i32, i32) {
    %c0_i32 = arith.constant 0 : i32
    %c0_i32_0 = arith.constant 0 : i32
    %c0_i32_1 = arith.constant 0 : i32
    return %c0_i32, %c0_i32_0 : i32, i32
  }
  func.func @transform_11(%arg0: i32) -> (i32, i32) {
    %c0_i32 = arith.constant 0 : i32
    %c0_i32_0 = arith.constant 0 : i32
    %c0_i32_1 = arith.constant 0 : i32
    return %c0_i32, %c0_i32_0 : i32, i32
  }
  func.func @transform_12(%arg0: i32) -> (i32, i32) {
    %c0_i32 = arith.constant 0 : i32
    %c0_i32_0 = arith.constant 0 : i32
    %c0_i32_1 = arith.constant 0 : i32
    return %c0_i32, %c0_i32_0 : i32, i32
  }
  func.func @transform_13(%arg0: i32) -> (i32, i32) {
    %c0_i32 = arith.constant 0 : i32
    %c0_i32_0 = arith.constant 0 : i32
    %c0_i32_1 = arith.constant 0 : i32
    return %c0_i32, %c0_i32_0 : i32, i32
  }
}

</mosaic_0001>

<llo_original>
// kernel: tpu_custom_call.1
$region0: #{tpu_custom_call.1}
  #allocation0 [shape = 'u32[]', space=smem, size = 0x4, offset = 0x4, fixed_abs, tag = 'smem constant byte address 0x4 - core index']
  #allocation1 [shape = 'u32[144,128]{1,0:T(1,128)}', space=vmem, size = 0x12000, scoped, tag = 'internal scratch']
  #allocation2 [shape = 'f32[64,384]{1,0:T(8,128)}', space=vmem, size = 0x18000, scoped, tag = 'scratch operand']
  #allocation3 [shape = 'f32[64,128]{1,0:T(8,128)}', space=vmem, size = 0x8000, scoped, tag = 'scratch operand']
  #allocation4 [shape = 'f32[1,1]{1,0:T(1,128)S(1)}', space=vmem, size = 0x200, scoped, tag = 'scoped memory for tpu_custom_call.1']
  %s0 = inlined_call_operand.vmem [shape: f32[64,16], index: 0, kind: input, shape index: {}]
  %s1 = inlined_call_operand.vmem [shape: f32[16,384], index: 1, kind: input, shape index: {}]
  %s2 = inlined_call_operand.hbm [shape: f32[128,384], index: 2, kind: input, shape index: {}]
  %s3 = inlined_call_operand.vmem [shape: f32[1,384], index: 3, kind: input, shape index: {}]
  %s4 = inlined_call_operand.vmem [shape: f32[1,384], index: 4, kind: input, shape index: {}]
  %s5 = inlined_call_operand.hbm [shape: f32[128,384], index: 5, kind: input, shape index: {}]
  %s6 = inlined_call_operand.hbm [shape: f32[128,384], index: 6, kind: input, shape index: {}]
  %s7 = inlined_call_operand.vmem [shape: f32[1,384], index: 7, kind: input, shape index: {}]
  %s8 = inlined_call_operand.vmem [shape: f32[1,384], index: 8, kind: input, shape index: {}]
  %s9 = inlined_call_operand.vmem [shape: f32[128,16], index: 9, kind: input, shape index: {}]
  %s10 = inlined_call_operand.vmem [shape: f32[1,16], index: 10, kind: input, shape index: {}]
  %s11 = inlined_call_operand.vmem [shape: f32[16,1], index: 11, kind: input, shape index: {}]
  %s12 = inlined_call_operand.<no memory space> [shape: f32[1,1], index: 12, kind: input, shape index: {}]
  %s13 = inlined_call_operand.vmem [shape: f32[64,1], index: 13, kind: output, shape index: {}]
  %s14 = sld [smem:[#allocation0]]
  $region74: #{tpu_custom_call.1} parent=0
    _
  %s16 = ssub.s32 1, %s14
  %s17 = scalar_select 0, %s16, %s14
  %v18 = vstv %s12
  %19 = vst [vmem:[#allocation4] sm:$0x1] %v18
  $region1: #{tpu_custom_call.1} parent=0
    #allocation5 [shape = 'u8[196608]{0}', space=vmem, size = 0x30000, scoped, tag = 'input window, operand 2, single buffered']
    #allocation6 [shape = 's32[1]{0}', space=sflag, size = 0x4, scoped, tag = 'scoped memory for tpu_custom_call.1']
    #allocation7 [shape = 'u8[196608]{0}', space=vmem, size = 0x30000, scoped, tag = 'input window, operand 5, single buffered']
    #allocation8 [shape = 's32[1]{0}', space=sflag, size = 0x4, scoped, tag = 'scoped memory for tpu_custom_call.1']
    #allocation9 [shape = 'u8[196608]{0}', space=vmem, size = 0x30000, scoped, tag = 'input window, operand 6, single buffered']
    %20 = vsyncpa [#allocation6], 0
    %21 = vsyncpa [#allocation8], 0
    // Predicated region
    $region2: #{tpu_custom_call.1} parent=1 // pred_check
      _
    $region3: #{tpu_custom_call.1} parent=1 // pred_check_branch
      %23 = sbr.rel (0) target = $region5
    $region4: #{tpu_custom_call.1} parent=1 // pred_region
      _
    $region5: #{tpu_custom_call.1} parent=1 // pred_fallthru
      _
    // Predicated region
    $region6: #{tpu_custom_call.1} parent=1 // pred_check
      _
    $region7: #{tpu_custom_call.1} parent=1 // pred_check_branch
      %25 = sbr.rel (0) target = $region9
    $region8: #{tpu_custom_call.1} parent=1 // pred_region
      _
    $region9: #{tpu_custom_call.1} parent=1 // pred_fallthru
      _
    // Predicated region
    $region10: #{tpu_custom_call.1} parent=1 // pred_check
      _
    $region11: #{tpu_custom_call.1} parent=1 // pred_check_branch
      %27 = sbr.rel (0) target = $region13
    $region12: #{tpu_custom_call.1} parent=1 // pred_region
      %s29 = ssub.s32 6144, 6144
      %30 = vsyncadd [#allocation6], %s29
      %s31 = sshll.u32 [#allocation5], 4
      %s32 = int_to_ptr.vmem [resolvable:$true] %s31
      %37 = dma.hbm_to_vmem [thread:$0]  %s2, 6144, %s32, [#allocation6], 384, 384, 24
    $region13: #{tpu_custom_call.1} parent=1 // pred_fallthru
      _
    // Predicated region
    $region14: #{tpu_custom_call.1} parent=1 // pred_check
      _
    $region15: #{tpu_custom_call.1} parent=1 // pred_check_branch
      %39 = sbr.rel (0) target = $region17
    $region16: #{tpu_custom_call.1} parent=1 // pred_region
      _
    $region17: #{tpu_custom_call.1} parent=1 // pred_fallthru
      _
    // Predicated region
    $region18: #{tpu_custom_call.1} parent=1 // pred_check
      _
    $region19: #{tpu_custom_call.1} parent=1 // pred_check_branch
      %41 = sbr.rel (0) target = $region21
    $region20: #{tpu_custom_call.1} parent=1 // pred_region
      _
    $region21: #{tpu_custom_call.1} parent=1 // pred_fallthru
      _
    // Predicated region
    $region22: #{tpu_custom_call.1} parent=1 // pred_check
      _
    $region23: #{tpu_custom_call.1} parent=1 // pred_check_branch
      %43 = sbr.rel (0) target = $region25
    $region24: #{tpu_custom_call.1} parent=1 // pred_region
      %s45 = ssub.s32 6144, 6144
      %46 = vsyncadd [#allocation8], %s45
      %s47 = sshll.u32 [#allocation7], 4
      %s48 = int_to_ptr.vmem [resolvable:$true] %s47
      %53 = dma.hbm_to_vmem [thread:$0]  %s5, 6144, %s48, [#allocation8], 384, 384, 24
    $region25: #{tpu_custom_call.1} parent=1 // pred_fallthru
      _
    // Predicated region
    $region26: #{tpu_custom_call.1} parent=1 // pred_check
      _
    $region27: #{tpu_custom_call.1} parent=1 // pred_check_branch
      %55 = sbr.rel (0) target = $region29
    $region28: #{tpu_custom_call.1} parent=1 // pred_region
      %s57 = ssub.s32 6144, 6144
      %58 = vsyncadd [#allocation8], %s57
      %s59 = sshll.u32 [#allocation9], 4
      %s60 = int_to_ptr.vmem [resolvable:$true] %s59
      %65 = dma.hbm_to_vmem [thread:$0]  %s6, 6144, %s60, [#allocation8], 384, 384, 24
    $region29: #{tpu_custom_call.1} parent=1 // pred_fallthru
      _
    // Predicated region
    $region30: #{tpu_custom_call.1} parent=1 // pred_check
      _
    $region31: #{tpu_custom_call.1} parent=1 // pred_check_branch
      %67 = sbr.rel (0) target = $region33
    $region32: #{tpu_custom_call.1} parent=1 // pred_region
      _
    $region33: #{tpu_custom_call.1} parent=1 // pred_fallthru
      _
    // Predicated region
    $region34: #{tpu_custom_call.1} parent=1 // pred_check
      _
    $region35: #{tpu_custom_call.1} parent=1 // pred_check_branch
      %69 = sbr.rel (0) target = $region37
    $region36: #{tpu_custom_call.1} parent=1 // pred_region
      _
    $region37: #{tpu_custom_call.1} parent=1 // pred_fallthru
      _
    // Predicated region
    $region38: #{tpu_custom_call.1} parent=1 // pred_check
      _
    $region39: #{tpu_custom_call.1} parent=1 // pred_check_branch
      %71 = sbr.rel (0) target = $region41
    $region40: #{tpu_custom_call.1} parent=1 // pred_region
      _
    $region41: #{tpu_custom_call.1} parent=1 // pred_fallthru
      _
    // Predicated region
    $region42: #{tpu_custom_call.1} parent=1 // pred_check
      _
    $region43: #{tpu_custom_call.1} parent=1 // pred_check_branch
      %73 = sbr.rel (0) target = $region45
    $region44: #{tpu_custom_call.1} parent=1 // pred_region
      _
    $region45: #{tpu_custom_call.1} parent=1 // pred_fallthru
      _
    // Predicated region
    $region46: #{tpu_custom_call.1} parent=1 // pred_check
      _
    $region47: #{tpu_custom_call.1} parent=1 // pred_check_branch
      %75 = sbr.rel (0) target = $region49
    $region48: #{tpu_custom_call.1} parent=1 // pred_region
      _
    $region49: #{tpu_custom_call.1} parent=1 // pred_fallthru
      _
    // Predicated region
    $region50: #{tpu_custom_call.1} parent=1 // pred_check
      _
    $region51: #{tpu_custom_call.1} parent=1 // pred_check_branch
      %77 = sbr.rel (0) target = $region53
    $region52: #{tpu_custom_call.1} parent=1 // pred_region
      _
    $region53: #{tpu_custom_call.1} parent=1 // pred_fallthru
      _
    // Predicated region
    $region54: #{tpu_custom_call.1} parent=1 // pred_check
      _
    $region55: #{tpu_custom_call.1} parent=1 // pred_check_branch
      %79 = sbr.rel (0) target = $region57
    $region56: #{tpu_custom_call.1} parent=1 // pred_region
      %80 = dma.done [#allocation6], 6144
    $region57: #{tpu_custom_call.1} parent=1 // pred_fallthru
      _
    // Predicated region
    $region58: #{tpu_custom_call.1} parent=1 // pred_check
      _
    $region59: #{tpu_custom_call.1} parent=1 // pred_check_branch
      %82 = sbr.rel (0) target = $region61
    $region60: #{tpu_custom_call.1} parent=1 // pred_region
      %83 = dma.done [#allocation8], 6144
    $region61: #{tpu_custom_call.1} parent=1 // pred_fallthru
      _
    // Predicated region
    $region62: #{tpu_custom_call.1} parent=1 // pred_check
      _
    $region63: #{tpu_custom_call.1} parent=1 // pred_check_branch
      %85 = sbr.rel (0) target = $region65
    $region64: #{tpu_custom_call.1} parent=1 // pred_region
      %86 = dma.done [#allocation8], 6144
    $region65: #{tpu_custom_call.1} parent=1 // pred_fallthru
      _
    %v87 = vld [vmem:[%s0] sm:$0xff]
    %v88 = vld [vmem:[%s0 + $0x8] sm:$0xff]
    %v89 = vld [vmem:[%s0 + $0x10] sm:$0xff]
    %v90 = vld [vmem:[%s0 + $0x18] sm:$0xff]
    %v91 = vld [vmem:[%s0 + $0x20] sm:$0xff]
    %v92 = vld [vmem:[%s0 + $0x28] sm:$0xff]
    %v93 = vld [vmem:[%s0 + $0x30] sm:$0xff]
    %v94 = vld [vmem:[%s0 + $0x38] sm:$0xff]
    %v95 = vld [vmem:[%s1] sm:$0xff]
    %v96 = vld [vmem:[%s1 + $0x8] sm:$0xff]
    %v97 = vld [vmem:[%s1 + $0x10] sm:$0xff]
    %v98 = vld [vmem:[%s1 + $0x18] sm:$0xff]
    %v99 = vld [vmem:[%s1 + $0x20] sm:$0xff]
    %v100 = vld [vmem:[%s1 + $0x28] sm:$0xff]
    %v101 = vld [vmem:[#allocation5] sm:$0xff]
    %v102 = vld [vmem:[#allocation5 + $0x8] sm:$0xff]
    %v103 = vld [vmem:[#allocation5 + $0x10] sm:$0xff]
    %v104 = vld [vmem:[#allocation5 + $0x18] sm:$0xff]
    %v105 = vld [vmem:[#allocation5 + $0x20] sm:$0xff]
    %v106 = vld [vmem:[#allocation5 + $0x28] sm:$0xff]
    %v107 = vld [vmem:[#allocation5 + $0x30] sm:$0xff]
    %v108 = vld [vmem:[#allocation5 + $0x38] sm:$0xff]
    %v109 = vld [vmem:[#allocation5 + $0x40] sm:$0xff]
    %v110 = vld [vmem:[#allocation5 + $0x48] sm:$0xff]
    %v111 = vld [vmem:[#allocation5 + $0x50] sm:$0xff]
    %v112 = vld [vmem:[#allocation5 + $0x58] sm:$0xff]
    %v113 = vld [vmem:[#allocation5 + $0x60] sm:$0xff]
    %v114 = vld [vmem:[#allocation5 + $0x68] sm:$0xff]
    %v115 = vld [vmem:[#allocation5 + $0x70] sm:$0xff]
    %v116 = vld [vmem:[#allocation5 + $0x78] sm:$0xff]
    %v117 = vld [vmem:[#allocation5 + $0x80] sm:$0xff]
    %v118 = vld [vmem:[#allocation5 + $0x88] sm:$0xff]
    %v119 = vld [vmem:[#allocation5 + $0x90] sm:$0xff]
    %v120 = vld [vmem:[#allocation5 + $0x98] sm:$0xff]
    %v121 = vld [vmem:[#allocation5 + $0xa0] sm:$0xff]
    %v122 = vld [vmem:[#allocation5 + $0xa8] sm:$0xff]
    %v123 = vld [vmem:[#allocation5 + $0xb0] sm:$0xff]
    %v124 = vld [vmem:[#allocation5 + $0xb8] sm:$0xff]
    %v125 = vld [vmem:[#allocation5 + $0xc0] sm:$0xff]
    %v126 = vld [vmem:[#allocation5 + $0xc8] sm:$0xff]
    %v127 = vld [vmem:[#allocation5 + $0xd0] sm:$0xff]
    %v128 = vld [vmem:[#allocation5 + $0xd8] sm:$0xff]
    %v129 = vld [vmem:[#allocation5 + $0xe0] sm:$0xff]
    %v130 = vld [vmem:[#allocation5 + $0xe8] sm:$0xff]
    %v131 = vld [vmem:[#allocation5 + $0xf0] sm:$0xff]
    %v132 = vld [vmem:[#allocation5 + $0xf8] sm:$0xff]
    %v133 = vld [vmem:[#allocation5 + $0x100] sm:$0xff]
    %v134 = vld [vmem:[#allocation5 + $0x108] sm:$0xff]
    %v135 = vld [vmem:[#allocation5 + $0x110] sm:$0xff]
    %v136 = vld [vmem:[#allocation5 + $0x118] sm:$0xff]
    %v137 = vld [vmem:[#allocation5 + $0x120] sm:$0xff]
    %v138 = vld [vmem:[#allocation5 + $0x128] sm:$0xff]
    %v139 = vld [vmem:[#allocation5 + $0x130] sm:$0xff]
    %v140 = vld [vmem:[#allocation5 + $0x138] sm:$0xff]
    %v141 = vld [vmem:[#allocation5 + $0x140] sm:$0xff]
    %v142 = vld [vmem:[#allocation5 + $0x148] sm:$0xff]
    %v143 = vld [vmem:[#allocation5 + $0x150] sm:$0xff]
    %v144 = vld [vmem:[#allocation5 + $0x158] sm:$0xff]
    %v145 = vld [vmem:[#allocation5 + $0x160] sm:$0xff]
    %v146 = vld [vmem:[#allocation5 + $0x168] sm:$0xff]
    %v147 = vld [vmem:[#allocation5 + $0x170] sm:$0xff]
    %v148 = vld [vmem:[#allocation5 + $0x178] sm:$0xff]
    %v149 = vld [vmem:[%s3] sm:$0x7]
    %v150 = vld [vmem:[%s4] sm:$0x7]
    %v152 = vlaneseq
    %v153 = vshrl.u32 %v152, 7
    %v154 = vsub.s32 0, %v153
    %v155 = vrot.slane %v149, %v154
    %v156 = vlaneseq
    %v157 = vshrl.u32 %v156, 7
    %v158 = vsub.s32 1, %v157
    %v159 = vrot.slane %v149, %v158
    %v160 = vlaneseq
    %v161 = vshrl.u32 %v160, 7
    %v162 = vsub.s32 2, %v161
    %v163 = vrot.slane %v149, %v162
    %vm167 = vcmask 130048
    %v169 = vsel %vm167, %v87, 0
    %v172 = vsel %vm167, %v88, 0
    %v175 = vsel %vm167, %v89, 0
    %v178 = vsel %vm167, %v90, 0
    %v181 = vsel %vm167, %v91, 0
    %v184 = vsel %vm167, %v92, 0
    %v187 = vsel %vm167, %v93, 0
    %v190 = vsel %vm167, %v94, 0
    %192 = vmatprep.subr.mxu0 %v96
    %193 = vmatpush1.msra.mxu0 %v95
    %194 = vmatprep.subr.mxu0 %v99
    %195 = vmatpush1.msra.mxu0 %v98
    %196 = vmatprep.subr.mxu0 0.0
    %197 = vmatpush1.msra.mxu0 0.0
    %198 = vmatprep.subr.mxu0 0.0
    %199 = vmatpush1.msra.mxu0 0.0
    %200 = vmatprep.subr.mxu0 0.0
    %201 = vmatpush1.msra.mxu0 0.0
    %202 = vmatprep.subr.mxu0 0.0
    %203 = vmatpush1.msra.mxu0 0.0
    %204 = vmatprep.subr.mxu0 0.0
    %205 = vmatpush1.msra.mxu0 0.0
    %206 = vmatprep.subr.mxu0 0.0
    %207 = vmatpush1.msra.mxu0 0.0
    %208 = vmatprep.subr.mxu0 0.0
    %209 = vmatpush1.msra.mxu0 0.0
    %210 = vmatprep.subr.mxu0 0.0
    %211 = vmatpush1.msra.mxu0 0.0
    %212 = vmatprep.subr.mxu0 0.0
    %213 = vmatpush1.msra.mxu0 0.0
    %214 = vmatprep.subr.mxu0 0.0
    %215 = vmatpush1.msra.mxu0 0.0
    %216 = vmatprep.subr.mxu0 0.0
    %217 = vmatpush1.msra.mxu0 0.0
    %218 = vmatprep.subr.mxu0 0.0
    %219 = vmatpush1.msra.mxu0 0.0
    %220 = vmatprep.subr.mxu0 0.0
    %221 = vmatpush1.msra.mxu0 0.0
    %222 = vmatprep.subr.mxu0 0.0
    %223 = vmatpush1.msra.mxu0 0.0
    %224 = vmatprep.subr.mxu0 0.0
    %225 = vmatpush1.msra.mxu0 0.0
    %226 = vmatprep.subr.mxu0 0.0
    %227 = vmatpush1.msra.mxu0 0.0
    %228 = vmatprep.subr.mxu0 0.0
    %229 = vmatpush1.msra.mxu0 0.0
    %230 = vmatprep.subr.mxu0 0.0
    %231 = vmatpush1.msra.mxu0 0.0
    %232 = vmatprep.subr.mxu0 0.0
    %233 = vmatpush1.msra.mxu0 0.0
    %234 = vmatprep.subr.mxu0 0.0
    %235 = vmatpush1.msra.mxu0 0.0
    %236 = vmatprep.subr.mxu0 0.0
    %237 = vmatpush1.msra.mxu0 0.0
    %238 = vmatprep.subr.mxu0 0.0
    %239 = vmatpush1.msra.mxu0 0.0
    %240 = vmatprep.subr.mxu0 0.0
    %241 = vmatpush1.msra.mxu0 0.0
    %242 = vmatprep.subr.mxu0 0.0
    %243 = vmatpush1.msra.mxu0 0.0
    %244 = vmatprep.subr.mxu0 0.0
    %245 = vmatpush1.msra.mxu0 0.0
    %246 = vmatprep.subr.mxu0 0.0
    %247 = vmatpush1.msra.mxu0 0.0
    %248 = vmatprep.subr.mxu0 0.0
    %249 = vmatpush1.msra.mxu0 0.0
    %250 = vmatprep.subr.mxu0 0.0
    %251 = vmatpush1.msra.mxu0 0.0
    %252 = vmatprep.subr.mxu0 0.0
    %253 = vmatpush1.msra.mxu0 0.0
    %254 = vmatprep.subr.mxu0 0.0
    %255 = vmatpush1.msra.mxu0 0.0
    %256 = vmatprep.mubr.f32.mxu0 0.0
    %257 = vmatmul.mubr.f32.gmra.mrb[0].mxu0 %v169
    %v258 = vpop.f32.mrb[0].mxu0
    %v259 = vadd.f32 %v155, %v258
    %v260 = vpop.f32.mrb[0].mxu0
    %v261 = vadd.f32 %v159, %v260
    %262 = vmatprep.mubr.f32.mxu0 0.0
    %263 = vmatmul.mubr.f32.gmra.mrb[0].mxu0 %v172
    %v264 = vpop.f32.mrb[0].mxu0
    %v265 = vadd.f32 %v155, %v264
    %v266 = vpop.f32.mrb[0].mxu0
    %v267 = vadd.f32 %v159, %v266
    %268 = vmatprep.mubr.f32.mxu0 0.0
    %269 = vmatmul.mubr.f32.gmra.mrb[0].mxu0 %v175
    %v270 = vpop.f32.mrb[0].mxu0
    %v271 = vadd.f32 %v155, %v270
    %v272 = vpop.f32.mrb[0].mxu0
    %v273 = vadd.f32 %v159, %v272
    %274 = vmatprep.mubr.f32.mxu0 0.0
    %275 = vmatmul.mubr.f32.gmra.mrb[0].mxu0 %v178
    %v276 = vpop.f32.mrb[0].mxu0
    %v277 = vadd.f32 %v155, %v276
    %v278 = vpop.f32.mrb[0].mxu0
    %v279 = vadd.f32 %v159, %v278
    %280 = vmatprep.mubr.f32.mxu0 0.0
    %281 = vmatmul.mubr.f32.gmra.mrb[0].mxu0 %v181
    %v282 = vpop.f32.mrb[0].mxu0
    %v283 = vadd.f32 %v155, %v282
    %v284 = vpop.f32.mrb[0].mxu0
    %v285 = vadd.f32 %v159, %v284
    %286 = vmatprep.mubr.f32.mxu0 0.0
    %287 = vmatmul.mubr.f32.gmra.mrb[0].mxu0 %v184
    %v288 = vpop.f32.mrb[0].mxu0
    %v289 = vadd.f32 %v155, %v288
    %v290 = vpop.f32.mrb[0].mxu0
    %v291 = vadd.f32 %v159, %v290
    %292 = vmatprep.mubr.f32.mxu0 0.0
    %293 = vmatmul.mubr.f32.gmra.mrb[0].mxu0 %v187
    %v294 = vpop.f32.mrb[0].mxu0
    %v295 = vadd.f32 %v155, %v294
    %v296 = vpop.f32.mrb[0].mxu0
    %v297 = vadd.f32 %v159, %v296
    %298 = vmatprep.mubr.f32.mxu0 0.0
    %299 = vmatmul.mubr.f32.gmra.mrb[0].mxu0 %v190
    %v300 = vpop.f32.mrb[0].mxu0
    %v301 = vadd.f32 %v155, %v300
    %v302 = vpop.f32.mrb[0].mxu0
    %v303 = vadd.f32 %v159, %v302
    %304 = vdwg.mxu0
    %305 = vmatprep.subr.mxu0 0.0
    %306 = vmatpush1.msra.mxu0 %v97
    %307 = vmatprep.subr.mxu0 0.0
    %308 = vmatpush1.msra.mxu0 %v100
    %309 = vmatprep.subr.mxu0 0.0
    %310 = vmatpush1.msra.mxu0 0.0
    %311 = vmatprep.subr.mxu0 0.0
    %312 = vmatpush1.msra.mxu0 0.0
    %313 = vmatprep.subr.mxu0 0.0
    %314 = vmatpush1.msra.mxu0 0.0
    %315 = vmatprep.subr.mxu0 0.0
    %316 = vmatpush1.msra.mxu0 0.0
    %317 = vmatprep.subr.mxu0 0.0
    %318 = vmatpush1.msra.mxu0 0.0
    %319 = vmatprep.subr.mxu0 0.0
    %320 = vmatpush1.msra.mxu0 0.0
    %321 = vmatprep.subr.mxu0 0.0
    %322 = vmatpush1.msra.mxu0 0.0
    %323 = vmatprep.subr.mxu0 0.0
    %324 = vmatpush1.msra.mxu0 0.0
    %325 = vmatprep.subr.mxu0 0.0
    %326 = vmatpush1.msra.mxu0 0.0
    %327 = vmatprep.subr.mxu0 0.0
    %328 = vmatpush1.msra.mxu0 0.0
    %329 = vmatprep.subr.mxu0 0.0
    %330 = vmatpush1.msra.mxu0 0.0
    %331 = vmatprep.subr.mxu0 0.0
    %332 = vmatpush1.msra.mxu0 0.0
    %333 = vmatprep.subr.mxu0 0.0
    %334 = vmatpush1.msra.mxu0 0.0
    %335 = vmatprep.subr.mxu0 0.0
    %336 = vmatpush1.msra.mxu0 0.0
    %337 = vmatprep.subr.mxu0 0.0
    %338 = vmatpush1.msra.mxu0 0.0
    %339 = vmatprep.subr.mxu0 0.0
    %340 = vmatpush1.msra.mxu0 0.0
    %341 = vmatprep.subr.mxu0 0.0
    %342 = vmatpush1.msra.mxu0 0.0
    %343 = vmatprep.subr.mxu0 0.0
    %344 = vmatpush1.msra.mxu0 0.0
    %345 = vmatprep.subr.mxu0 0.0
    %346 = vmatpush1.msra.mxu0 0.0
    %347 = vmatprep.subr.mxu0 0.0
    %348 = vmatpush1.msra.mxu0 0.0
    %349 = vmatprep.subr.mxu0 0.0
    %350 = vmatpush1.msra.mxu0 0.0
    %351 = vmatprep.subr.mxu0 0.0
    %352 = vmatpush1.msra.mxu0 0.0
    %353 = vmatprep.subr.mxu0 0.0
    %354 = vmatpush1.msra.mxu0 0.0
    %355 = vmatprep.subr.mxu0 0.0
    %356 = vmatpush1.msra.mxu0 0.0
    %357 = vmatprep.subr.mxu0 0.0
    %358 = vmatpush1.msra.mxu0 0.0
    %359 = vmatprep.subr.mxu0 0.0
    %360 = vmatpush1.msra.mxu0 0.0
    %361 = vmatprep.subr.mxu0 0.0
    %362 = vmatpush1.msra.mxu0 0.0
    %363 = vmatprep.subr.mxu0 0.0
    %364 = vmatpush1.msra.mxu0 0.0
    %365 = vmatprep.subr.mxu0 0.0
    %366 = vmatpush1.msra.mxu0 0.0
    %367 = vmatprep.subr.mxu0 0.0
    %368 = vmatpush1.msra.mxu0 0.0
    %369 = vmatprep.mubr.f32.mxu0 0.0
    %370 = vmatmul.mubr.f32.gmra.mrb[0].mxu0 %v169
    %v371 = vpop.f32.mrb[0].mxu0
    %v372 = vadd.f32 %v163, %v371
    %v373 = vpop.f32.mrb[0].mxu0
    %374 = vmatprep.mubr.f32.mxu0 0.0
    %375 = vmatmul.mubr.f32.gmra.mrb[0].mxu0 %v172
    %v376 = vpop.f32.mrb[0].mxu0
    %v377 = vadd.f32 %v163, %v376
    %v378 = vpop.f32.mrb[0].mxu0
    %379 = vmatprep.mubr.f32.mxu0 0.0
    %380 = vmatmul.mubr.f32.gmra.mrb[0].mxu0 %v175
    %v381 = vpop.f32.mrb[0].mxu0
    %v382 = vadd.f32 %v163, %v381
    %v383 = vpop.f32.mrb[0].mxu0
    %384 = vmatprep.mubr.f32.mxu0 0.0
    %385 = vmatmul.mubr.f32.gmra.mrb[0].mxu0 %v178
    %v386 = vpop.f32.mrb[0].mxu0
    %v387 = vadd.f32 %v163, %v386
    %v388 = vpop.f32.mrb[0].mxu0
    %389 = vmatprep.mubr.f32.mxu0 0.0
    %390 = vmatmul.mubr.f32.gmra.mrb[0].mxu0 %v181
    %v391 = vpop.f32.mrb[0].mxu0
    %v392 = vadd.f32 %v163, %v391
    %v393 = vpop.f32.mrb[0].mxu0
    %394 = vmatprep.mubr.f32.mxu0 0.0
    %395 = vmatmul.mubr.f32.gmra.mrb[0].mxu0 %v184
    %v396 = vpop.f32.mrb[0].mxu0
    %v397 = vadd.f32 %v163, %v396
    %v398 = vpop.f32.mrb[0].mxu0
    %399 = vmatprep.mubr.f32.mxu0 0.0
    %400 = vmatmul.mubr.f32.gmra.mrb[0].mxu0 %v187
    %v401 = vpop.f32.mrb[0].mxu0
    %v402 = vadd.f32 %v163, %v401
    %v403 = vpop.f32.mrb[0].mxu0
    %404 = vmatprep.mubr.f32.mxu0 0.0
    %405 = vmatmul.mubr.f32.gmra.mrb[0].mxu0 %v190
    %v406 = vpop.f32.mrb[0].mxu0
    %v407 = vadd.f32 %v163, %v406
    %v408 = vpop.f32.mrb[0].mxu0
    %409 = vdwg.mxu0
    %410 = vst [vmem:[#allocation2] sm:$0xff] %v259
    %411 = vst [vmem:[#allocation2 + $0x8] sm:$0xff] %v261
    %412 = vst [vmem:[#allocation2 + $0x10] sm:$0xff] %v372
    %413 = vst [vmem:[#allocation2 + $0x18] sm:$0xff] %v265
    %414 = vst [vmem:[#allocation2 + $0x20] sm:$0xff] %v267
    %415 = vst [vmem:[#allocation2 + $0x28] sm:$0xff] %v377
    %416 = vst [vmem:[#allocation2 + $0x30] sm:$0xff] %v271
    %417 = vst [vmem:[#allocation2 + $0x38] sm:$0xff] %v273
    %418 = vst [vmem:[#allocation2 + $0x40] sm:$0xff] %v382
    %419 = vst [vmem:[#allocation2 + $0x48] sm:$0xff] %v277
    %420 = vst [vmem:[#allocation2 + $0x50] sm:$0xff] %v279
    %421 = vst [vmem:[#allocation2 + $0x58] sm:$0xff] %v387
    %422 = vst [vmem:[#allocation2 + $0x60] sm:$0xff] %v283
    %423 = vst [vmem:[#allocation2 + $0x68] sm:$0xff] %v285
    %424 = vst [vmem:[#allocation2 + $0x70] sm:$0xff] %v392
    %425 = vst [vmem:[#allocation2 + $0x78] sm:$0xff] %v289
    %426 = vst [vmem:[#allocation2 + $0x80] sm:$0xff] %v291
    %427 = vst [vmem:[#allocation2 + $0x88] sm:$0xff] %v397
    %428 = vst [vmem:[#allocation2 + $0x90] sm:$0xff] %v295
    %429 = vst [vmem:[#allocation2 + $0x98] sm:$0xff] %v297
    %430 = vst [vmem:[#allocation2 + $0xa0] sm:$0xff] %v402
    %431 = vst [vmem:[#allocation2 + $0xa8] sm:$0xff] %v301
    %432 = vst [vmem:[#allocation2 + $0xb0] sm:$0xff] %v303
    %433 = vst [vmem:[#allocation2 + $0xb8] sm:$0xff] %v407
    %v434 = vld [vmem:[#allocation2] sm:$0xff]
    %v435 = vld [vmem:[#allocation2 + $0x8] sm:$0xff]
    %v436 = vld [vmem:[#allocation2 + $0x10] sm:$0xff]
    %v438 = vlaneseq
    %v439 = vshrl.u32 %v438, 7
    %v440 = vsub.s32 0, %v439
    %v441 = vrot.slane %v150, %v440
    %v442 = vlaneseq
    %v443 = vshrl.u32 %v442, 7
    %v444 = vsub.s32 1, %v443
    %v445 = vrot.slane %v150, %v444
    %v446 = vlaneseq
    %v447 = vshrl.u32 %v446, 7
    %v448 = vsub.s32 2, %v447
    %v449 = vrot.slane %v150, %v448
    %453 = vmatprep.subr.mxu0 %v102
    %454 = vmatpush1.msra.mxu0 %v101
    %455 = vmatprep.subr.mxu0 %v105
    %456 = vmatpush1.msra.mxu0 %v104
    %457 = vmatprep.subr.mxu0 %v108
    %458 = vmatpush1.msra.mxu0 %v107
    %459 = vmatprep.subr.mxu0 %v111
    %460 = vmatpush1.msra.mxu0 %v110
    %461 = vmatprep.subr.mxu0 %v114
    %462 = vmatpush1.msra.mxu0 %v113
    %463 = vmatprep.subr.mxu0 %v117
    %464 = vmatpush1.msra.mxu0 %v116
    %465 = vmatprep.subr.mxu0 %v120
    %466 = vmatpush1.msra.mxu0 %v119
    %467 = vmatprep.subr.mxu0 %v123
    %468 = vmatpush1.msra.mxu0 %v122
    %469 = vmatprep.subr.mxu0 %v126
    %470 = vmatpush1.msra.mxu0 %v125
    %471 = vmatprep.subr.mxu0 %v129
    %472 = vmatpush1.msra.mxu0 %v128
    %473 = vmatprep.subr.mxu0 %v132
    %474 = vmatpush1.msra.mxu0 %v131
    %475 = vmatprep.subr.mxu0 %v135
    %476 = vmatpush1.msra.mxu0 %v134
    %477 = vmatprep.subr.mxu0 %v138
    %478 = vmatpush1.msra.mxu0 %v137
    %479 = vmatprep.subr.mxu0 %v141
    %480 = vmatpush1.msra.mxu0 %v140
    %481 = vmatprep.subr.mxu0 %v144
    %482 = vmatpush1.msra.mxu0 %v143
    %483 = vmatprep.subr.mxu0 %v147
    %484 = vmatpush1.msra.mxu0 %v146
    %485 = vmatprep.subr.mxu0 0.0
    %486 = vmatpush1.msra.mxu0 0.0
    %487 = vmatprep.subr.mxu0 0.0
    %488 = vmatpush1.msra.mxu0 0.0
    %489 = vmatprep.subr.mxu0 0.0
    %490 = vmatpush1.msra.mxu0 0.0
    %491 = vmatprep.subr.mxu0 0.0
    %492 = vmatpush1.msra.mxu0 0.0
    %493 = vmatprep.subr.mxu0 0.0
    %494 = vmatpush1.msra.mxu0 0.0
    %495 = vmatprep.subr.mxu0 0.0
    %496 = vmatpush1.msra.mxu0 0.0
    %497 = vmatprep.subr.mxu0 0.0
    %498 = vmatpush1.msra.mxu0 0.0
    %499 = vmatprep.subr.mxu0 0.0
    %500 = vmatpush1.msra.mxu0 0.0
    %501 = vmatprep.subr.mxu0 0.0
    %502 = vmatpush1.msra.mxu0 0.0
    %503 = vmatprep.subr.mxu0 0.0
    %504 = vmatpush1.msra.mxu0 0.0
    %505 = vmatprep.subr.mxu0 0.0
    %506 = vmatpush1.msra.mxu0 0.0
    %507 = vmatprep.subr.mxu0 0.0
    %508 = vmatpush1.msra.mxu0 0.0
    %509 = vmatprep.subr.mxu0 0.0
    %510 = vmatpush1.msra.mxu0 0.0
    %511 = vmatprep.subr.mxu0 0.0
    %512 = vmatpush1.msra.mxu0 0.0
    %513 = vmatprep.subr.mxu0 0.0
    %514 = vmatpush1.msra.mxu0 0.0
    %515 = vmatprep.subr.mxu0 0.0
    %516 = vmatpush1.msra.mxu0 0.0
    %517 = vmatprep.mubr.f32.mxu0 0.0
    %518 = vmatmul.mubr.f32.gmra.mrb[0].mxu0 0.0
    %v519 = vpop.f32.mrb[0].mxu0
    %v520 = vadd.f32 %v441, %v519
    %v521 = vpop.f32.mrb[0].mxu0
    %v522 = vadd.f32 %v445, %v521
    %523 = vdwg.mxu0
    %524 = vmatprep.subr.mxu0 0.0
    %525 = vmatpush1.msra.mxu0 %v103
    %526 = vmatprep.subr.mxu0 0.0
    %527 = vmatpush1.msra.mxu0 %v106
    %528 = vmatprep.subr.mxu0 0.0
    %529 = vmatpush1.msra.mxu0 %v109
    %530 = vmatprep.subr.mxu0 0.0
    %531 = vmatpush1.msra.mxu0 %v112
    %532 = vmatprep.subr.mxu0 0.0
    %533 = vmatpush1.msra.mxu0 %v115
    %534 = vmatprep.subr.mxu0 0.0
    %535 = vmatpush1.msra.mxu0 %v118
    %536 = vmatprep.subr.mxu0 0.0
    %537 = vmatpush1.msra.mxu0 %v121
    %538 = vmatprep.subr.mxu0 0.0
    %539 = vmatpush1.msra.mxu0 %v124
    %540 = vmatprep.subr.mxu0 0.0
    %541 = vmatpush1.msra.mxu0 %v127
    %542 = vmatprep.subr.mxu0 0.0
    %543 = vmatpush1.msra.mxu0 %v130
    %544 = vmatprep.subr.mxu0 0.0
    %545 = vmatpush1.msra.mxu0 %v133
    %546 = vmatprep.subr.mxu0 0.0
    %547 = vmatpush1.msra.mxu0 %v136
    %548 = vmatprep.subr.mxu0 0.0
    %549 = vmatpush1.msra.mxu0 %v139
    %550 = vmatprep.subr.mxu0 0.0
    %551 = vmatpush1.msra.mxu0 %v142
    %552 = vmatprep.subr.mxu0 0.0
    %553 = vmatpush1.msra.mxu0 %v145
    %554 = vmatprep.subr.mxu0 0.0
    %555 = vmatpush1.msra.mxu0 %v148
    %556 = vmatprep.subr.mxu0 0.0
    %557 = vmatpush1.msra.mxu0 0.0
    %558 = vmatprep.subr.mxu0 0.0
    %559 = vmatpush1.msra.mxu0 0.0
    %560 = vmatprep.subr.mxu0 0.0
    %561 = vmatpush1.msra.mxu0 0.0
    %562 = vmatprep.subr.mxu0 0.0
    %563 = vmatpush1.msra.mxu0 0.0
    %564 = vmatprep.subr.mxu0 0.0
    %565 = vmatpush1.msra.mxu0 0.0
    %566 = vmatprep.subr.mxu0 0.0
    %567 = vmatpush1.msra.mxu0 0.0
    %568 = vmatprep.subr.mxu0 0.0
    %569 = vmatpush1.msra.mxu0 0.0
    %570 = vmatprep.subr.mxu0 0.0
    %571 = vmatpush1.msra.mxu0 0.0
    %572 = vmatprep.subr.mxu0 0.0
    %573 = vmatpush1.msra.mxu0 0.0
    %574 = vmatprep.subr.mxu0 0.0
    %575 = vmatpush1.msra.mxu0 0.0
    %576 = vmatprep.subr.mxu0 0.0
    %577 = vmatpush1.msra.mxu0 0.0
    %578 = vmatprep.subr.mxu0 0.0
    %579 = vmatpush1.msra.mxu0 0.0
    %580 = vmatprep.subr.mxu0 0.0
    %581 = vmatpush1.msra.mxu0 0.0
    %582 = vmatprep.subr.mxu0 0.0
    %583 = vmatpush1.msra.mxu0 0.0
    %584 = vmatprep.subr.mxu0 0.0
    %585 = vmatpush1.msra.mxu0 0.0
    %586 = vmatprep.subr.mxu0 0.0
    %587 = vmatpush1.msra.mxu0 0.0
    %588 = vmatprep.mubr.f32.mxu0 0.0
    %589 = vmatmul.mubr.f32.gmra.mrb[0].mxu0 0.0
    %v590 = vpop.f32.mrb[0].mxu0
    %v591 = vadd.f32 %v449, %v590
    %v592 = vpop.f32.mrb[0].mxu0
    %593 = vdwg.mxu0
    %v594 = vadd.f32 %v434, %v520
    %v595 = vxor.u32 %v594, 2147483648
    %v596 = vmul.f32 %v595, 1.442695
    %v597 = vpow.pop %v596
    %v598 = vadd.f32 %v597, 1.0
    %v599 = vrcp.pop %v598
    %v600 = vmul.f32 1.0, %v599
    %v601 = vadd.f32 %v435, %v522
    %v602 = vxor.u32 %v601, 2147483648
    %v603 = vmul.f32 %v602, 1.442695
    %v604 = vpow.pop %v603
    %v605 = vadd.f32 %v604, 1.0
    %v606 = vrcp.pop %v605
    %v607 = vmul.f32 1.0, %v606
    %v608 = vmul.f32 %v600, %v591
    %v609 = vadd.f32 %v436, %v608
    %v610 = vtanh.pop %v609
    %v611 = vsub.f32 1.0, %v607
    %v612 = vmul.f32 %v611, %v610
    %v613 = vmul.f32 %v607, 0.0
    %v614 = vadd.f32 %v612, %v613
    %615 = vst [vmem:[#allocation3] sm:$0xff] %v614
    %v616 = vld [vmem:[#allocation2 + $0x18] sm:$0xff]
    %v617 = vld [vmem:[#allocation2 + $0x20] sm:$0xff]
    %v618 = vld [vmem:[#allocation2 + $0x28] sm:$0xff]
    %619 = vmatprep.subr.mxu0 %v102
    %620 = vmatpush1.msra.mxu0 %v101
    %621 = vmatprep.subr.mxu0 %v105
    %622 = vmatpush1.msra.mxu0 %v104
    %623 = vmatprep.subr.mxu0 %v108
    %624 = vmatpush1.msra.mxu0 %v107
    %625 = vmatprep.subr.mxu0 %v111
    %626 = vmatpush1.msra.mxu0 %v110
    %627 = vmatprep.subr.mxu0 %v114
    %628 = vmatpush1.msra.mxu0 %v113
    %629 = vmatprep.subr.mxu0 %v117
    %630 = vmatpush1.msra.mxu0 %v116
    %631 = vmatprep.subr.mxu0 %v120
    %632 = vmatpush1.msra.mxu0 %v119
    %633 = vmatprep.subr.mxu0 %v123
    %634 = vmatpush1.msra.mxu0 %v122
    %635 = vmatprep.subr.mxu0 %v126
    %636 = vmatpush1.msra.mxu0 %v125
    %637 = vmatprep.subr.mxu0 %v129
    %638 = vmatpush1.msra.mxu0 %v128
    %639 = vmatprep.subr.mxu0 %v132
    %640 = vmatpush1.msra.mxu0 %v131
    %641 = vmatprep.subr.mxu0 %v135
    %642 = vmatpush1.msra.mxu0 %v134
    %643 = vmatprep.subr.mxu0 %v138
    %644 = vmatpush1.msra.mxu0 %v137
    %645 = vmatprep.subr.mxu0 %v141
    %646 = vmatpush1.msra.mxu0 %v140
    %647 = vmatprep.subr.mxu0 %v144
    %648 = vmatpush1.msra.mxu0 %v143
    %649 = vmatprep.subr.mxu0 %v147
    %650 = vmatpush1.msra.mxu0 %v146
    %651 = vmatprep.subr.mxu0 0.0
    %652 = vmatpush1.msra.mxu0 0.0
    %653 = vmatprep.subr.mxu0 0.0
    %654 = vmatpush1.msra.mxu0 0.0
    %655 = vmatprep.subr.mxu0 0.0
    %656 = vmatpush1.msra.mxu0 0.0
    %657 = vmatprep.subr.mxu0 0.0
    %658 = vmatpush1.msra.mxu0 0.0
    %659 = vmatprep.subr.mxu0 0.0
    %660 = vmatpush1.msra.mxu0 0.0
    %661 = vmatprep.subr.mxu0 0.0
    %662 = vmatpush1.msra.mxu0 0.0
    %663 = vmatprep.subr.mxu0 0.0
    %664 = vmatpush1.msra.mxu0 0.0
    %665 = vmatprep.subr.mxu0 0.0
    %666 = vmatpush1.msra.mxu0 0.0
    %667 = vmatprep.subr.mxu0 0.0
    %668 = vmatpush1.msra.mxu0 0.0
    %669 = vmatprep.subr.mxu0 0.0
    %670 = vmatpush1.msra.mxu0 0.0
    %671 = vmatprep.subr.mxu0 0.0
    %672 = vmatpush1.msra.mxu0 0.0
    %673 = vmatprep.subr.mxu0 0.0
    %674 = vmatpush1.msra.mxu0 0.0
    %675 = vmatprep.subr.mxu0 0.0
    %676 = vmatpush1.msra.mxu0 0.0
    %677 = vmatprep.subr.mxu0 0.0
    %678 = vmatpush1.msra.mxu0 0.0
    %679 = vmatprep.subr.mxu0 0.0
    %680 = vmatpush1.msra.mxu0 0.0
    %681 = vmatprep.subr.mxu0 0.0
    %682 = vmatpush1.msra.mxu0 0.0
    %683 = vmatprep.mubr.f32.mxu0 0.0
    %684 = vmatmul.mubr.f32.gmra.mrb[0].mxu0 %v614
    %v685 = vpop.f32.mrb[0].mxu0
    %v686 = vadd.f32 %v441, %v685
    %v687 = vpop.f32.mrb[0].mxu0
    %v688 = vadd.f32 %v445, %v687
    %689 = vdwg.mxu0
    %690 = vmatprep.subr.mxu0 0.0
    %691 = vmatpush1.msra.mxu0 %v103
    %692 = vmatprep.subr.mxu0 0.0
    %693 = vmatpush1.msra.mxu0 %v106
    %694 = vmatprep.subr.mxu0 0.0
    %695 = vmatpush1.msra.mxu0 %v109
    %696 = vmatprep.subr.mxu0 0.0
    %697 = vmatpush1.msra.mxu0 %v112
    %698 = vmatprep.subr.mxu0 0.0
    %699 = vmatpush1.msra.mxu0 %v115
    %700 = vmatprep.subr.mxu0 0.0
    %701 = vmatpush1.msra.mxu0 %v118
    %702 = vmatprep.subr.mxu0 0.0
    %703 = vmatpush1.msra.mxu0 %v121
    %704 = vmatprep.subr.mxu0 0.0
    %705 = vmatpush1.msra.mxu0 %v124
    %706 = vmatprep.subr.mxu0 0.0
    %707 = vmatpush1.msra.mxu0 %v127
    %708 = vmatprep.subr.mxu0 0.0
    %709 = vmatpush1.msra.mxu0 %v130
    %710 = vmatprep.subr.mxu0 0.0
    %711 = vmatpush1.msra.mxu0 %v133
    %712 = vmatprep.subr.mxu0 0.0
    %713 = vmatpush1.msra.mxu0 %v136
    %714 = vmatprep.subr.mxu0 0.0
    %715 = vmatpush1.msra.mxu0 %v139
    %716 = vmatprep.subr.mxu0 0.0
    %717 = vmatpush1.msra.mxu0 %v142
    %718 = vmatprep.subr.mxu0 0.0
    %719 = vmatpush1.msra.mxu0 %v145
    %720 = vmatprep.subr.mxu0 0.0
    %721 = vmatpush1.msra.mxu0 %v148
    %722 = vmatprep.subr.mxu0 0.0
    %723 = vmatpush1.msra.mxu0 0.0
    %724 = vmatprep.subr.mxu0 0.0
    %725 = vmatpush1.msra.mxu0 0.0
    %726 = vmatprep.subr.mxu0 0.0
    %727 = vmatpush1.msra.mxu0 0.0
    %728 = vmatprep.subr.mxu0 0.0
    %729 = vmatpush1.msra.mxu0 0.0
    %730 = vmatprep.subr.mxu0 0.0
    %731 = vmatpush1.msra.mxu0 0.0
    %732 = vmatprep.subr.mxu0 0.0
    %733 = vmatpush1.msra.mxu0 0.0
    %734 = vmatprep.subr.mxu0 0.0
    %735 = vmatpush1.msra.mxu0 0.0
    %736 = vmatprep.subr.mxu0 0.0
    %737 = vmatpush1.msra.mxu0 0.0
    %738 = vmatprep.subr.mxu0 0.0
    %739 = vmatpush1.msra.mxu0 0.0
    %740 = vmatprep.subr.mxu0 0.0
    %741 = vmatpush1.msra.mxu0 0.0
    %742 = vmatprep.subr.mxu0 0.0
    %743 = vmatpush1.msra.mxu0 0.0
    %744 = vmatprep.subr.mxu0 0.0
    %745 = vmatpush1.msra.mxu0 0.0
    %746 = vmatprep.subr.mxu0 0.0
    %747 = vmatpush1.msra.mxu0 0.0
    %748 = vmatprep.subr.mxu0 0.0
    %749 = vmatpush1.msra.mxu0 0.0
    %750 = vmatprep.subr.mxu0 0.0
    %751 = vmatpush1.msra.mxu0 0.0
    %752 = vmatprep.subr.mxu0 0.0
    %753 = vmatpush1.msra.mxu0 0.0
    %754 = vmatprep.mubr.f32.mxu0 0.0
    %755 = vmatmul.mubr.f32.gmra.mrb[0].mxu0 %v614
    %v756 = vpop.f32.mrb[0].mxu0
    %v757 = vadd.f32 %v449, %v756
    %v758 = vpop.f32.mrb[0].mxu0
    %759 = vdwg.mxu0
    %v760 = vadd.f32 %v616, %v686
    %v761 = vxor.u32 %v760, 2147483648
    %v762 = vmul.f32 %v761, 1.442695
    %v763 = vpow.pop %v762
    %v764 = vadd.f32 %v763, 1.0
    %v765 = vrcp.pop %v764
    %v766 = vmul.f32 1.0, %v765
    %v767 = vadd.f32 %v617, %v688
    %v768 = vxor.u32 %v767, 2147483648
    %v769 = vmul.f32 %v768, 1.442695
    %v770 = vpow.pop %v769
    %v771 = vadd.f32 %v770, 1.0
    %v772 = vrcp.pop %v771
    %v773 = vmul.f32 1.0, %v772
    %v774 = vmul.f32 %v766, %v757
    %v775 = vadd.f32 %v618, %v774
    %v776 = vtanh.pop %v775
    %v777 = vsub.f32 1.0, %v773
    %v778 = vmul.f32 %v777, %v776
    %v779 = vmul.f32 %v773, %v614
    %v780 = vadd.f32 %v778, %v779
    %781 = vst [vmem:[#allocation3 + $0x8] sm:$0xff] %v780
    %v782 = vld [vmem:[#allocation2 + $0x30] sm:$0xff]
    %v783 = vld [vmem:[#allocation2 + $0x38] sm:$0xff]
    %v784 = vld [vmem:[#allocation2 + $0x40] sm:$0xff]
    %785 = vmatprep.subr.mxu0 %v102
    %786 = vmatpush1.msra.mxu0 %v101
    %787 = vmatprep.subr.mxu0 %v105
    %788 = vmatpush1.msra.mxu0 %v104
    %789 = vmatprep.subr.mxu0 %v108
    %790 = vmatpush1.msra.mxu0 %v107
    %791 = vmatprep.subr.mxu0 %v111
    %792 = vmatpush1.msra.mxu0 %v110
    %793 = vmatprep.subr.mxu0 %v114
    %794 = vmatpush1.msra.mxu0 %v113
    %795 = vmatprep.subr.mxu0 %v117
    %796 = vmatpush1.msra.mxu0 %v116
    %797 = vmatprep.subr.mxu0 %v120
    %798 = vmatpush1.msra.mxu0 %v119
    %799 = vmatprep.subr.mxu0 %v123
    %800 = vmatpush1.msra.mxu0 %v122
    %801 = vmatprep.subr.mxu0 %v126
    %802 = vmatpush1.msra.mxu0 %v125
    %803 = vmatprep.subr.mxu0 %v129
    %804 = vmatpush1.msra.mxu0 %v128
    %805 = vmatprep.subr.mxu0 %v132
    %806 = vmatpush1.msra.mxu0 %v131
    %807 = vmatprep.subr.mxu0 %v135
    %808 = vmatpush1.msra.mxu0 %v134
    %809 = vmatprep.subr.mxu0 %v138
    %810 = vmatpush1.msra.mxu0 %v137
    %811 = vmatprep.subr.mxu0 %v141
    %812 = vmatpush1.msra.mxu0 %v140
    %813 = vmatprep.subr.mxu0 %v144
    %814 = vmatpush1.msra.mxu0 %v143
    %815 = vmatprep.subr.mxu0 %v147
    %816 = vmatpush1.msra.mxu0 %v146
    %817 = vmatprep.subr.mxu0 0.0
    %818 = vmatpush1.msra.mxu0 0.0
    %819 = vmatprep.subr.mxu0 0.0
    %820 = vmatpush1.msra.mxu0 0.0
    %821 = vmatprep.subr.mxu0 0.0
    %822 = vmatpush1.msra.mxu0 0.0
    %823 = vmatprep.subr.mxu0 0.0
    %824 = vmatpush1.msra.mxu0 0.0
    %825 = vmatprep.subr.mxu0 0.0
    %826 = vmatpush1.msra.mxu0 0.0
    %827 = vmatprep.subr.mxu0 0.0
    %828 = vmatpush1.msra.mxu0 0.0
    %829 = vmatprep.subr.mxu0 0.0
    %830 = vmatpush1.msra.mxu0 0.0
    %831 = vmatprep.subr.mxu0 0.0
    %832 = vmatpush1.msra.mxu0 0.0
    %833 = vmatprep.subr.mxu0 0.0
    %834 = vmatpush1.msra.mxu0 0.0
    %835 = vmatprep.subr.mxu0 0.0
    %836 = vmatpush1.msra.mxu0 0.0
    %837 = vmatprep.subr.mxu0 0.0
    %838 = vmatpush1.msra.mxu0 0.0
    %839 = vmatprep.subr.mxu0 0.0
    %840 = vmatpush1.msra.mxu0 0.0
    %841 = vmatprep.subr.mxu0 0.0
    %842 = vmatpush1.msra.mxu0 0.0
    %843 = vmatprep.subr.mxu0 0.0
    %844 = vmatpush1.msra.mxu0 0.0
    %845 = vmatprep.subr.mxu0 0.0
    %846 = vmatpush1.msra.mxu0 0.0
    %847 = vmatprep.subr.mxu0 0.0
    %848 = vmatpush1.msra.mxu0 0.0
    %849 = vmatprep.mubr.f32.mxu0 0.0
    %850 = vmatmul.mubr.f32.gmra.mrb[0].mxu0 %v780
    %v851 = vpop.f32.mrb[0].mxu0
    %v852 = vadd.f32 %v441, %v851
    %v853 = vpop.f32.mrb[0].mxu0
    %v854 = vadd.f32 %v445, %v853
    %855 = vdwg.mxu0
    %856 = vmatprep.subr.mxu0 0.0
    %857 = vmatpush1.msra.mxu0 %v103
    %858 = vmatprep.subr.mxu0 0.0
    %859 = vmatpush1.msra.mxu0 %v106
    %860 = vmatprep.subr.mxu0 0.0
    %861 = vmatpush1.msra.mxu0 %v109
    %862 = vmatprep.subr.mxu0 0.0
    %863 = vmatpush1.msra.mxu0 %v112
    %864 = vmatprep.subr.mxu0 0.0
    %865 = vmatpush1.msra.mxu0 %v115
    %866 = vmatprep.subr.mxu0 0.0
    %867 = vmatpush1.msra.mxu0 %v118
    %868 = vmatprep.subr.mxu0 0.0
    %869 = vmatpush1.msra.mxu0 %v121
    %870 = vmatprep.subr.mxu0 0.0
    %871 = vmatpush1.msra.mxu0 %v124
    %872 = vmatprep.subr.mxu0 0.0
    %873 = vmatpush1.msra.mxu0 %v127
    %874 = vmatprep.subr.mxu0 0.0
    %875 = vmatpush1.msra.mxu0 %v130
    %876 = vmatprep.subr.mxu0 0.0
    %877 = vmatpush1.msra.mxu0 %v133
    %878 = vmatprep.subr.mxu0 0.0
    %879 = vmatpush1.msra.mxu0 %v136
    %880 = vmatprep.subr.mxu0 0.0
    %881 = vmatpush1.msra.mxu0 %v139
    %882 = vmatprep.subr.mxu0 0.0
    %883 = vmatpush1.msra.mxu0 %v142
    %884 = vmatprep.subr.mxu0 0.0
    %885 = vmatpush1.msra.mxu0 %v145
    %886 = vmatprep.subr.mxu0 0.0
    %887 = vmatpush1.msra.mxu0 %v148
    %888 = vmatprep.subr.mxu0 0.0
    %889 = vmatpush1.msra.mxu0 0.0
    %890 = vmatprep.subr.mxu0 0.0
    %891 = vmatpush1.msra.mxu0 0.0
    %892 = vmatprep.subr.mxu0 0.0
    %893 = vmatpush1.msra.mxu0 0.0
    %894 = vmatprep.subr.mxu0 0.0
    %895 = vmatpush1.msra.mxu0 0.0
    %896 = vmatprep.subr.mxu0 0.0
    %897 = vmatpush1.msra.mxu0 0.0
    %898 = vmatprep.subr.mxu0 0.0
    %899 = vmatpush1.msra.mxu0 0.0
    %900 = vmatprep.subr.mxu0 0.0
    %901 = vmatpush1.msra.mxu0 0.0
    %902 = vmatprep.subr.mxu0 0.0
    %903 = vmatpush1.msra.mxu0 0.0
    %904 = vmatprep.subr.mxu0 0.0
    %905 = vmatpush1.msra.mxu0 0.0
    %906 = vmatprep.subr.mxu0 0.0
    %907 = vmatpush1.msra.mxu0 0.0
    %908 = vmatprep.subr.mxu0 0.0
    %909 = vmatpush1.msra.mxu0 0.0
    %910 = vmatprep.subr.mxu0 0.0
    %911 = vmatpush1.msra.mxu0 0.0
    %912 = vmatprep.subr.mxu0 0.0
    %913 = vmatpush1.msra.mxu0 0.0
    %914 = vmatprep.subr.mxu0 0.0
    %915 = vmatpush1.msra.mxu0 0.0
    %916 = vmatprep.subr.mxu0 0.0
    %917 = vmatpush1.msra.mxu0 0.0
    %918 = vmatprep.subr.mxu0 0.0
    %919 = vmatpush1.msra.mxu0 0.0
    %920 = vmatprep.mubr.f32.mxu0 0.0
    %921 = vmatmul.mubr.f32.gmra.mrb[0].mxu0 %v780
    %v922 = vpop.f32.mrb[0].mxu0
    %v923 = vadd.f32 %v449, %v922
    %v924 = vpop.f32.mrb[0].mxu0
    %925 = vdwg.mxu0
    %v926 = vadd.f32 %v782, %v852
    %v927 = vxor.u32 %v926, 2147483648
    %v928 = vmul.f32 %v927, 1.442695
    %v929 = vpow.pop %v928
    %v930 = vadd.f32 %v929, 1.0
    %v931 = vrcp.pop %v930
    %v932 = vmul.f32 1.0, %v931
    %v933 = vadd.f32 %v783, %v854
    %v934 = vxor.u32 %v933, 2147483648
    %v935 = vmul.f32 %v934, 1.442695
    %v936 = vpow.pop %v935
    %v937 = vadd.f32 %v936, 1.0
    %v938 = vrcp.pop %v937
    %v939 = vmul.f32 1.0, %v938
    %v940 = vmul.f32 %v932, %v923
    %v941 = vadd.f32 %v784, %v940
    %v942 = vtanh.pop %v941
    %v943 = vsub.f32 1.0, %v939
    %v944 = vmul.f32 %v943, %v942
    %v945 = vmul.f32 %v939, %v780
    %v946 = vadd.f32 %v944, %v945
    %947 = vst [vmem:[#allocation3 + $0x10] sm:$0xff] %v946
    %v948 = vld [vmem:[#allocation2 + $0x48] sm:$0xff]
    %v949 = vld [vmem:[#allocation2 + $0x50] sm:$0xff]
    %v950 = vld [vmem:[#allocation2 + $0x58] sm:$0xff]
    %951 = vmatprep.subr.mxu0 %v102
    %952 = vmatpush1.msra.mxu0 %v101
    %953 = vmatprep.subr.mxu0 %v105
    %954 = vmatpush1.msra.mxu0 %v104
    %955 = vmatprep.subr.mxu0 %v108
    %956 = vmatpush1.msra.mxu0 %v107
    %957 = vmatprep.subr.mxu0 %v111
    %958 = vmatpush1.msra.mxu0 %v110
    %959 = vmatprep.subr.mxu0 %v114
    %960 = vmatpush1.msra.mxu0 %v113
    %961 = vmatprep.subr.mxu0 %v117
    %962 = vmatpush1.msra.mxu0 %v116
    %963 = vmatprep.subr.mxu0 %v120
    %964 = vmatpush1.msra.mxu0 %v119
    %965 = vmatprep.subr.mxu0 %v123
    %966 = vmatpush1.msra.mxu0 %v122
    %967 = vmatprep.subr.mxu0 %v126
    %968 = vmatpush1.msra.mxu0 %v125
    %969 = vmatprep.subr.mxu0 %v129
    %970 = vmatpush1.msra.mxu0 %v128
    %971 = vmatprep.subr.mxu0 %v132
    %972 = vmatpush1.msra.mxu0 %v131
    %973 = vmatprep.subr.mxu0 %v135
    %974 = vmatpush1.msra.mxu0 %v134
    %975 = vmatprep.subr.mxu0 %v138
    %976 = vmatpush1.msra.mxu0 %v137
    %977 = vmatprep.subr.mxu0 %v141
    %978 = vmatpush1.msra.mxu0 %v140
    %979 = vmatprep.subr.mxu0 %v144
    %980 = vmatpush1.msra.mxu0 %v143
    %981 = vmatprep.subr.mxu0 %v147
    %982 = vmatpush1.msra.mxu0 %v146
    %983 = vmatprep.subr.mxu0 0.0
    %984 = vmatpush1.msra.mxu0 0.0
    %985 = vmatprep.subr.mxu0 0.0
    %986 = vmatpush1.msra.mxu0 0.0
    %987 = vmatprep.subr.mxu0 0.0
    %988 = vmatpush1.msra.mxu0 0.0
    %989 = vmatprep.subr.mxu0 0.0
    %990 = vmatpush1.msra.mxu0 0.0
    %991 = vmatprep.subr.mxu0 0.0
    %992 = vmatpush1.msra.mxu0 0.0
    %993 = vmatprep.subr.mxu0 0.0
    %994 = vmatpush1.msra.mxu0 0.0
    %995 = vmatprep.subr.mxu0 0.0
    %996 = vmatpush1.msra.mxu0 0.0
    %997 = vmatprep.subr.mxu0 0.0
    %998 = vmatpush1.msra.mxu0 0.0
    %999 = vmatprep.subr.mxu0 0.0
    %1000 = vmatpush1.msra.mxu0 0.0
    %1001 = vmatprep.subr.mxu0 0.0
    %1002 = vmatpush1.msra.mxu0 0.0
    %1003 = vmatprep.subr.mxu0 0.0
    %1004 = vmatpush1.msra.mxu0 0.0
    %1005 = vmatprep.subr.mxu0 0.0
    %1006 = vmatpush1.msra.mxu0 0.0
    %1007 = vmatprep.subr.mxu0 0.0
    %1008 = vmatpush1.msra.mxu0 0.0
    %1009 = vmatprep.subr.mxu0 0.0
    %1010 = vmatpush1.msra.mxu0 0.0
    %1011 = vmatprep.subr.mxu0 0.0
    %1012 = vmatpush1.msra.mxu0 0.0
    %1013 = vmatprep.subr.mxu0 0.0
    %1014 = vmatpush1.msra.mxu0 0.0
    %1015 = vmatprep.mubr.f32.mxu0 0.0
    %1016 = vmatmul.mubr.f32.gmra.mrb[0].mxu0 %v946
    %v1017 = vpop.f32.mrb[0].mxu0
    %v1018 = vadd.f32 %v441, %v1017
    %v1019 = vpop.f32.mrb[0].mxu0
    %v1020 = vadd.f32 %v445, %v1019
    %1021 = vdwg.mxu0
    %1022 = vmatprep.subr.mxu0 0.0
    %1023 = vmatpush1.msra.mxu0 %v103
    %1024 = vmatprep.subr.mxu0 0.0
    %1025 = vmatpush1.msra.mxu0 %v106
    %1026 = vmatprep.subr.mxu0 0.0
    %1027 = vmatpush1.msra.mxu0 %v109
    %1028 = vmatprep.subr.mxu0 0.0
    %1029 = vmatpush1.msra.mxu0 %v112
    %1030 = vmatprep.subr.mxu0 0.0
    %1031 = vmatpush1.msra.mxu0 %v115
    %1032 = vmatprep.subr.mxu0 0.0
    %1033 = vmatpush1.msra.mxu0 %v118
    %1034 = vmatprep.subr.mxu0 0.0
    %1035 = vmatpush1.msra.mxu0 %v121
    %1036 = vmatprep.subr.mxu0 0.0
    %1037 = vmatpush1.msra.mxu0 %v124
    %1038 = vmatprep.subr.mxu0 0.0
    %1039 = vmatpush1.msra.mxu0 %v127
    %1040 = vmatprep.subr.mxu0 0.0
    %1041 = vmatpush1.msra.mxu0 %v130
    %1042 = vmatprep.subr.mxu0 0.0
    %1043 = vmatpush1.msra.mxu0 %v133
    %1044 = vmatprep.subr.mxu0 0.0
    %1045 = vmatpush1.msra.mxu0 %v136
    %1046 = vmatprep.subr.mxu0 0.0
    %1047 = vmatpush1.msra.mxu0 %v139
    %1048 = vmatprep.subr.mxu0 0.0
    %1049 = vmatpush1.msra.mxu0 %v142
    %1050 = vmatprep.subr.mxu0 0.0
    %1051 = vmatpush1.msra.mxu0 %v145
    %1052 = vmatprep.subr.mxu0 0.0
    %1053 = vmatpush1.msra.mxu0 %v148
    %1054 = vmatprep.subr.mxu0 0.0
    %1055 = vmatpush1.msra.mxu0 0.0
    %1056 = vmatprep.subr.mxu0 0.0
    %1057 = vmatpush1.msra.mxu0 0.0
    %1058 = vmatprep.subr.mxu0 0.0
    %1059 = vmatpush1.msra.mxu0 0.0
    %1060 = vmatprep.subr.mxu0 0.0
    %1061 = vmatpush1.msra.mxu0 0.0
    %1062 = vmatprep.subr.mxu0 0.0
    %1063 = vmatpush1.msra.mxu0 0.0
    %1064 = vmatprep.subr.mxu0 0.0
    %1065 = vmatpush1.msra.mxu0 0.0
    %1066 = vmatprep.subr.mxu0 0.0
    %1067 = vmatpush1.msra.mxu0 0.0
    %1068 = vmatprep.subr.mxu0 0.0
    %1069 = vmatpush1.msra.mxu0 0.0
    %1070 = vmatprep.subr.mxu0 0.0
    %1071 = vmatpush1.msra.mxu0 0.0
    %1072 = vmatprep.subr.mxu0 0.0
    %1073 = vmatpush1.msra.mxu0 0.0
    %1074 = vmatprep.subr.mxu0 0.0
    %1075 = vmatpush1.msra.mxu0 0.0
    %1076 = vmatprep.subr.mxu0 0.0
    %1077 = vmatpush1.msra.mxu0 0.0
    %1078 = vmatprep.subr.mxu0 0.0
    %1079 = vmatpush1.msra.mxu0 0.0
    %1080 = vmatprep.subr.mxu0 0.0
    %1081 = vmatpush1.msra.mxu0 0.0
    %1082 = vmatprep.subr.mxu0 0.0
    %1083 = vmatpush1.msra.mxu0 0.0
    %1084 = vmatprep.subr.mxu0 0.0
    %1085 = vmatpush1.msra.mxu0 0.0
    %1086 = vmatprep.mubr.f32.mxu0 0.0
    %1087 = vmatmul.mubr.f32.gmra.mrb[0].mxu0 %v946
    %v1088 = vpop.f32.mrb[0].mxu0
    %v1089 = vadd.f32 %v449, %v1088
    %v1090 = vpop.f32.mrb[0].mxu0
    %1091 = vdwg.mxu0
    %v1092 = vadd.f32 %v948, %v1018
    %v1093 = vxor.u32 %v1092, 2147483648
    %v1094 = vmul.f32 %v1093, 1.442695
    %v1095 = vpow.pop %v1094
    %v1096 = vadd.f32 %v1095, 1.0
    %v1097 = vrcp.pop %v1096
    %v1098 = vmul.f32 1.0, %v1097
    %v1099 = vadd.f32 %v949, %v1020
    %v1100 = vxor.u32 %v1099, 2147483648
    %v1101 = vmul.f32 %v1100, 1.442695
    %v1102 = vpow.pop %v1101
    %v1103 = vadd.f32 %v1102, 1.0
    %v1104 = vrcp.pop %v1103
    %v1105 = vmul.f32 1.0, %v1104
    %v1106 = vmul.f32 %v1098, %v1089
    %v1107 = vadd.f32 %v950, %v1106
    %v1108 = vtanh.pop %v1107
    %v1109 = vsub.f32 1.0, %v1105
    %v1110 = vmul.f32 %v1109, %v1108
    %v1111 = vmul.f32 %v1105, %v946
    %v1112 = vadd.f32 %v1110, %v1111
    %1113 = vst [vmem:[#allocation3 + $0x18] sm:$0xff] %v1112
    %v1114 = vld [vmem:[#allocation2 + $0x60] sm:$0xff]
    %v1115 = vld [vmem:[#allocation2 + $0x68] sm:$0xff]
    %v1116 = vld [vmem:[#allocation2 + $0x70] sm:$0xff]
    %1117 = vmatprep.subr.mxu0 %v102
    %1118 = vmatpush1.msra.mxu0 %v101
    %1119 = vmatprep.subr.mxu0 %v105
    %1120 = vmatpush1.msra.mxu0 %v104
    %1121 = vmatprep.subr.mxu0 %v108
    %1122 = vmatpush1.msra.mxu0 %v107
    %1123 = vmatprep.subr.mxu0 %v111
    %1124 = vmatpush1.msra.mxu0 %v110
    %1125 = vmatprep.subr.mxu0 %v114
    %1126 = vmatpush1.msra.mxu0 %v113
    %1127 = vmatprep.subr.mxu0 %v117
    %1128 = vmatpush1.msra.mxu0 %v116
    %1129 = vmatprep.subr.mxu0 %v120
    %1130 = vmatpush1.msra.mxu0 %v119
    %1131 = vmatprep.subr.mxu0 %v123
    %1132 = vmatpush1.msra.mxu0 %v122
    %1133 = vmatprep.subr.mxu0 %v126
    %1134 = vmatpush1.msra.mxu0 %v125
    %1135 = vmatprep.subr.mxu0 %v129
    %1136 = vmatpush1.msra.mxu0 %v128
    %1137 = vmatprep.subr.mxu0 %v132
    %1138 = vmatpush1.msra.mxu0 %v131
    %1139 = vmatprep.subr.mxu0 %v135
    %1140 = vmatpush1.msra.mxu0 %v134
    %1141 = vmatprep.subr.mxu0 %v138
    %1142 = vmatpush1.msra.mxu0 %v137
    %1143 = vmatprep.subr.mxu0 %v141
    %1144 = vmatpush1.msra.mxu0 %v140
    %1145 = vmatprep.subr.mxu0 %v144
    %1146 = vmatpush1.msra.mxu0 %v143
    %1147 = vmatprep.subr.mxu0 %v147
    %1148 = vmatpush1.msra.mxu0 %v146
    %1149 = vmatprep.subr.mxu0 0.0
    %1150 = vmatpush1.msra.mxu0 0.0
    %1151 = vmatprep.subr.mxu0 0.0
    %1152 = vmatpush1.msra.mxu0 0.0
    %1153 = vmatprep.subr.mxu0 0.0
    %1154 = vmatpush1.msra.mxu0 0.0
    %1155 = vmatprep.subr.mxu0 0.0
    %1156 = vmatpush1.msra.mxu0 0.0
    %1157 = vmatprep.subr.mxu0 0.0
    %1158 = vmatpush1.msra.mxu0 0.0
    %1159 = vmatprep.subr.mxu0 0.0
    %1160 = vmatpush1.msra.mxu0 0.0
    %1161 = vmatprep.subr.mxu0 0.0
    %1162 = vmatpush1.msra.mxu0 0.0
    %1163 = vmatprep.subr.mxu0 0.0
    %1164 = vmatpush1.msra.mxu0 0.0
    %1165 = vmatprep.subr.mxu0 0.0
    %1166 = vmatpush1.msra.mxu0 0.0
    %1167 = vmatprep.subr.mxu0 0.0
    %1168 = vmatpush1.msra.mxu0 0.0
    %1169 = vmatprep.subr.mxu0 0.0
    %1170 = vmatpush1.msra.mxu0 0.0
    %1171 = vmatprep.subr.mxu0 0.0
    %1172 = vmatpush1.msra.mxu0 0.0
    %1173 = vmatprep.subr.mxu0 0.0
    %1174 = vmatpush1.msra.mxu0 0.0
    %1175 = vmatprep.subr.mxu0 0.0
    %1176 = vmatpush1.msra.mxu0 0.0
    %1177 = vmatprep.subr.mxu0 0.0
    %1178 = vmatpush1.msra.mxu0 0.0
    %1179 = vmatprep.subr.mxu0 0.0
    %1180 = vmatpush1.msra.mxu0 0.0
    %1181 = vmatprep.mubr.f32.mxu0 0.0
    %1182 = vmatmul.mubr.f32.gmra.mrb[0].mxu0 %v1112
    %v1183 = vpop.f32.mrb[0].mxu0
    %v1184 = vadd.f32 %v441, %v1183
    %v1185 = vpop.f32.mrb[0].mxu0
    %v1186 = vadd.f32 %v445, %v1185
    %1187 = vdwg.mxu0
    %1188 = vmatprep.subr.mxu0 0.0
    %1189 = vmatpush1.msra.mxu0 %v103
    %1190 = vmatprep.subr.mxu0 0.0
    %1191 = vmatpush1.msra.mxu0 %v106
    %1192 = vmatprep.subr.mxu0 0.0
    %1193 = vmatpush1.msra.mxu0 %v109
    %1194 = vmatprep.subr.mxu0 0.0
    %1195 = vmatpush1.msra.mxu0 %v112
    %1196 = vmatprep.subr.mxu0 0.0
    %1197 = vmatpush1.msra.mxu0 %v115
    %1198 = vmatprep.subr.mxu0 0.0
    %1199 = vmatpush1.msra.mxu0 %v118
    %1200 = vmatprep.subr.mxu0 0.0
    %1201 = vmatpush1.msra.mxu0 %v121
    %1202 = vmatprep.subr.mxu0 0.0
    %1203 = vmatpush1.msra.mxu0 %v124
    %1204 = vmatprep.subr.mxu0 0.0
    %1205 = vmatpush1.msra.mxu0 %v127
    %1206 = vmatprep.subr.mxu0 0.0
    %1207 = vmatpush1.msra.mxu0 %v130
    %1208 = vmatprep.subr.mxu0 0.0
    %1209 = vmatpush1.msra.mxu0 %v133
    %1210 = vmatprep.subr.mxu0 0.0
    %1211 = vmatpush1.msra.mxu0 %v136
    %1212 = vmatprep.subr.mxu0 0.0
    %1213 = vmatpush1.msra.mxu0 %v139
    %1214 = vmatprep.subr.mxu0 0.0
    %1215 = vmatpush1.msra.mxu0 %v142
    %1216 = vmatprep.subr.mxu0 0.0
    %1217 = vmatpush1.msra.mxu0 %v145
    %1218 = vmatprep.subr.mxu0 0.0
    %1219 = vmatpush1.msra.mxu0 %v148
    %1220 = vmatprep.subr.mxu0 0.0
    %1221 = vmatpush1.msra.mxu0 0.0
    %1222 = vmatprep.subr.mxu0 0.0
    %1223 = vmatpush1.msra.mxu0 0.0
    %1224 = vmatprep.subr.mxu0 0.0
    %1225 = vmatpush1.msra.mxu0 0.0
    %1226 = vmatprep.subr.mxu0 0.0
    %1227 = vmatpush1.msra.mxu0 0.0
    %1228 = vmatprep.subr.mxu0 0.0
    %1229 = vmatpush1.msra.mxu0 0.0
    %1230 = vmatprep.subr.mxu0 0.0
    %1231 = vmatpush1.msra.mxu0 0.0
    %1232 = vmatprep.subr.mxu0 0.0
    %1233 = vmatpush1.msra.mxu0 0.0
    %1234 = vmatprep.subr.mxu0 0.0
    %1235 = vmatpush1.msra.mxu0 0.0
    %1236 = vmatprep.subr.mxu0 0.0
    %1237 = vmatpush1.msra.mxu0 0.0
    %1238 = vmatprep.subr.mxu0 0.0
    %1239 = vmatpush1.msra.mxu0 0.0
    %1240 = vmatprep.subr.mxu0 0.0
    %1241 = vmatpush1.msra.mxu0 0.0
    %1242 = vmatprep.subr.mxu0 0.0
    %1243 = vmatpush1.msra.mxu0 0.0
    %1244 = vmatprep.subr.mxu0 0.0
    %1245 = vmatpush1.msra.mxu0 0.0
    %1246 = vmatprep.subr.mxu0 0.0
    %1247 = vmatpush1.msra.mxu0 0.0
    %1248 = vmatprep.subr.mxu0 0.0
    %1249 = vmatpush1.msra.mxu0 0.0
    %1250 = vmatprep.subr.mxu0 0.0
    %1251 = vmatpush1.msra.mxu0 0.0
    %1252 = vmatprep.mubr.f32.mxu0 0.0
    %1253 = vmatmul.mubr.f32.gmra.mrb[0].mxu0 %v1112
    %v1254 = vpop.f32.mrb[0].mxu0
    %v1255 = vadd.f32 %v449, %v1254
    %v1256 = vpop.f32.mrb[0].mxu0
    %1257 = vdwg.mxu0
    %v1258 = vadd.f32 %v1114, %v1184
    %v1259 = vxor.u32 %v1258, 2147483648
    %v1260 = vmul.f32 %v1259, 1.442695
    %v1261 = vpow.pop %v1260
    %v1262 = vadd.f32 %v1261, 1.0
    %v1263 = vrcp.pop %v1262
    %v1264 = vmul.f32 1.0, %v1263
    %v1265 = vadd.f32 %v1115, %v1186
    %v1266 = vxor.u32 %v1265, 2147483648
    %v1267 = vmul.f32 %v1266, 1.442695
    %v1268 = vpow.pop %v1267
    %v1269 = vadd.f32 %v1268, 1.0
    %v1270 = vrcp.pop %v1269
    %v1271 = vmul.f32 1.0, %v1270
    %v1272 = vmul.f32 %v1264, %v1255
    %v1273 = vadd.f32 %v1116, %v1272
    %v1274 = vtanh.pop %v1273
    %v1275 = vsub.f32 1.0, %v1271
    %v1276 = vmul.f32 %v1275, %v1274
    %v1277 = vmul.f32 %v1271, %v1112
    %v1278 = vadd.f32 %v1276, %v1277
    %1279 = vst [vmem:[#allocation3 + $0x20] sm:$0xff] %v1278
    %v1280 = vld [vmem:[#allocation2 + $0x78] sm:$0xff]
    %v1281 = vld [vmem:[#allocation2 + $0x80] sm:$0xff]
    %v1282 = vld [vmem:[#allocation2 + $0x88] sm:$0xff]
    %1283 = vmatprep.subr.mxu0 %v102
    %1284 = vmatpush1.msra.mxu0 %v101
    %1285 = vmatprep.subr.mxu0 %v105
    %1286 = vmatpush1.msra.mxu0 %v104
    %1287 = vmatprep.subr.mxu0 %v108
    %1288 = vmatpush1.msra.mxu0 %v107
    %1289 = vmatprep.subr.mxu0 %v111
    %1290 = vmatpush1.msra.mxu0 %v110
    %1291 = vmatprep.subr.mxu0 %v114
    %1292 = vmatpush1.msra.mxu0 %v113
    %1293 = vmatprep.subr.mxu0 %v117
    %1294 = vmatpush1.msra.mxu0 %v116
    %1295 = vmatprep.subr.mxu0 %v120
    %1296 = vmatpush1.msra.mxu0 %v119
    %1297 = vmatprep.subr.mxu0 %v123
    %1298 = vmatpush1.msra.mxu0 %v122
    %1299 = vmatprep.subr.mxu0 %v126
    %1300 = vmatpush1.msra.mxu0 %v125
    %1301 = vmatprep.subr.mxu0 %v129
    %1302 = vmatpush1.msra.mxu0 %v128
    %1303 = vmatprep.subr.mxu0 %v132
    %1304 = vmatpush1.msra.mxu0 %v131
    %1305 = vmatprep.subr.mxu0 %v135
    %1306 = vmatpush1.msra.mxu0 %v134
    %1307 = vmatprep.subr.mxu0 %v138
    %1308 = vmatpush1.msra.mxu0 %v137
    %1309 = vmatprep.subr.mxu0 %v141
    %1310 = vmatpush1.msra.mxu0 %v140
    %1311 = vmatprep.subr.mxu0 %v144
    %1312 = vmatpush1.msra.mxu0 %v143
    %1313 = vmatprep.subr.mxu0 %v147
    %1314 = vmatpush1.msra.mxu0 %v146
    %1315 = vmatprep.subr.mxu0 0.0
    %1316 = vmatpush1.msra.mxu0 0.0
    %1317 = vmatprep.subr.mxu0 0.0
    %1318 = vmatpush1.msra.mxu0 0.0
    %1319 = vmatprep.subr.mxu0 0.0
    %1320 = vmatpush1.msra.mxu0 0.0
    %1321 = vmatprep.subr.mxu0 0.0
    %1322 = vmatpush1.msra.mxu0 0.0
    %1323 = vmatprep.subr.mxu0 0.0
    %1324 = vmatpush1.msra.mxu0 0.0
    %1325 = vmatprep.subr.mxu0 0.0
    %1326 = vmatpush1.msra.mxu0 0.0
    %1327 = vmatprep.subr.mxu0 0.0
    %1328 = vmatpush1.msra.mxu0 0.0
    %1329 = vmatprep.subr.mxu0 0.0
    %1330 = vmatpush1.msra.mxu0 0.0
    %1331 = vmatprep.subr.mxu0 0.0
    %1332 = vmatpush1.msra.mxu0 0.0
    %1333 = vmatprep.subr.mxu0 0.0
    %1334 = vmatpush1.msra.mxu0 0.0
    %1335 = vmatprep.subr.mxu0 0.0
    %1336 = vmatpush1.msra.mxu0 0.0
    %1337 = vmatprep.subr.mxu0 0.0
    %1338 = vmatpush1.msra.mxu0 0.0
    %1339 = vmatprep.subr.mxu0 0.0
    %1340 = vmatpush1.msra.mxu0 0.0
    %1341 = vmatprep.subr.mxu0 0.0
    %1342 = vmatpush1.msra.mxu0 0.0
    %1343 = vmatprep.subr.mxu0 0.0
    %1344 = vmatpush1.msra.mxu0 0.0
    %1345 = vmatprep.subr.mxu0 0.0
    %1346 = vmatpush1.msra.mxu0 0.0
    %1347 = vmatprep.mubr.f32.mxu0 0.0
    %1348 = vmatmul.mubr.f32.gmra.mrb[0].mxu0 %v1278
    %v1349 = vpop.f32.mrb[0].mxu0
    %v1350 = vadd.f32 %v441, %v1349
    %v1351 = vpop.f32.mrb[0].mxu0
    %v1352 = vadd.f32 %v445, %v1351
    %1353 = vdwg.mxu0
    %1354 = vmatprep.subr.mxu0 0.0
    %1355 = vmatpush1.msra.mxu0 %v103
    %1356 = vmatprep.subr.mxu0 0.0
    %1357 = vmatpush1.msra.mxu0 %v106
    %1358 = vmatprep.subr.mxu0 0.0
    %1359 = vmatpush1.msra.mxu0 %v109
    %1360 = vmatprep.subr.mxu0 0.0
    %1361 = vmatpush1.msra.mxu0 %v112
    %1362 = vmatprep.subr.mxu0 0.0
    %1363 = vmatpush1.msra.mxu0 %v115
    %1364 = vmatprep.subr.mxu0 0.0
    %1365 = vmatpush1.msra.mxu0 %v118
    %1366 = vmatprep.subr.mxu0 0.0
    %1367 = vmatpush1.msra.mxu0 %v121
    %1368 = vmatprep.subr.mxu0 0.0
    %1369 = vmatpush1.msra.mxu0 %v124
    %1370 = vmatprep.subr.mxu0 0.0
    %1371 = vmatpush1.msra.mxu0 %v127
    %1372 = vmatprep.subr.mxu0 0.0
    %1373 = vmatpush1.msra.mxu0 %v130
    %1374 = vmatprep.subr.mxu0 0.0
    %1375 = vmatpush1.msra.mxu0 %v133
    %1376 = vmatprep.subr.mxu0 0.0
    %1377 = vmatpush1.msra.mxu0 %v136
    %1378 = vmatprep.subr.mxu0 0.0
    %1379 = vmatpush1.msra.mxu0 %v139
    %1380 = vmatprep.subr.mxu0 0.0
    %1381 = vmatpush1.msra.mxu0 %v142
    %1382 = vmatprep.subr.mxu0 0.0
    %1383 = vmatpush1.msra.mxu0 %v145
    %1384 = vmatprep.subr.mxu0 0.0
    %1385 = vmatpush1.msra.mxu0 %v148
    %1386 = vmatprep.subr.mxu0 0.0
    %1387 = vmatpush1.msra.mxu0 0.0
    %1388 = vmatprep.subr.mxu0 0.0
    %1389 = vmatpush1.msra.mxu0 0.0
    %1390 = vmatprep.subr.mxu0 0.0
    %1391 = vmatpush1.msra.mxu0 0.0
    %1392 = vmatprep.subr.mxu0 0.0
    %1393 = vmatpush1.msra.mxu0 0.0
    %1394 = vmatprep.subr.mxu0 0.0
    %1395 = vmatpush1.msra.mxu0 0.0
    %1396 = vmatprep.subr.mxu0 0.0
    %1397 = vmatpush1.msra.mxu0 0.0
    %1398 = vmatprep.subr.mxu0 0.0
    %1399 = vmatpush1.msra.mxu0 0.0
    %1400 = vmatprep.subr.mxu0 0.0
    %1401 = vmatpush1.msra.mxu0 0.0
    %1402 = vmatprep.subr.mxu0 0.0
    %1403 = vmatpush1.msra.mxu0 0.0
    %1404 = vmatprep.subr.mxu0 0.0
    %1405 = vmatpush1.msra.mxu0 0.0
    %1406 = vmatprep.subr.mxu0 0.0
    %1407 = vmatpush1.msra.mxu0 0.0
    %1408 = vmatprep.subr.mxu0 0.0
    %1409 = vmatpush1.msra.mxu0 0.0
    %1410 = vmatprep.subr.mxu0 0.0
    %1411 = vmatpush1.msra.mxu0 0.0
    %1412 = vmatprep.subr.mxu0 0.0
    %1413 = vmatpush1.msra.mxu0 0.0
    %1414 = vmatprep.subr.mxu0 0.0
    %1415 = vmatpush1.msra.mxu0 0.0
    %1416 = vmatprep.subr.mxu0 0.0
    %1417 = vmatpush1.msra.mxu0 0.0
    %1418 = vmatprep.mubr.f32.mxu0 0.0
    %1419 = vmatmul.mubr.f32.gmra.mrb[0].mxu0 %v1278
    %v1420 = vpop.f32.mrb[0].mxu0
    %v1421 = vadd.f32 %v449, %v1420
    %v1422 = vpop.f32.mrb[0].mxu0
    %1423 = vdwg.mxu0
    %v1424 = vadd.f32 %v1280, %v1350
    %v1425 = vxor.u32 %v1424, 2147483648
    %v1426 = vmul.f32 %v1425, 1.442695
    %v1427 = vpow.pop %v1426
    %v1428 = vadd.f32 %v1427, 1.0
    %v1429 = vrcp.pop %v1428
    %v1430 = vmul.f32 1.0, %v1429
    %v1431 = vadd.f32 %v1281, %v1352
    %v1432 = vxor.u32 %v1431, 2147483648
    %v1433 = vmul.f32 %v1432, 1.442695
    %v1434 = vpow.pop %v1433
    %v1435 = vadd.f32 %v1434, 1.0
    %v1436 = vrcp.pop %v1435
    %v1437 = vmul.f32 1.0, %v1436
    %v1438 = vmul.f32 %v1430, %v1421
    %v1439 = vadd.f32 %v1282, %v1438
    %v1440 = vtanh.pop %v1439
    %v1441 = vsub.f32 1.0, %v1437
    %v1442 = vmul.f32 %v1441, %v1440
    %v1443 = vmul.f32 %v1437, %v1278
    %v1444 = vadd.f32 %v1442, %v1443
    %1445 = vst [vmem:[#allocation3 + $0x28] sm:$0xff] %v1444
    %v1446 = vld [vmem:[#allocation2 + $0x90] sm:$0xff]
    %v1447 = vld [vmem:[#allocation2 + $0x98] sm:$0xff]
    %v1448 = vld [vmem:[#allocation2 + $0xa0] sm:$0xff]
    %1449 = vmatprep.subr.mxu0 %v102
    %1450 = vmatpush1.msra.mxu0 %v101
    %1451 = vmatprep.subr.mxu0 %v105
    %1452 = vmatpush1.msra.mxu0 %v104
    %1453 = vmatprep.subr.mxu0 %v108
    %1454 = vmatpush1.msra.mxu0 %v107
    %1455 = vmatprep.subr.mxu0 %v111
    %1456 = vmatpush1.msra.mxu0 %v110
    %1457 = vmatprep.subr.mxu0 %v114
    %1458 = vmatpush1.msra.mxu0 %v113
    %1459 = vmatprep.subr.mxu0 %v117
    %1460 = vmatpush1.msra.mxu0 %v116
    %1461 = vmatprep.subr.mxu0 %v120
    %1462 = vmatpush1.msra.mxu0 %v119
    %1463 = vmatprep.subr.mxu0 %v123
    %1464 = vmatpush1.msra.mxu0 %v122
    %1465 = vmatprep.subr.mxu0 %v126
    %1466 = vmatpush1.msra.mxu0 %v125
    %1467 = vmatprep.subr.mxu0 %v129
    %1468 = vmatpush1.msra.mxu0 %v128
    %1469 = vmatprep.subr.mxu0 %v132
    %1470 = vmatpush1.msra.mxu0 %v131
    %1471 = vmatprep.subr.mxu0 %v135
    %1472 = vmatpush1.msra.mxu0 %v134
    %1473 = vmatprep.subr.mxu0 %v138
    %1474 = vmatpush1.msra.mxu0 %v137
    %1475 = vmatprep.subr.mxu0 %v141
    %1476 = vmatpush1.msra.mxu0 %v140
    %1477 = vmatprep.subr.mxu0 %v144
    %1478 = vmatpush1.msra.mxu0 %v143
    %1479 = vmatprep.subr.mxu0 %v147
    %1480 = vmatpush1.msra.mxu0 %v146
    %1481 = vmatprep.subr.mxu0 0.0
    %1482 = vmatpush1.msra.mxu0 0.0
    %1483 = vmatprep.subr.mxu0 0.0
    %1484 = vmatpush1.msra.mxu0 0.0
    %1485 = vmatprep.subr.mxu0 0.0
    %1486 = vmatpush1.msra.mxu0 0.0
    %1487 = vmatprep.subr.mxu0 0.0
    %1488 = vmatpush1.msra.mxu0 0.0
    %1489 = vmatprep.subr.mxu0 0.0
    %1490 = vmatpush1.msra.mxu0 0.0
    %1491 = vmatprep.subr.mxu0 0.0
    %1492 = vmatpush1.msra.mxu0 0.0
    %1493 = vmatprep.subr.mxu0 0.0
    %1494 = vmatpush1.msra.mxu0 0.0
    %1495 = vmatprep.subr.mxu0 0.0
    %1496 = vmatpush1.msra.mxu0 0.0
    %1497 = vmatprep.subr.mxu0 0.0
    %1498 = vmatpush1.msra.mxu0 0.0
    %1499 = vmatprep.subr.mxu0 0.0
    %1500 = vmatpush1.msra.mxu0 0.0
    %1501 = vmatprep.subr.mxu0 0.0
    %1502 = vmatpush1.msra.mxu0 0.0
    %1503 = vmatprep.subr.mxu0 0.0
    %1504 = vmatpush1.msra.mxu0 0.0
    %1505 = vmatprep.subr.mxu0 0.0
    %1506 = vmatpush1.msra.mxu0 0.0
    %1507 = vmatprep.subr.mxu0 0.0
    %1508 = vmatpush1.msra.mxu0 0.0
    %1509 = vmatprep.subr.mxu0 0.0
    %1510 = vmatpush1.msra.mxu0 0.0
    %1511 = vmatprep.subr.mxu0 0.0
    %1512 = vmatpush1.msra.mxu0 0.0
    %1513 = vmatprep.mubr.f32.mxu0 0.0
    %1514 = vmatmul.mubr.f32.gmra.mrb[0].mxu0 %v1444
    %v1515 = vpop.f32.mrb[0].mxu0
    %v1516 = vadd.f32 %v441, %v1515
    %v1517 = vpop.f32.mrb[0].mxu0
    %v1518 = vadd.f32 %v445, %v1517
    %1519 = vdwg.mxu0
    %1520 = vmatprep.subr.mxu0 0.0
    %1521 = vmatpush1.msra.mxu0 %v103
    %1522 = vmatprep.subr.mxu0 0.0
    %1523 = vmatpush1.msra.mxu0 %v106
    %1524 = vmatprep.subr.mxu0 0.0
    %1525 = vmatpush1.msra.mxu0 %v109
    %1526 = vmatprep.subr.mxu0 0.0
    %1527 = vmatpush1.msra.mxu0 %v112
    %1528 = vmatprep.subr.mxu0 0.0
    %1529 = vmatpush1.msra.mxu0 %v115
    %1530 = vmatprep.subr.mxu0 0.0
    %1531 = vmatpush1.msra.mxu0 %v118
    %1532 = vmatprep.subr.mxu0 0.0
    %1533 = vmatpush1.msra.mxu0 %v121
    %1534 = vmatprep.subr.mxu0 0.0
    %1535 = vmatpush1.msra.mxu0 %v124
    %1536 = vmatprep.subr.mxu0 0.0
    %1537 = vmatpush1.msra.mxu0 %v127
    %1538 = vmatprep.subr.mxu0 0.0
    %1539 = vmatpush1.msra.mxu0 %v130
    %1540 = vmatprep.subr.mxu0 0.0
    %1541 = vmatpush1.msra.mxu0 %v133
    %1542 = vmatprep.subr.mxu0 0.0
    %1543 = vmatpush1.msra.mxu0 %v136
    %1544 = vmatprep.subr.mxu0 0.0
    %1545 = vmatpush1.msra.mxu0 %v139
    %1546 = vmatprep.subr.mxu0 0.0
    %1547 = vmatpush1.msra.mxu0 %v142
    %1548 = vmatprep.subr.mxu0 0.0
    %1549 = vmatpush1.msra.mxu0 %v145
    %1550 = vmatprep.subr.mxu0 0.0
    %1551 = vmatpush1.msra.mxu0 %v148
    %1552 = vmatprep.subr.mxu0 0.0
    %1553 = vmatpush1.msra.mxu0 0.0
    %1554 = vmatprep.subr.mxu0 0.0
    %1555 = vmatpush1.msra.mxu0 0.0
    %1556 = vmatprep.subr.mxu0 0.0
    %1557 = vmatpush1.msra.mxu0 0.0
    %1558 = vmatprep.subr.mxu0 0.0
    %1559 = vmatpush1.msra.mxu0 0.0
    %1560 = vmatprep.subr.mxu0 0.0
    %1561 = vmatpush1.msra.mxu0 0.0
    %1562 = vmatprep.subr.mxu0 0.0
    %1563 = vmatpush1.msra.mxu0 0.0
    %1564 = vmatprep.subr.mxu0 0.0
    %1565 = vmatpush1.msra.mxu0 0.0
    %1566 = vmatprep.subr.mxu0 0.0
    %1567 = vmatpush1.msra.mxu0 0.0
    %1568 = vmatprep.subr.mxu0 0.0
    %1569 = vmatpush1.msra.mxu0 0.0
    %1570 = vmatprep.subr.mxu0 0.0
    %1571 = vmatpush1.msra.mxu0 0.0
    %1572 = vmatprep.subr.mxu0 0.0
    %1573 = vmatpush1.msra.mxu0 0.0
    %1574 = vmatprep.subr.mxu0 0.0
    %1575 = vmatpush1.msra.mxu0 0.0
    %1576 = vmatprep.subr.mxu0 0.0
    %1577 = vmatpush1.msra.mxu0 0.0
    %1578 = vmatprep.subr.mxu0 0.0
    %1579 = vmatpush1.msra.mxu0 0.0
    %1580 = vmatprep.subr.mxu0 0.0
    %1581 = vmatpush1.msra.mxu0 0.0
    %1582 = vmatprep.subr.mxu0 0.0
    %1583 = vmatpush1.msra.mxu0 0.0
    %1584 = vmatprep.mubr.f32.mxu0 0.0
    %1585 = vmatmul.mubr.f32.gmra.mrb[0].mxu0 %v1444
    %v1586 = vpop.f32.mrb[0].mxu0
    %v1587 = vadd.f32 %v449, %v1586
    %v1588 = vpop.f32.mrb[0].mxu0
    %1589 = vdwg.mxu0
    %v1590 = vadd.f32 %v1446, %v1516
    %v1591 = vxor.u32 %v1590, 2147483648
    %v1592 = vmul.f32 %v1591, 1.442695
    %v1593 = vpow.pop %v1592
    %v1594 = vadd.f32 %v1593, 1.0
    %v1595 = vrcp.pop %v1594
    %v1596 = vmul.f32 1.0, %v1595
    %v1597 = vadd.f32 %v1447, %v1518
    %v1598 = vxor.u32 %v1597, 2147483648
    %v1599 = vmul.f32 %v1598, 1.442695
    %v1600 = vpow.pop %v1599
    %v1601 = vadd.f32 %v1600, 1.0
    %v1602 = vrcp.pop %v1601
    %v1603 = vmul.f32 1.0, %v1602
    %v1604 = vmul.f32 %v1596, %v1587
    %v1605 = vadd.f32 %v1448, %v1604
    %v1606 = vtanh.pop %v1605
    %v1607 = vsub.f32 1.0, %v1603
    %v1608 = vmul.f32 %v1607, %v1606
    %v1609 = vmul.f32 %v1603, %v1444
    %v1610 = vadd.f32 %v1608, %v1609
    %1611 = vst [vmem:[#allocation3 + $0x30] sm:$0xff] %v1610
    %v1612 = vld [vmem:[#allocation2 + $0xa8] sm:$0xff]
    %v1613 = vld [vmem:[#allocation2 + $0xb0] sm:$0xff]
    %v1614 = vld [vmem:[#allocation2 + $0xb8] sm:$0xff]
    %1615 = vmatprep.subr.mxu0 %v102
    %1616 = vmatpush1.msra.mxu0 %v101
    %1617 = vmatprep.subr.mxu0 %v105
    %1618 = vmatpush1.msra.mxu0 %v104
    %1619 = vmatprep.subr.mxu0 %v108
    %1620 = vmatpush1.msra.mxu0 %v107
    %1621 = vmatprep.subr.mxu0 %v111
    %1622 = vmatpush1.msra.mxu0 %v110
    %1623 = vmatprep.subr.mxu0 %v114
    %1624 = vmatpush1.msra.mxu0 %v113
    %1625 = vmatprep.subr.mxu0 %v117
    %1626 = vmatpush1.msra.mxu0 %v116
    %1627 = vmatprep.subr.mxu0 %v120
    %1628 = vmatpush1.msra.mxu0 %v119
    %1629 = vmatprep.subr.mxu0 %v123
    %1630 = vmatpush1.msra.mxu0 %v122
    %1631 = vmatprep.subr.mxu0 %v126
    %1632 = vmatpush1.msra.mxu0 %v125
    %1633 = vmatprep.subr.mxu0 %v129
    %1634 = vmatpush1.msra.mxu0 %v128
    %1635 = vmatprep.subr.mxu0 %v132
    %1636 = vmatpush1.msra.mxu0 %v131
    %1637 = vmatprep.subr.mxu0 %v135
    %1638 = vmatpush1.msra.mxu0 %v134
    %1639 = vmatprep.subr.mxu0 %v138
    %1640 = vmatpush1.msra.mxu0 %v137
    %1641 = vmatprep.subr.mxu0 %v141
    %1642 = vmatpush1.msra.mxu0 %v140
    %1643 = vmatprep.subr.mxu0 %v144
    %1644 = vmatpush1.msra.mxu0 %v143
    %1645 = vmatprep.subr.mxu0 %v147
    %1646 = vmatpush1.msra.mxu0 %v146
    %1647 = vmatprep.subr.mxu0 0.0
    %1648 = vmatpush1.msra.mxu0 0.0
    %1649 = vmatprep.subr.mxu0 0.0
    %1650 = vmatpush1.msra.mxu0 0.0
    %1651 = vmatprep.subr.mxu0 0.0
    %1652 = vmatpush1.msra.mxu0 0.0
    %1653 = vmatprep.subr.mxu0 0.0
    %1654 = vmatpush1.msra.mxu0 0.0
    %1655 = vmatprep.subr.mxu0 0.0
    %1656 = vmatpush1.msra.mxu0 0.0
    %1657 = vmatprep.subr.mxu0 0.0
    %1658 = vmatpush1.msra.mxu0 0.0
    %1659 = vmatprep.subr.mxu0 0.0
    %1660 = vmatpush1.msra.mxu0 0.0
    %1661 = vmatprep.subr.mxu0 0.0
    %1662 = vmatpush1.msra.mxu0 0.0
    %1663 = vmatprep.subr.mxu0 0.0
    %1664 = vmatpush1.msra.mxu0 0.0
    %1665 = vmatprep.subr.mxu0 0.0
    %1666 = vmatpush1.msra.mxu0 0.0
    %1667 = vmatprep.subr.mxu0 0.0
    %1668 = vmatpush1.msra.mxu0 0.0
    %1669 = vmatprep.subr.mxu0 0.0
    %1670 = vmatpush1.msra.mxu0 0.0
    %1671 = vmatprep.subr.mxu0 0.0
    %1672 = vmatpush1.msra.mxu0 0.0
    %1673 = vmatprep.subr.mxu0 0.0
    %1674 = vmatpush1.msra.mxu0 0.0
    %1675 = vmatprep.subr.mxu0 0.0
    %1676 = vmatpush1.msra.mxu0 0.0
    %1677 = vmatprep.subr.mxu0 0.0
    %1678 = vmatpush1.msra.mxu0 0.0
    %1679 = vmatprep.mubr.f32.mxu0 0.0
    %1680 = vmatmul.mubr.f32.gmra.mrb[0].mxu0 %v1610
    %v1681 = vpop.f32.mrb[0].mxu0
    %v1682 = vadd.f32 %v441, %v1681
    %v1683 = vpop.f32.mrb[0].mxu0
    %v1684 = vadd.f32 %v445, %v1683
    %1685 = vdwg.mxu0
    %1686 = vmatprep.subr.mxu0 0.0
    %1687 = vmatpush1.msra.mxu0 %v103
    %1688 = vmatprep.subr.mxu0 0.0
    %1689 = vmatpush1.msra.mxu0 %v106
    %1690 = vmatprep.subr.mxu0 0.0
    %1691 = vmatpush1.msra.mxu0 %v109
    %1692 = vmatprep.subr.mxu0 0.0
    %1693 = vmatpush1.msra.mxu0 %v112
    %1694 = vmatprep.subr.mxu0 0.0
    %1695 = vmatpush1.msra.mxu0 %v115
    %1696 = vmatprep.subr.mxu0 0.0
    %1697 = vmatpush1.msra.mxu0 %v118
    %1698 = vmatprep.subr.mxu0 0.0
    %1699 = vmatpush1.msra.mxu0 %v121
    %1700 = vmatprep.subr.mxu0 0.0
    %1701 = vmatpush1.msra.mxu0 %v124
    %1702 = vmatprep.subr.mxu0 0.0
    %1703 = vmatpush1.msra.mxu0 %v127
    %1704 = vmatprep.subr.mxu0 0.0
    %1705 = vmatpush1.msra.mxu0 %v130
    %1706 = vmatprep.subr.mxu0 0.0
    %1707 = vmatpush1.msra.mxu0 %v133
    %1708 = vmatprep.subr.mxu0 0.0
    %1709 = vmatpush1.msra.mxu0 %v136
    %1710 = vmatprep.subr.mxu0 0.0
    %1711 = vmatpush1.msra.mxu0 %v139
    %1712 = vmatprep.subr.mxu0 0.0
    %1713 = vmatpush1.msra.mxu0 %v142
    %1714 = vmatprep.subr.mxu0 0.0
    %1715 = vmatpush1.msra.mxu0 %v145
    %1716 = vmatprep.subr.mxu0 0.0
    %1717 = vmatpush1.msra.mxu0 %v148
    %1718 = vmatprep.subr.mxu0 0.0
    %1719 = vmatpush1.msra.mxu0 0.0
    %1720 = vmatprep.subr.mxu0 0.0
    %1721 = vmatpush1.msra.mxu0 0.0
    %1722 = vmatprep.subr.mxu0 0.0
    %1723 = vmatpush1.msra.mxu0 0.0
    %1724 = vmatprep.subr.mxu0 0.0
    %1725 = vmatpush1.msra.mxu0 0.0
    %1726 = vmatprep.subr.mxu0 0.0
    %1727 = vmatpush1.msra.mxu0 0.0
    %1728 = vmatprep.subr.mxu0 0.0
    %1729 = vmatpush1.msra.mxu0 0.0
    %1730 = vmatprep.subr.mxu0 0.0
    %1731 = vmatpush1.msra.mxu0 0.0
    %1732 = vmatprep.subr.mxu0 0.0
    %1733 = vmatpush1.msra.mxu0 0.0
    %1734 = vmatprep.subr.mxu0 0.0
    %1735 = vmatpush1.msra.mxu0 0.0
    %1736 = vmatprep.subr.mxu0 0.0
    %1737 = vmatpush1.msra.mxu0 0.0
    %1738 = vmatprep.subr.mxu0 0.0
    %1739 = vmatpush1.msra.mxu0 0.0
    %1740 = vmatprep.subr.mxu0 0.0
    %1741 = vmatpush1.msra.mxu0 0.0
    %1742 = vmatprep.subr.mxu0 0.0
    %1743 = vmatpush1.msra.mxu0 0.0
    %1744 = vmatprep.subr.mxu0 0.0
    %1745 = vmatpush1.msra.mxu0 0.0
    %1746 = vmatprep.subr.mxu0 0.0
    %1747 = vmatpush1.msra.mxu0 0.0
    %1748 = vmatprep.subr.mxu0 0.0
    %1749 = vmatpush1.msra.mxu0 0.0
    %1750 = vmatprep.mubr.f32.mxu0 0.0
    %1751 = vmatmul.mubr.f32.gmra.mrb[0].mxu0 %v1610
    %v1752 = vpop.f32.mrb[0].mxu0
    %v1753 = vadd.f32 %v449, %v1752
    %v1754 = vpop.f32.mrb[0].mxu0
    %1755 = vdwg.mxu0
    %v1756 = vadd.f32 %v1612, %v1682
    %v1757 = vxor.u32 %v1756, 2147483648
    %v1758 = vmul.f32 %v1757, 1.442695
    %v1759 = vpow.pop %v1758
    %v1760 = vadd.f32 %v1759, 1.0
    %v1761 = vrcp.pop %v1760
    %v1762 = vmul.f32 1.0, %v1761
    %v1763 = vadd.f32 %v1613, %v1684
    %v1764 = vxor.u32 %v1763, 2147483648
    %v1765 = vmul.f32 %v1764, 1.442695
    %v1766 = vpow.pop %v1765
    %v1767 = vadd.f32 %v1766, 1.0
    %v1768 = vrcp.pop %v1767
    %v1769 = vmul.f32 1.0, %v1768
    %v1770 = vmul.f32 %v1762, %v1753
    %v1771 = vadd.f32 %v1614, %v1770
    %v1772 = vtanh.pop %v1771
    %v1773 = vsub.f32 1.0, %v1769
    %v1774 = vmul.f32 %v1773, %v1772
    %v1775 = vmul.f32 %v1769, %v1610
    %v1776 = vadd.f32 %v1774, %v1775
    %1777 = vst [vmem:[#allocation3 + $0x38] sm:$0xff] %v1776
    %v1778 = vld [vmem:[#allocation3] sm:$0xff]
    %v1779 = vld [vmem:[#allocation3 + $0x8] sm:$0xff]
    %v1780 = vld [vmem:[#allocation3 + $0x10] sm:$0xff]
    %v1781 = vld [vmem:[#allocation3 + $0x18] sm:$0xff]
    %v1782 = vld [vmem:[#allocation3 + $0x20] sm:$0xff]
    %v1783 = vld [vmem:[#allocation3 + $0x28] sm:$0xff]
    %v1784 = vld [vmem:[#allocation3 + $0x30] sm:$0xff]
    %v1785 = vld [vmem:[#allocation3 + $0x38] sm:$0xff]
    %v1786 = vld [vmem:[#allocation7] sm:$0xff]
    %v1787 = vld [vmem:[#allocation7 + $0x8] sm:$0xff]
    %v1788 = vld [vmem:[#allocation7 + $0x10] sm:$0xff]
    %v1789 = vld [vmem:[#allocation7 + $0x18] sm:$0xff]
    %v1790 = vld [vmem:[#allocation7 + $0x20] sm:$0xff]
    %v1791 = vld [vmem:[#allocation7 + $0x28] sm:$0xff]
    %v1792 = vld [vmem:[#allocation7 + $0x30] sm:$0xff]
    %v1793 = vld [vmem:[#allocation7 + $0x38] sm:$0xff]
    %v1794 = vld [vmem:[#allocation7 + $0x40] sm:$0xff]
    %v1795 = vld [vmem:[#allocation7 + $0x48] sm:$0xff]
    %v1796 = vld [vmem:[#allocation7 + $0x50] sm:$0xff]
    %v1797 = vld [vmem:[#allocation7 + $0x58] sm:$0xff]
    %v1798 = vld [vmem:[#allocation7 + $0x60] sm:$0xff]
    %v1799 = vld [vmem:[#allocation7 + $0x68] sm:$0xff]
    %v1800 = vld [vmem:[#allocation7 + $0x70] sm:$0xff]
    %v1801 = vld [vmem:[#allocation7 + $0x78] sm:$0xff]
    %v1802 = vld [vmem:[#allocation7 + $0x80] sm:$0xff]
    %v1803 = vld [vmem:[#allocation7 + $0x88] sm:$0xff]
    %v1804 = vld [vmem:[#allocation7 + $0x90] sm:$0xff]
    %v1805 = vld [vmem:[#allocation7 + $0x98] sm:$0xff]
    %v1806 = vld [vmem:[#allocation7 + $0xa0] sm:$0xff]
    %v1807 = vld [vmem:[#allocation7 + $0xa8] sm:$0xff]
    %v1808 = vld [vmem:[#allocation7 + $0xb0] sm:$0xff]
    %v1809 = vld [vmem:[#allocation7 + $0xb8] sm:$0xff]
    %v1810 = vld [vmem:[#allocation7 + $0xc0] sm:$0xff]
    %v1811 = vld [vmem:[#allocation7 + $0xc8] sm:$0xff]
    %v1812 = vld [vmem:[#allocation7 + $0xd0] sm:$0xff]
    %v1813 = vld [vmem:[#allocation7 + $0xd8] sm:$0xff]
    %v1814 = vld [vmem:[#allocation7 + $0xe0] sm:$0xff]
    %v1815 = vld [vmem:[#allocation7 + $0xe8] sm:$0xff]
    %v1816 = vld [vmem:[#allocation7 + $0xf0] sm:$0xff]
    %v1817 = vld [vmem:[#allocation7 + $0xf8] sm:$0xff]
    %v1818 = vld [vmem:[#allocation7 + $0x100] sm:$0xff]
    %v1819 = vld [vmem:[#allocation7 + $0x108] sm:$0xff]
    %v1820 = vld [vmem:[#allocation7 + $0x110] sm:$0xff]
    %v1821 = vld [vmem:[#allocation7 + $0x118] sm:$0xff]
    %v1822 = vld [vmem:[#allocation7 + $0x120] sm:$0xff]
    %v1823 = vld [vmem:[#allocation7 + $0x128] sm:$0xff]
    %v1824 = vld [vmem:[#allocation7 + $0x130] sm:$0xff]
    %v1825 = vld [vmem:[#allocation7 + $0x138] sm:$0xff]
    %v1826 = vld [vmem:[#allocation7 + $0x140] sm:$0xff]
    %v1827 = vld [vmem:[#allocation7 + $0x148] sm:$0xff]
    %v1828 = vld [vmem:[#allocation7 + $0x150] sm:$0xff]
    %v1829 = vld [vmem:[#allocation7 + $0x158] sm:$0xff]
    %v1830 = vld [vmem:[#allocation7 + $0x160] sm:$0xff]
    %v1831 = vld [vmem:[#allocation7 + $0x168] sm:$0xff]
    %v1832 = vld [vmem:[#allocation7 + $0x170] sm:$0xff]
    %v1833 = vld [vmem:[#allocation7 + $0x178] sm:$0xff]
    %v1834 = vld [vmem:[#allocation9] sm:$0xff]
    %v1835 = vld [vmem:[#allocation9 + $0x8] sm:$0xff]
    %v1836 = vld [vmem:[#allocation9 + $0x10] sm:$0xff]
    %v1837 = vld [vmem:[#allocation9 + $0x18] sm:$0xff]
    %v1838 = vld [vmem:[#allocation9 + $0x20] sm:$0xff]
    %v1839 = vld [vmem:[#allocation9 + $0x28] sm:$0xff]
    %v1840 = vld [vmem:[#allocation9 + $0x30] sm:$0xff]
    %v1841 = vld [vmem:[#allocation9 + $0x38] sm:$0xff]
    %v1842 = vld [vmem:[#allocation9 + $0x40] sm:$0xff]
    %v1843 = vld [vmem:[#allocation9 + $0x48] sm:$0xff]
    %v1844 = vld [vmem:[#allocation9 + $0x50] sm:$0xff]
    %v1845 = vld [vmem:[#allocation9 + $0x58] sm:$0xff]
    %v1846 = vld [vmem:[#allocation9 + $0x60] sm:$0xff]
    %v1847 = vld [vmem:[#allocation9 + $0x68] sm:$0xff]
    %v1848 = vld [vmem:[#allocation9 + $0x70] sm:$0xff]
    %v1849 = vld [vmem:[#allocation9 + $0x78] sm:$0xff]
    %v1850 = vld [vmem:[#allocation9 + $0x80] sm:$0xff]
    %v1851 = vld [vmem:[#allocation9 + $0x88] sm:$0xff]
    %v1852 = vld [vmem:[#allocation9 + $0x90] sm:$0xff]
    %v1853 = vld [vmem:[#allocation9 + $0x98] sm:$0xff]
    %v1854 = vld [vmem:[#allocation9 + $0xa0] sm:$0xff]
    %v1855 = vld [vmem:[#allocation9 + $0xa8] sm:$0xff]
    %v1856 = vld [vmem:[#allocation9 + $0xb0] sm:$0xff]
    %v1857 = vld [vmem:[#allocation9 + $0xb8] sm:$0xff]
    %v1858 = vld [vmem:[#allocation9 + $0xc0] sm:$0xff]
    %v1859 = vld [vmem:[#allocation9 + $0xc8] sm:$0xff]
    %v1860 = vld [vmem:[#allocation9 + $0xd0] sm:$0xff]
    %v1861 = vld [vmem:[#allocation9 + $0xd8] sm:$0xff]
    %v1862 = vld [vmem:[#allocation9 + $0xe0] sm:$0xff]
    %v1863 = vld [vmem:[#allocation9 + $0xe8] sm:$0xff]
    %v1864 = vld [vmem:[#allocation9 + $0xf0] sm:$0xff]
    %v1865 = vld [vmem:[#allocation9 + $0xf8] sm:$0xff]
    %v1866 = vld [vmem:[#allocation9 + $0x100] sm:$0xff]
    %v1867 = vld [vmem:[#allocation9 + $0x108] sm:$0xff]
    %v1868 = vld [vmem:[#allocation9 + $0x110] sm:$0xff]
    %v1869 = vld [vmem:[#allocation9 + $0x118] sm:$0xff]
    %v1870 = vld [vmem:[#allocation9 + $0x120] sm:$0xff]
    %v1871 = vld [vmem:[#allocation9 + $0x128] sm:$0xff]
    %v1872 = vld [vmem:[#allocation9 + $0x130] sm:$0xff]
    %v1873 = vld [vmem:[#allocation9 + $0x138] sm:$0xff]
    %v1874 = vld [vmem:[#allocation9 + $0x140] sm:$0xff]
    %v1875 = vld [vmem:[#allocation9 + $0x148] sm:$0xff]
    %v1876 = vld [vmem:[#allocation9 + $0x150] sm:$0xff]
    %v1877 = vld [vmem:[#allocation9 + $0x158] sm:$0xff]
    %v1878 = vld [vmem:[#allocation9 + $0x160] sm:$0xff]
    %v1879 = vld [vmem:[#allocation9 + $0x168] sm:$0xff]
    %v1880 = vld [vmem:[#allocation9 + $0x170] sm:$0xff]
    %v1881 = vld [vmem:[#allocation9 + $0x178] sm:$0xff]
    %v1882 = vld [vmem:[%s7] sm:$0x7]
    %v1883 = vld [vmem:[%s8] sm:$0x7]
    %v1885 = vlaneseq
    %v1886 = vshrl.u32 %v1885, 7
    %v1887 = vsub.s32 0, %v1886
    %v1888 = vrot.slane %v1882, %v1887
    %v1889 = vlaneseq
    %v1890 = vshrl.u32 %v1889, 7
    %v1891 = vsub.s32 1, %v1890
    %v1892 = vrot.slane %v1882, %v1891
    %v1893 = vlaneseq
    %v1894 = vshrl.u32 %v1893, 7
    %v1895 = vsub.s32 2, %v1894
    %v1896 = vrot.slane %v1882, %v1895
    %1900 = vmatprep.subr.mxu0 %v1787
    %1901 = vmatpush1.msra.mxu0 %v1786
    %1902 = vmatprep.subr.mxu0 %v1790
    %1903 = vmatpush1.msra.mxu0 %v1789
    %1904 = vmatprep.subr.mxu0 %v1793
    %1905 = vmatpush1.msra.mxu0 %v1792
    %1906 = vmatprep.subr.mxu0 %v1796
    %1907 = vmatpush1.msra.mxu0 %v1795
    %1908 = vmatprep.subr.mxu0 %v1799
    %1909 = vmatpush1.msra.mxu0 %v1798
    %1910 = vmatprep.subr.mxu0 %v1802
    %1911 = vmatpush1.msra.mxu0 %v1801
    %1912 = vmatprep.subr.mxu0 %v1805
    %1913 = vmatpush1.msra.mxu0 %v1804
    %1914 = vmatprep.subr.mxu0 %v1808
    %1915 = vmatpush1.msra.mxu0 %v1807
    %1916 = vmatprep.subr.mxu0 %v1811
    %1917 = vmatpush1.msra.mxu0 %v1810
    %1918 = vmatprep.subr.mxu0 %v1814
    %1919 = vmatpush1.msra.mxu0 %v1813
    %1920 = vmatprep.subr.mxu0 %v1817
    %1921 = vmatpush1.msra.mxu0 %v1816
    %1922 = vmatprep.subr.mxu0 %v1820
    %1923 = vmatpush1.msra.mxu0 %v1819
    %1924 = vmatprep.subr.mxu0 %v1823
    %1925 = vmatpush1.msra.mxu0 %v1822
    %1926 = vmatprep.subr.mxu0 %v1826
    %1927 = vmatpush1.msra.mxu0 %v1825
    %1928 = vmatprep.subr.mxu0 %v1829
    %1929 = vmatpush1.msra.mxu0 %v1828
    %1930 = vmatprep.subr.mxu0 %v1832
    %1931 = vmatpush1.msra.mxu0 %v1831
    %1932 = vmatprep.subr.mxu0 0.0
    %1933 = vmatpush1.msra.mxu0 0.0
    %1934 = vmatprep.subr.mxu0 0.0
    %1935 = vmatpush1.msra.mxu0 0.0
    %1936 = vmatprep.subr.mxu0 0.0
    %1937 = vmatpush1.msra.mxu0 0.0
    %1938 = vmatprep.subr.mxu0 0.0
    %1939 = vmatpush1.msra.mxu0 0.0
    %1940 = vmatprep.subr.mxu0 0.0
    %1941 = vmatpush1.msra.mxu0 0.0
    %1942 = vmatprep.subr.mxu0 0.0
    %1943 = vmatpush1.msra.mxu0 0.0
    %1944 = vmatprep.subr.mxu0 0.0
    %1945 = vmatpush1.msra.mxu0 0.0
    %1946 = vmatprep.subr.mxu0 0.0
    %1947 = vmatpush1.msra.mxu0 0.0
    %1948 = vmatprep.subr.mxu0 0.0
    %1949 = vmatpush1.msra.mxu0 0.0
    %1950 = vmatprep.subr.mxu0 0.0
    %1951 = vmatpush1.msra.mxu0 0.0
    %1952 = vmatprep.subr.mxu0 0.0
    %1953 = vmatpush1.msra.mxu0 0.0
    %1954 = vmatprep.subr.mxu0 0.0
    %1955 = vmatpush1.msra.mxu0 0.0
    %1956 = vmatprep.subr.mxu0 0.0
    %1957 = vmatpush1.msra.mxu0 0.0
    %1958 = vmatprep.subr.mxu0 0.0
    %1959 = vmatpush1.msra.mxu0 0.0
    %1960 = vmatprep.subr.mxu0 0.0
    %1961 = vmatpush1.msra.mxu0 0.0
    %1962 = vmatprep.subr.mxu0 0.0
    %1963 = vmatpush1.msra.mxu0 0.0
    %1964 = vmatprep.mubr.f32.mxu0 0.0
    %1965 = vmatmul.mubr.f32.gmra.mrb[0].mxu0 %v1778
    %v1966 = vpop.f32.mrb[0].mxu0
    %v1967 = vadd.f32 %v1888, %v1966
    %v1968 = vpop.f32.mrb[0].mxu0
    %v1969 = vadd.f32 %v1892, %v1968
    %1970 = vmatprep.mubr.f32.mxu0 0.0
    %1971 = vmatmul.mubr.f32.gmra.mrb[0].mxu0 %v1779
    %v1972 = vpop.f32.mrb[0].mxu0
    %v1973 = vadd.f32 %v1888, %v1972
    %v1974 = vpop.f32.mrb[0].mxu0
    %v1975 = vadd.f32 %v1892, %v1974
    %1976 = vmatprep.mubr.f32.mxu0 0.0
    %1977 = vmatmul.mubr.f32.gmra.mrb[0].mxu0 %v1780
    %v1978 = vpop.f32.mrb[0].mxu0
    %v1979 = vadd.f32 %v1888, %v1978
    %v1980 = vpop.f32.mrb[0].mxu0
    %v1981 = vadd.f32 %v1892, %v1980
    %1982 = vmatprep.mubr.f32.mxu0 0.0
    %1983 = vmatmul.mubr.f32.gmra.mrb[0].mxu0 %v1781
    %v1984 = vpop.f32.mrb[0].mxu0
    %v1985 = vadd.f32 %v1888, %v1984
    %v1986 = vpop.f32.mrb[0].mxu0
    %v1987 = vadd.f32 %v1892, %v1986
    %1988 = vmatprep.mubr.f32.mxu0 0.0
    %1989 = vmatmul.mubr.f32.gmra.mrb[0].mxu0 %v1782
    %v1990 = vpop.f32.mrb[0].mxu0
    %v1991 = vadd.f32 %v1888, %v1990
    %v1992 = vpop.f32.mrb[0].mxu0
    %v1993 = vadd.f32 %v1892, %v1992
    %1994 = vmatprep.mubr.f32.mxu0 0.0
    %1995 = vmatmul.mubr.f32.gmra.mrb[0].mxu0 %v1783
    %v1996 = vpop.f32.mrb[0].mxu0
    %v1997 = vadd.f32 %v1888, %v1996
    %v1998 = vpop.f32.mrb[0].mxu0
    %v1999 = vadd.f32 %v1892, %v1998
    %2000 = vmatprep.mubr.f32.mxu0 0.0
    %2001 = vmatmul.mubr.f32.gmra.mrb[0].mxu0 %v1784
    %v2002 = vpop.f32.mrb[0].mxu0
    %v2003 = vadd.f32 %v1888, %v2002
    %v2004 = vpop.f32.mrb[0].mxu0
    %v2005 = vadd.f32 %v1892, %v2004
    %2006 = vmatprep.mubr.f32.mxu0 0.0
    %2007 = vmatmul.mubr.f32.gmra.mrb[0].mxu0 %v1785
    %v2008 = vpop.f32.mrb[0].mxu0
    %v2009 = vadd.f32 %v1888, %v2008
    %v2010 = vpop.f32.mrb[0].mxu0
    %v2011 = vadd.f32 %v1892, %v2010
    %2012 = vdwg.mxu0
    %2013 = vmatprep.subr.mxu0 0.0
    %2014 = vmatpush1.msra.mxu0 %v1788
    %2015 = vmatprep.subr.mxu0 0.0
    %2016 = vmatpush1.msra.mxu0 %v1791
    %2017 = vmatprep.subr.mxu0 0.0
    %2018 = vmatpush1.msra.mxu0 %v1794
    %2019 = vmatprep.subr.mxu0 0.0
    %2020 = vmatpush1.msra.mxu0 %v1797
    %2021 = vmatprep.subr.mxu0 0.0
    %2022 = vmatpush1.msra.mxu0 %v1800
    %2023 = vmatprep.subr.mxu0 0.0
    %2024 = vmatpush1.msra.mxu0 %v1803
    %2025 = vmatprep.subr.mxu0 0.0
    %2026 = vmatpush1.msra.mxu0 %v1806
    %2027 = vmatprep.subr.mxu0 0.0
    %2028 = vmatpush1.msra.mxu0 %v1809
    %2029 = vmatprep.subr.mxu0 0.0
    %2030 = vmatpush1.msra.mxu0 %v1812
    %2031 = vmatprep.subr.mxu0 0.0
    %2032 = vmatpush1.msra.mxu0 %v1815
    %2033 = vmatprep.subr.mxu0 0.0
    %2034 = vmatpush1.msra.mxu0 %v1818
    %2035 = vmatprep.subr.mxu0 0.0
    %2036 = vmatpush1.msra.mxu0 %v1821
    %2037 = vmatprep.subr.mxu0 0.0
    %2038 = vmatpush1.msra.mxu0 %v1824
    %2039 = vmatprep.subr.mxu0 0.0
    %2040 = vmatpush1.msra.mxu0 %v1827
    %2041 = vmatprep.subr.mxu0 0.0
    %2042 = vmatpush1.msra.mxu0 %v1830
    %2043 = vmatprep.subr.mxu0 0.0
    %2044 = vmatpush1.msra.mxu0 %v1833
    %2045 = vmatprep.subr.mxu0 0.0
    %2046 = vmatpush1.msra.mxu0 0.0
    %2047 = vmatprep.subr.mxu0 0.0
    %2048 = vmatpush1.msra.mxu0 0.0
    %2049 = vmatprep.subr.mxu0 0.0
    %2050 = vmatpush1.msra.mxu0 0.0
    %2051 = vmatprep.subr.mxu0 0.0
    %2052 = vmatpush1.msra.mxu0 0.0
    %2053 = vmatprep.subr.mxu0 0.0
    %2054 = vmatpush1.msra.mxu0 0.0
    %2055 = vmatprep.subr.mxu0 0.0
    %2056 = vmatpush1.msra.mxu0 0.0
    %2057 = vmatprep.subr.mxu0 0.0
    %2058 = vmatpush1.msra.mxu0 0.0
    %2059 = vmatprep.subr.mxu0 0.0
    %2060 = vmatpush1.msra.mxu0 0.0
    %2061 = vmatprep.subr.mxu0 0.0
    %2062 = vmatpush1.msra.mxu0 0.0
    %2063 = vmatprep.subr.mxu0 0.0
    %2064 = vmatpush1.msra.mxu0 0.0
    %2065 = vmatprep.subr.mxu0 0.0
    %2066 = vmatpush1.msra.mxu0 0.0
    %2067 = vmatprep.subr.mxu0 0.0
    %2068 = vmatpush1.msra.mxu0 0.0
    %2069 = vmatprep.subr.mxu0 0.0
    %2070 = vmatpush1.msra.mxu0 0.0
    %2071 = vmatprep.subr.mxu0 0.0
    %2072 = vmatpush1.msra.mxu0 0.0
    %2073 = vmatprep.subr.mxu0 0.0
    %2074 = vmatpush1.msra.mxu0 0.0
    %2075 = vmatprep.subr.mxu0 0.0
    %2076 = vmatpush1.msra.mxu0 0.0
    %2077 = vmatprep.mubr.f32.mxu0 0.0
    %2078 = vmatmul.mubr.f32.gmra.mrb[0].mxu0 %v1778
    %v2079 = vpop.f32.mrb[0].mxu0
    %v2080 = vadd.f32 %v1896, %v2079
    %v2081 = vpop.f32.mrb[0].mxu0
    %2082 = vmatprep.mubr.f32.mxu0 0.0
    %2083 = vmatmul.mubr.f32.gmra.mrb[0].mxu0 %v1779
    %v2084 = vpop.f32.mrb[0].mxu0
    %v2085 = vadd.f32 %v1896, %v2084
    %v2086 = vpop.f32.mrb[0].mxu0
    %2087 = vmatprep.mubr.f32.mxu0 0.0
    %2088 = vmatmul.mubr.f32.gmra.mrb[0].mxu0 %v1780
    %v2089 = vpop.f32.mrb[0].mxu0
    %v2090 = vadd.f32 %v1896, %v2089
    %v2091 = vpop.f32.mrb[0].mxu0
    %2092 = vmatprep.mubr.f32.mxu0 0.0
    %2093 = vmatmul.mubr.f32.gmra.mrb[0].mxu0 %v1781
    %v2094 = vpop.f32.mrb[0].mxu0
    %v2095 = vadd.f32 %v1896, %v2094
    %v2096 = vpop.f32.mrb[0].mxu0
    %2097 = vmatprep.mubr.f32.mxu0 0.0
    %2098 = vmatmul.mubr.f32.gmra.mrb[0].mxu0 %v1782
    %v2099 = vpop.f32.mrb[0].mxu0
    %v2100 = vadd.f32 %v1896, %v2099
    %v2101 = vpop.f32.mrb[0].mxu0
    %2102 = vmatprep.mubr.f32.mxu0 0.0
    %2103 = vmatmul.mubr.f32.gmra.mrb[0].mxu0 %v1783
    %v2104 = vpop.f32.mrb[0].mxu0
    %v2105 = vadd.f32 %v1896, %v2104
    %v2106 = vpop.f32.mrb[0].mxu0
    %2107 = vmatprep.mubr.f32.mxu0 0.0
    %2108 = vmatmul.mubr.f32.gmra.mrb[0].mxu0 %v1784
    %v2109 = vpop.f32.mrb[0].mxu0
    %v2110 = vadd.f32 %v1896, %v2109
    %v2111 = vpop.f32.mrb[0].mxu0
    %2112 = vmatprep.mubr.f32.mxu0 0.0
    %2113 = vmatmul.mubr.f32.gmra.mrb[0].mxu0 %v1785
    %v2114 = vpop.f32.mrb[0].mxu0
    %v2115 = vadd.f32 %v1896, %v2114
    %v2116 = vpop.f32.mrb[0].mxu0
    %2117 = vdwg.mxu0
    %2118 = vst [vmem:[#allocation2] sm:$0xff] %v1967
    %2119 = vst [vmem:[#allocation2 + $0x8] sm:$0xff] %v1969
    %2120 = vst [vmem:[#allocation2 + $0x10] sm:$0xff] %v2080
    %2121 = vst [vmem:[#allocation2 + $0x18] sm:$0xff] %v1973
    %2122 = vst [vmem:[#allocation2 + $0x20] sm:$0xff] %v1975
    %2123 = vst [vmem:[#allocation2 + $0x28] sm:$0xff] %v2085
    %2124 = vst [vmem:[#allocation2 + $0x30] sm:$0xff] %v1979
    %2125 = vst [vmem:[#allocation2 + $0x38] sm:$0xff] %v1981
    %2126 = vst [vmem:[#allocation2 + $0x40] sm:$0xff] %v2090
    %2127 = vst [vmem:[#allocation2 + $0x48] sm:$0xff] %v1985
    %2128 = vst [vmem:[#allocation2 + $0x50] sm:$0xff] %v1987
    %2129 = vst [vmem:[#allocation2 + $0x58] sm:$0xff] %v2095
    %2130 = vst [vmem:[#allocation2 + $0x60] sm:$0xff] %v1991
    %2131 = vst [vmem:[#allocation2 + $0x68] sm:$0xff] %v1993
    %2132 = vst [vmem:[#allocation2 + $0x70] sm:$0xff] %v2100
    %2133 = vst [vmem:[#allocation2 + $0x78] sm:$0xff] %v1997
    %2134 = vst [vmem:[#allocation2 + $0x80] sm:$0xff] %v1999
    %2135 = vst [vmem:[#allocation2 + $0x88] sm:$0xff] %v2105
    %2136 = vst [vmem:[#allocation2 + $0x90] sm:$0xff] %v2003
    %2137 = vst [vmem:[#allocation2 + $0x98] sm:$0xff] %v2005
    %2138 = vst [vmem:[#allocation2 + $0xa0] sm:$0xff] %v2110
    %2139 = vst [vmem:[#allocation2 + $0xa8] sm:$0xff] %v2009
    %2140 = vst [vmem:[#allocation2 + $0xb0] sm:$0xff] %v2011
    %2141 = vst [vmem:[#allocation2 + $0xb8] sm:$0xff] %v2115
    %v2142 = vld [vmem:[#allocation2] sm:$0xff]
    %v2143 = vld [vmem:[#allocation2 + $0x8] sm:$0xff]
    %v2144 = vld [vmem:[#allocation2 + $0x10] sm:$0xff]
    %v2146 = vlaneseq
    %v2147 = vshrl.u32 %v2146, 7
    %v2148 = vsub.s32 0, %v2147
    %v2149 = vrot.slane %v1883, %v2148
    %v2150 = vlaneseq
    %v2151 = vshrl.u32 %v2150, 7
    %v2152 = vsub.s32 1, %v2151
    %v2153 = vrot.slane %v1883, %v2152
    %v2154 = vlaneseq
    %v2155 = vshrl.u32 %v2154, 7
    %v2156 = vsub.s32 2, %v2155
    %v2157 = vrot.slane %v1883, %v2156
    %2161 = vmatprep.subr.mxu0 %v1835
    %2162 = vmatpush1.msra.mxu0 %v1834
    %2163 = vmatprep.subr.mxu0 %v1838
    %2164 = vmatpush1.msra.mxu0 %v1837
    %2165 = vmatprep.subr.mxu0 %v1841
    %2166 = vmatpush1.msra.mxu0 %v1840
    %2167 = vmatprep.subr.mxu0 %v1844
    %2168 = vmatpush1.msra.mxu0 %v1843
    %2169 = vmatprep.subr.mxu0 %v1847
    %2170 = vmatpush1.msra.mxu0 %v1846
    %2171 = vmatprep.subr.mxu0 %v1850
    %2172 = vmatpush1.msra.mxu0 %v1849
    %2173 = vmatprep.subr.mxu0 %v1853
    %2174 = vmatpush1.msra.mxu0 %v1852
    %2175 = vmatprep.subr.mxu0 %v1856
    %2176 = vmatpush1.msra.mxu0 %v1855
    %2177 = vmatprep.subr.mxu0 %v1859
    %2178 = vmatpush1.msra.mxu0 %v1858
    %2179 = vmatprep.subr.mxu0 %v1862
    %2180 = vmatpush1.msra.mxu0 %v1861
    %2181 = vmatprep.subr.mxu0 %v1865
    %2182 = vmatpush1.msra.mxu0 %v1864
    %2183 = vmatprep.subr.mxu0 %v1868
    %2184 = vmatpush1.msra.mxu0 %v1867
    %2185 = vmatprep.subr.mxu0 %v1871
    %2186 = vmatpush1.msra.mxu0 %v1870
    %2187 = vmatprep.subr.mxu0 %v1874
    %2188 = vmatpush1.msra.mxu0 %v1873
    %2189 = vmatprep.subr.mxu0 %v1877
    %2190 = vmatpush1.msra.mxu0 %v1876
    %2191 = vmatprep.subr.mxu0 %v1880
    %2192 = vmatpush1.msra.mxu0 %v1879
    %2193 = vmatprep.subr.mxu0 0.0
    %2194 = vmatpush1.msra.mxu0 0.0
    %2195 = vmatprep.subr.mxu0 0.0
    %2196 = vmatpush1.msra.mxu0 0.0
    %2197 = vmatprep.subr.mxu0 0.0
    %2198 = vmatpush1.msra.mxu0 0.0
    %2199 = vmatprep.subr.mxu0 0.0
    %2200 = vmatpush1.msra.mxu0 0.0
    %2201 = vmatprep.subr.mxu0 0.0
    %2202 = vmatpush1.msra.mxu0 0.0
    %2203 = vmatprep.subr.mxu0 0.0
    %2204 = vmatpush1.msra.mxu0 0.0
    %2205 = vmatprep.subr.mxu0 0.0
    %2206 = vmatpush1.msra.mxu0 0.0
    %2207 = vmatprep.subr.mxu0 0.0
    %2208 = vmatpush1.msra.mxu0 0.0
    %2209 = vmatprep.subr.mxu0 0.0
    %2210 = vmatpush1.msra.mxu0 0.0
    %2211 = vmatprep.subr.mxu0 0.0
    %2212 = vmatpush1.msra.mxu0 0.0
    %2213 = vmatprep.subr.mxu0 0.0
    %2214 = vmatpush1.msra.mxu0 0.0
    %2215 = vmatprep.subr.mxu0 0.0
    %2216 = vmatpush1.msra.mxu0 0.0
    %2217 = vmatprep.subr.mxu0 0.0
    %2218 = vmatpush1.msra.mxu0 0.0
    %2219 = vmatprep.subr.mxu0 0.0
    %2220 = vmatpush1.msra.mxu0 0.0
    %2221 = vmatprep.subr.mxu0 0.0
    %2222 = vmatpush1.msra.mxu0 0.0
    %2223 = vmatprep.subr.mxu0 0.0
    %2224 = vmatpush1.msra.mxu0 0.0
    %2225 = vmatprep.mubr.f32.mxu0 0.0
    %2226 = vmatmul.mubr.f32.gmra.mrb[0].mxu0 0.0
    %v2227 = vpop.f32.mrb[0].mxu0
    %v2228 = vadd.f32 %v2149, %v2227
    %v2229 = vpop.f32.mrb[0].mxu0
    %v2230 = vadd.f32 %v2153, %v2229
    %2231 = vdwg.mxu0
    %2232 = vmatprep.subr.mxu0 0.0
    %2233 = vmatpush1.msra.mxu0 %v1836
    %2234 = vmatprep.subr.mxu0 0.0
    %2235 = vmatpush1.msra.mxu0 %v1839
    %2236 = vmatprep.subr.mxu0 0.0
    %2237 = vmatpush1.msra.mxu0 %v1842
    %2238 = vmatprep.subr.mxu0 0.0
    %2239 = vmatpush1.msra.mxu0 %v1845
    %2240 = vmatprep.subr.mxu0 0.0
    %2241 = vmatpush1.msra.mxu0 %v1848
    %2242 = vmatprep.subr.mxu0 0.0
    %2243 = vmatpush1.msra.mxu0 %v1851
    %2244 = vmatprep.subr.mxu0 0.0
    %2245 = vmatpush1.msra.mxu0 %v1854
    %2246 = vmatprep.subr.mxu0 0.0
    %2247 = vmatpush1.msra.mxu0 %v1857
    %2248 = vmatprep.subr.mxu0 0.0
    %2249 = vmatpush1.msra.mxu0 %v1860
    %2250 = vmatprep.subr.mxu0 0.0
    %2251 = vmatpush1.msra.mxu0 %v1863
    %2252 = vmatprep.subr.mxu0 0.0
    %2253 = vmatpush1.msra.mxu0 %v1866
    %2254 = vmatprep.subr.mxu0 0.0
    %2255 = vmatpush1.msra.mxu0 %v1869
    %2256 = vmatprep.subr.mxu0 0.0
    %2257 = vmatpush1.msra.mxu0 %v1872
    %2258 = vmatprep.subr.mxu0 0.0
    %2259 = vmatpush1.msra.mxu0 %v1875
    %2260 = vmatprep.subr.mxu0 0.0
    %2261 = vmatpush1.msra.mxu0 %v1878
    %2262 = vmatprep.subr.mxu0 0.0
    %2263 = vmatpush1.msra.mxu0 %v1881
    %2264 = vmatprep.subr.mxu0 0.0
    %2265 = vmatpush1.msra.mxu0 0.0
    %2266 = vmatprep.subr.mxu0 0.0
    %2267 = vmatpush1.msra.mxu0 0.0
    %2268 = vmatprep.subr.mxu0 0.0
    %2269 = vmatpush1.msra.mxu0 0.0
    %2270 = vmatprep.subr.mxu0 0.0
    %2271 = vmatpush1.msra.mxu0 0.0
    %2272 = vmatprep.subr.mxu0 0.0
    %2273 = vmatpush1.msra.mxu0 0.0
    %2274 = vmatprep.subr.mxu0 0.0
    %2275 = vmatpush1.msra.mxu0 0.0
    %2276 = vmatprep.subr.mxu0 0.0
    %2277 = vmatpush1.msra.mxu0 0.0
    %2278 = vmatprep.subr.mxu0 0.0
    %2279 = vmatpush1.msra.mxu0 0.0
    %2280 = vmatprep.subr.mxu0 0.0
    %2281 = vmatpush1.msra.mxu0 0.0
    %2282 = vmatprep.subr.mxu0 0.0
    %2283 = vmatpush1.msra.mxu0 0.0
    %2284 = vmatprep.subr.mxu0 0.0
    %2285 = vmatpush1.msra.mxu0 0.0
    %2286 = vmatprep.subr.mxu0 0.0
    %2287 = vmatpush1.msra.mxu0 0.0
    %2288 = vmatprep.subr.mxu0 0.0
    %2289 = vmatpush1.msra.mxu0 0.0
    %2290 = vmatprep.subr.mxu0 0.0
    %2291 = vmatpush1.msra.mxu0 0.0
    %2292 = vmatprep.subr.mxu0 0.0
    %2293 = vmatpush1.msra.mxu0 0.0
    %2294 = vmatprep.subr.mxu0 0.0
    %2295 = vmatpush1.msra.mxu0 0.0
    %2296 = vmatprep.mubr.f32.mxu0 0.0
    %2297 = vmatmul.mubr.f32.gmra.mrb[0].mxu0 0.0
    %v2298 = vpop.f32.mrb[0].mxu0
    %v2299 = vadd.f32 %v2157, %v2298
    %v2300 = vpop.f32.mrb[0].mxu0
    %2301 = vdwg.mxu0
    %v2302 = vadd.f32 %v2142, %v2228
    %v2303 = vxor.u32 %v2302, 2147483648
    %v2304 = vmul.f32 %v2303, 1.442695
    %v2305 = vpow.pop %v2304
    %v2306 = vadd.f32 %v2305, 1.0
    %v2307 = vrcp.pop %v2306
    %v2308 = vmul.f32 1.0, %v2307
    %v2309 = vadd.f32 %v2143, %v2230
    %v2310 = vxor.u32 %v2309, 2147483648
    %v2311 = vmul.f32 %v2310, 1.442695
    %v2312 = vpow.pop %v2311
    %v2313 = vadd.f32 %v2312, 1.0
    %v2314 = vrcp.pop %v2313
    %v2315 = vmul.f32 1.0, %v2314
    %v2316 = vmul.f32 %v2308, %v2299
    %v2317 = vadd.f32 %v2144, %v2316
    %v2318 = vtanh.pop %v2317
    %v2319 = vsub.f32 1.0, %v2315
    %v2320 = vmul.f32 %v2319, %v2318
    %v2321 = vmul.f32 %v2315, 0.0
    %v2322 = vadd.f32 %v2320, %v2321
    %2323 = vst [vmem:[#allocation3] sm:$0xff] %v2322
    %v2324 = vld [vmem:[#allocation2 + $0x18] sm:$0xff]
    %v2325 = vld [vmem:[#allocation2 + $0x20] sm:$0xff]
    %v2326 = vld [vmem:[#allocation2 + $0x28] sm:$0xff]
    %2327 = vmatprep.subr.mxu0 %v1835
    %2328 = vmatpush1.msra.mxu0 %v1834
    %2329 = vmatprep.subr.mxu0 %v1838
    %2330 = vmatpush1.msra.mxu0 %v1837
    %2331 = vmatprep.subr.mxu0 %v1841
    %2332 = vmatpush1.msra.mxu0 %v1840
    %2333 = vmatprep.subr.mxu0 %v1844
    %2334 = vmatpush1.msra.mxu0 %v1843
    %2335 = vmatprep.subr.mxu0 %v1847
    %2336 = vmatpush1.msra.mxu0 %v1846
    %2337 = vmatprep.subr.mxu0 %v1850
    %2338 = vmatpush1.msra.mxu0 %v1849
    %2339 = vmatprep.subr.mxu0 %v1853
    %2340 = vmatpush1.msra.mxu0 %v1852
    %2341 = vmatprep.subr.mxu0 %v1856
    %2342 = vmatpush1.msra.mxu0 %v1855
    %2343 = vmatprep.subr.mxu0 %v1859
    %2344 = vmatpush1.msra.mxu0 %v1858
    %2345 = vmatprep.subr.mxu0 %v1862
    %2346 = vmatpush1.msra.mxu0 %v1861
    %2347 = vmatprep.subr.mxu0 %v1865
    %2348 = vmatpush1.msra.mxu0 %v1864
    %2349 = vmatprep.subr.mxu0 %v1868
    %2350 = vmatpush1.msra.mxu0 %v1867
    %2351 = vmatprep.subr.mxu0 %v1871
    %2352 = vmatpush1.msra.mxu0 %v1870
    %2353 = vmatprep.subr.mxu0 %v1874
    %2354 = vmatpush1.msra.mxu0 %v1873
    %2355 = vmatprep.subr.mxu0 %v1877
    %2356 = vmatpush1.msra.mxu0 %v1876
    %2357 = vmatprep.subr.mxu0 %v1880
    %2358 = vmatpush1.msra.mxu0 %v1879
    %2359 = vmatprep.subr.mxu0 0.0
    %2360 = vmatpush1.msra.mxu0 0.0
    %2361 = vmatprep.subr.mxu0 0.0
    %2362 = vmatpush1.msra.mxu0 0.0
    %2363 = vmatprep.subr.mxu0 0.0
    %2364 = vmatpush1.msra.mxu0 0.0
    %2365 = vmatprep.subr.mxu0 0.0
    %2366 = vmatpush1.msra.mxu0 0.0
    %2367 = vmatprep.subr.mxu0 0.0
    %2368 = vmatpush1.msra.mxu0 0.0
    %2369 = vmatprep.subr.mxu0 0.0
    %2370 = vmatpush1.msra.mxu0 0.0
    %2371 = vmatprep.subr.mxu0 0.0
    %2372 = vmatpush1.msra.mxu0 0.0
    %2373 = vmatprep.subr.mxu0 0.0
    %2374 = vmatpush1.msra.mxu0 0.0
    %2375 = vmatprep.subr.mxu0 0.0
    %2376 = vmatpush1.msra.mxu0 0.0
    %2377 = vmatprep.subr.mxu0 0.0
    %2378 = vmatpush1.msra.mxu0 0.0
    %2379 = vmatprep.subr.mxu0 0.0
    %2380 = vmatpush1.msra.mxu0 0.0
    %2381 = vmatprep.subr.mxu0 0.0
    %2382 = vmatpush1.msra.mxu0 0.0
    %2383 = vmatprep.subr.mxu0 0.0
    %2384 = vmatpush1.msra.mxu0 0.0
    %2385 = vmatprep.subr.mxu0 0.0
    %2386 = vmatpush1.msra.mxu0 0.0
    %2387 = vmatprep.subr.mxu0 0.0
    %2388 = vmatpush1.msra.mxu0 0.0
    %2389 = vmatprep.subr.mxu0 0.0
    %2390 = vmatpush1.msra.mxu0 0.0
    %2391 = vmatprep.mubr.f32.mxu0 0.0
    %2392 = vmatmul.mubr.f32.gmra.mrb[0].mxu0 %v2322
    %v2393 = vpop.f32.mrb[0].mxu0
    %v2394 = vadd.f32 %v2149, %v2393
    %v2395 = vpop.f32.mrb[0].mxu0
    %v2396 = vadd.f32 %v2153, %v2395
    %2397 = vdwg.mxu0
    %2398 = vmatprep.subr.mxu0 0.0
    %2399 = vmatpush1.msra.mxu0 %v1836
    %2400 = vmatprep.subr.mxu0 0.0
    %2401 = vmatpush1.msra.mxu0 %v1839
    %2402 = vmatprep.subr.mxu0 0.0
    %2403 = vmatpush1.msra.mxu0 %v1842
    %2404 = vmatprep.subr.mxu0 0.0
    %2405 = vmatpush1.msra.mxu0 %v1845
    %2406 = vmatprep.subr.mxu0 0.0
    %2407 = vmatpush1.msra.mxu0 %v1848
    %2408 = vmatprep.subr.mxu0 0.0
    %2409 = vmatpush1.msra.mxu0 %v1851
    %2410 = vmatprep.subr.mxu0 0.0
    %2411 = vmatpush1.msra.mxu0 %v1854
    %2412 = vmatprep.subr.mxu0 0.0
    %2413 = vmatpush1.msra.mxu0 %v1857
    %2414 = vmatprep.subr.mxu0 0.0
    %2415 = vmatpush1.msra.mxu0 %v1860
    %2416 = vmatprep.subr.mxu0 0.0
    %2417 = vmatpush1.msra.mxu0 %v1863
    %2418 = vmatprep.subr.mxu0 0.0
    %2419 = vmatpush1.msra.mxu0 %v1866
    %2420 = vmatprep.subr.mxu0 0.0
    %2421 = vmatpush1.msra.mxu0 %v1869
    %2422 = vmatprep.subr.mxu0 0.0
    %2423 = vmatpush1.msra.mxu0 %v1872
    %2424 = vmatprep.subr.mxu0 0.0
    %2425 = vmatpush1.msra.mxu0 %v1875
    %2426 = vmatprep.subr.mxu0 0.0
    %2427 = vmatpush1.msra.mxu0 %v1878
    %2428 = vmatprep.subr.mxu0 0.0
    %2429 = vmatpush1.msra.mxu0 %v1881
    %2430 = vmatprep.subr.mxu0 0.0
    %2431 = vmatpush1.msra.mxu0 0.0
    %2432 = vmatprep.subr.mxu0 0.0
    %2433 = vmatpush1.msra.mxu0 0.0
    %2434 = vmatprep.subr.mxu0 0.0
    %2435 = vmatpush1.msra.mxu0 0.0
    %2436 = vmatprep.subr.mxu0 0.0
    %2437 = vmatpush1.msra.mxu0 0.0
    %2438 = vmatprep.subr.mxu0 0.0
    %2439 = vmatpush1.msra.mxu0 0.0
    %2440 = vmatprep.subr.mxu0 0.0
    %2441 = vmatpush1.msra.mxu0 0.0
    %2442 = vmatprep.subr.mxu0 0.0
    %2443 = vmatpush1.msra.mxu0 0.0
    %2444 = vmatprep.subr.mxu0 0.0
    %2445 = vmatpush1.msra.mxu0 0.0
    %2446 = vmatprep.subr.mxu0 0.0
    %2447 = vmatpush1.msra.mxu0 0.0
    %2448 = vmatprep.subr.mxu0 0.0
    %2449 = vmatpush1.msra.mxu0 0.0
    %2450 = vmatprep.subr.mxu0 0.0
    %2451 = vmatpush1.msra.mxu0 0.0
    %2452 = vmatprep.subr.mxu0 0.0
    %2453 = vmatpush1.msra.mxu0 0.0
    %2454 = vmatprep.subr.mxu0 0.0
    %2455 = vmatpush1.msra.mxu0 0.0
    %2456 = vmatprep.subr.mxu0 0.0
    %2457 = vmatpush1.msra.mxu0 0.0
    %2458 = vmatprep.subr.mxu0 0.0
    %2459 = vmatpush1.msra.mxu0 0.0
    %2460 = vmatprep.subr.mxu0 0.0
    %2461 = vmatpush1.msra.mxu0 0.0
    %2462 = vmatprep.mubr.f32.mxu0 0.0
    %2463 = vmatmul.mubr.f32.gmra.mrb[0].mxu0 %v2322
    %v2464 = vpop.f32.mrb[0].mxu0
    %v2465 = vadd.f32 %v2157, %v2464
    %v2466 = vpop.f32.mrb[0].mxu0
    %2467 = vdwg.mxu0
    %v2468 = vadd.f32 %v2324, %v2394
    %v2469 = vxor.u32 %v2468, 2147483648
    %v2470 = vmul.f32 %v2469, 1.442695
    %v2471 = vpow.pop %v2470
    %v2472 = vadd.f32 %v2471, 1.0
    %v2473 = vrcp.pop %v2472
    %v2474 = vmul.f32 1.0, %v2473
    %v2475 = vadd.f32 %v2325, %v2396
    %v2476 = vxor.u32 %v2475, 2147483648
    %v2477 = vmul.f32 %v2476, 1.442695
    %v2478 = vpow.pop %v2477
    %v2479 = vadd.f32 %v2478, 1.0
    %v2480 = vrcp.pop %v2479
    %v2481 = vmul.f32 1.0, %v2480
    %v2482 = vmul.f32 %v2474, %v2465
    %v2483 = vadd.f32 %v2326, %v2482
    %v2484 = vtanh.pop %v2483
    %v2485 = vsub.f32 1.0, %v2481
    %v2486 = vmul.f32 %v2485, %v2484
    %v2487 = vmul.f32 %v2481, %v2322
    %v2488 = vadd.f32 %v2486, %v2487
    %2489 = vst [vmem:[#allocation3 + $0x8] sm:$0xff] %v2488
    %v2490 = vld [vmem:[#allocation2 + $0x30] sm:$0xff]
    %v2491 = vld [vmem:[#allocation2 + $0x38] sm:$0xff]
    %v2492 = vld [vmem:[#allocation2 + $0x40] sm:$0xff]
    %2493 = vmatprep.subr.mxu0 %v1835
    %2494 = vmatpush1.msra.mxu0 %v1834
    %2495 = vmatprep.subr.mxu0 %v1838
    %2496 = vmatpush1.msra.mxu0 %v1837
    %2497 = vmatprep.subr.mxu0 %v1841
    %2498 = vmatpush1.msra.mxu0 %v1840
    %2499 = vmatprep.subr.mxu0 %v1844
    %2500 = vmatpush1.msra.mxu0 %v1843
    %2501 = vmatprep.subr.mxu0 %v1847
    %2502 = vmatpush1.msra.mxu0 %v1846
    %2503 = vmatprep.subr.mxu0 %v1850
    %2504 = vmatpush1.msra.mxu0 %v1849
    %2505 = vmatprep.subr.mxu0 %v1853
    %2506 = vmatpush1.msra.mxu0 %v1852
    %2507 = vmatprep.subr.mxu0 %v1856
    %2508 = vmatpush1.msra.mxu0 %v1855
    %2509 = vmatprep.subr.mxu0 %v1859
    %2510 = vmatpush1.msra.mxu0 %v1858
    %2511 = vmatprep.subr.mxu0 %v1862
    %2512 = vmatpush1.msra.mxu0 %v1861
    %2513 = vmatprep.subr.mxu0 %v1865
    %2514 = vmatpush1.msra.mxu0 %v1864
    %2515 = vmatprep.subr.mxu0 %v1868
    %2516 = vmatpush1.msra.mxu0 %v1867
    %2517 = vmatprep.subr.mxu0 %v1871
    %2518 = vmatpush1.msra.mxu0 %v1870
    %2519 = vmatprep.subr.mxu0 %v1874
    %2520 = vmatpush1.msra.mxu0 %v1873
    %2521 = vmatprep.subr.mxu0 %v1877
    %2522 = vmatpush1.msra.mxu0 %v1876
    %2523 = vmatprep.subr.mxu0 %v1880
    %2524 = vmatpush1.msra.mxu0 %v1879
    %2525 = vmatprep.subr.mxu0 0.0
    %2526 = vmatpush1.msra.mxu0 0.0
    %2527 = vmatprep.subr.mxu0 0.0
    %2528 = vmatpush1.msra.mxu0 0.0
    %2529 = vmatprep.subr.mxu0 0.0
    %2530 = vmatpush1.msra.mxu0 0.0
    %2531 = vmatprep.subr.mxu0 0.0
    %2532 = vmatpush1.msra.mxu0 0.0
    %2533 = vmatprep.subr.mxu0 0.0
    %2534 = vmatpush1.msra.mxu0 0.0
    %2535 = vmatprep.subr.mxu0 0.0
    %2536 = vmatpush1.msra.mxu0 0.0
    %2537 = vmatprep.subr.mxu0 0.0
    %2538 = vmatpush1.msra.mxu0 0.0
    %2539 = vmatprep.subr.mxu0 0.0
    %2540 = vmatpush1.msra.mxu0 0.0
    %2541 = vmatprep.subr.mxu0 0.0
    %2542 = vmatpush1.msra.mxu0 0.0
    %2543 = vmatprep.subr.mxu0 0.0
    %2544 = vmatpush1.msra.mxu0 0.0
    %2545 = vmatprep.subr.mxu0 0.0
    %2546 = vmatpush1.msra.mxu0 0.0
    %2547 = vmatprep.subr.mxu0 0.0
    %2548 = vmatpush1.msra.mxu0 0.0
    %2549 = vmatprep.subr.mxu0 0.0
    %2550 = vmatpush1.msra.mxu0 0.0
    %2551 = vmatprep.subr.mxu0 0.0
    %2552 = vmatpush1.msra.mxu0 0.0
    %2553 = vmatprep.subr.mxu0 0.0
    %2554 = vmatpush1.msra.mxu0 0.0
    %2555 = vmatprep.subr.mxu0 0.0
    %2556 = vmatpush1.msra.mxu0 0.0
    %2557 = vmatprep.mubr.f32.mxu0 0.0
    %2558 = vmatmul.mubr.f32.gmra.mrb[0].mxu0 %v2488
    %v2559 = vpop.f32.mrb[0].mxu0
    %v2560 = vadd.f32 %v2149, %v2559
    %v2561 = vpop.f32.mrb[0].mxu0
    %v2562 = vadd.f32 %v2153, %v2561
    %2563 = vdwg.mxu0
    %2564 = vmatprep.subr.mxu0 0.0
    %2565 = vmatpush1.msra.mxu0 %v1836
    %2566 = vmatprep.subr.mxu0 0.0
    %2567 = vmatpush1.msra.mxu0 %v1839
    %2568 = vmatprep.subr.mxu0 0.0
    %2569 = vmatpush1.msra.mxu0 %v1842
    %2570 = vmatprep.subr.mxu0 0.0
    %2571 = vmatpush1.msra.mxu0 %v1845
    %2572 = vmatprep.subr.mxu0 0.0
    %2573 = vmatpush1.msra.mxu0 %v1848
    %2574 = vmatprep.subr.mxu0 0.0
    %2575 = vmatpush1.msra.mxu0 %v1851
    %2576 = vmatprep.subr.mxu0 0.0
    %2577 = vmatpush1.msra.mxu0 %v1854
    %2578 = vmatprep.subr.mxu0 0.0
    %2579 = vmatpush1.msra.mxu0 %v1857
    %2580 = vmatprep.subr.mxu0 0.0
    %2581 = vmatpush1.msra.mxu0 %v1860
    %2582 = vmatprep.subr.mxu0 0.0
    %2583 = vmatpush1.msra.mxu0 %v1863
    %2584 = vmatprep.subr.mxu0 0.0
    %2585 = vmatpush1.msra.mxu0 %v1866
    %2586 = vmatprep.subr.mxu0 0.0
    %2587 = vmatpush1.msra.mxu0 %v1869
    %2588 = vmatprep.subr.mxu0 0.0
    %2589 = vmatpush1.msra.mxu0 %v1872
    %2590 = vmatprep.subr.mxu0 0.0
    %2591 = vmatpush1.msra.mxu0 %v1875
    %2592 = vmatprep.subr.mxu0 0.0
    %2593 = vmatpush1.msra.mxu0 %v1878
    %2594 = vmatprep.subr.mxu0 0.0
    %2595 = vmatpush1.msra.mxu0 %v1881
    %2596 = vmatprep.subr.mxu0 0.0
    %2597 = vmatpush1.msra.mxu0 0.0
    %2598 = vmatprep.subr.mxu0 0.0
    %2599 = vmatpush1.msra.mxu0 0.0
    %2600 = vmatprep.subr.mxu0 0.0
    %2601 = vmatpush1.msra.mxu0 0.0
    %2602 = vmatprep.subr.mxu0 0.0
    %2603 = vmatpush1.msra.mxu0 0.0
    %2604 = vmatprep.subr.mxu0 0.0
    %2605 = vmatpush1.msra.mxu0 0.0
    %2606 = vmatprep.subr.mxu0 0.0
    %2607 = vmatpush1.msra.mxu0 0.0
    %2608 = vmatprep.subr.mxu0 0.0
    %2609 = vmatpush1.msra.mxu0 0.0
    %2610 = vmatprep.subr.mxu0 0.0
    %2611 = vmatpush1.msra.mxu0 0.0
    %2612 = vmatprep.subr.mxu0 0.0
    %2613 = vmatpush1.msra.mxu0 0.0
    %2614 = vmatprep.subr.mxu0 0.0
    %2615 = vmatpush1.msra.mxu0 0.0
    %2616 = vmatprep.subr.mxu0 0.0
    %2617 = vmatpush1.msra.mxu0 0.0
    %2618 = vmatprep.subr.mxu0 0.0
    %2619 = vmatpush1.msra.mxu0 0.0
    %2620 = vmatprep.subr.mxu0 0.0
    %2621 = vmatpush1.msra.mxu0 0.0
    %2622 = vmatprep.subr.mxu0 0.0
    %2623 = vmatpush1.msra.mxu0 0.0
    %2624 = vmatprep.subr.mxu0 0.0
    %2625 = vmatpush1.msra.mxu0 0.0
    %2626 = vmatprep.subr.mxu0 0.0
    %2627 = vmatpush1.msra.mxu0 0.0
    %2628 = vmatprep.mubr.f32.mxu0 0.0
    %2629 = vmatmul.mubr.f32.gmra.mrb[0].mxu0 %v2488
    %v2630 = vpop.f32.mrb[0].mxu0
    %v2631 = vadd.f32 %v2157, %v2630
    %v2632 = vpop.f32.mrb[0].mxu0
    %2633 = vdwg.mxu0
    %v2634 = vadd.f32 %v2490, %v2560
    %v2635 = vxor.u32 %v2634, 2147483648
    %v2636 = vmul.f32 %v2635, 1.442695
    %v2637 = vpow.pop %v2636
    %v2638 = vadd.f32 %v2637, 1.0
    %v2639 = vrcp.pop %v2638
    %v2640 = vmul.f32 1.0, %v2639
    %v2641 = vadd.f32 %v2491, %v2562
    %v2642 = vxor.u32 %v2641, 2147483648
    %v2643 = vmul.f32 %v2642, 1.442695
    %v2644 = vpow.pop %v2643
    %v2645 = vadd.f32 %v2644, 1.0
    %v2646 = vrcp.pop %v2645
    %v2647 = vmul.f32 1.0, %v2646
    %v2648 = vmul.f32 %v2640, %v2631
    %v2649 = vadd.f32 %v2492, %v2648
    %v2650 = vtanh.pop %v2649
    %v2651 = vsub.f32 1.0, %v2647
    %v2652 = vmul.f32 %v2651, %v2650
    %v2653 = vmul.f32 %v2647, %v2488
    %v2654 = vadd.f32 %v2652, %v2653
    %2655 = vst [vmem:[#allocation3 + $0x10] sm:$0xff] %v2654
    %v2656 = vld [vmem:[#allocation2 + $0x48] sm:$0xff]
    %v2657 = vld [vmem:[#allocation2 + $0x50] sm:$0xff]
    %v2658 = vld [vmem:[#allocation2 + $0x58] sm:$0xff]
    %2659 = vmatprep.subr.mxu0 %v1835
    %2660 = vmatpush1.msra.mxu0 %v1834
    %2661 = vmatprep.subr.mxu0 %v1838
    %2662 = vmatpush1.msra.mxu0 %v1837
    %2663 = vmatprep.subr.mxu0 %v1841
    %2664 = vmatpush1.msra.mxu0 %v1840
    %2665 = vmatprep.subr.mxu0 %v1844
    %2666 = vmatpush1.msra.mxu0 %v1843
    %2667 = vmatprep.subr.mxu0 %v1847
    %2668 = vmatpush1.msra.mxu0 %v1846
    %2669 = vmatprep.subr.mxu0 %v1850
    %2670 = vmatpush1.msra.mxu0 %v1849
    %2671 = vmatprep.subr.mxu0 %v1853
    %2672 = vmatpush1.msra.mxu0 %v1852
    %2673 = vmatprep.subr.mxu0 %v1856
    %2674 = vmatpush1.msra.mxu0 %v1855
    %2675 = vmatprep.subr.mxu0 %v1859
    %2676 = vmatpush1.msra.mxu0 %v1858
    %2677 = vmatprep.subr.mxu0 %v1862
    %2678 = vmatpush1.msra.mxu0 %v1861
    %2679 = vmatprep.subr.mxu0 %v1865
    %2680 = vmatpush1.msra.mxu0 %v1864
    %2681 = vmatprep.subr.mxu0 %v1868
    %2682 = vmatpush1.msra.mxu0 %v1867
    %2683 = vmatprep.subr.mxu0 %v1871
    %2684 = vmatpush1.msra.mxu0 %v1870
    %2685 = vmatprep.subr.mxu0 %v1874
    %2686 = vmatpush1.msra.mxu0 %v1873
    %2687 = vmatprep.subr.mxu0 %v1877
    %2688 = vmatpush1.msra.mxu0 %v1876
    %2689 = vmatprep.subr.mxu0 %v1880
    %2690 = vmatpush1.msra.mxu0 %v1879
    %2691 = vmatprep.subr.mxu0 0.0
    %2692 = vmatpush1.msra.mxu0 0.0
    %2693 = vmatprep.subr.mxu0 0.0
    %2694 = vmatpush1.msra.mxu0 0.0
    %2695 = vmatprep.subr.mxu0 0.0
    %2696 = vmatpush1.msra.mxu0 0.0
    %2697 = vmatprep.subr.mxu0 0.0
    %2698 = vmatpush1.msra.mxu0 0.0
    %2699 = vmatprep.subr.mxu0 0.0
    %2700 = vmatpush1.msra.mxu0 0.0
    %2701 = vmatprep.subr.mxu0 0.0
    %2702 = vmatpush1.msra.mxu0 0.0
    %2703 = vmatprep.subr.mxu0 0.0
    %2704 = vmatpush1.msra.mxu0 0.0
    %2705 = vmatprep.subr.mxu0 0.0
    %2706 = vmatpush1.msra.mxu0 0.0
    %2707 = vmatprep.subr.mxu0 0.0
    %2708 = vmatpush1.msra.mxu0 0.0
    %2709 = vmatprep.subr.mxu0 0.0
    %2710 = vmatpush1.msra.mxu0 0.0
    %2711 = vmatprep.subr.mxu0 0.0
    %2712 = vmatpush1.msra.mxu0 0.0
    %2713 = vmatprep.subr.mxu0 0.0
    %2714 = vmatpush1.msra.mxu0 0.0
    %2715 = vmatprep.subr.mxu0 0.0
    %2716 = vmatpush1.msra.mxu0 0.0
    %2717 = vmatprep.subr.mxu0 0.0
    %2718 = vmatpush1.msra.mxu0 0.0
    %2719 = vmatprep.subr.mxu0 0.0
    %2720 = vmatpush1.msra.mxu0 0.0
    %2721 = vmatprep.subr.mxu0 0.0
    %2722 = vmatpush1.msra.mxu0 0.0
    %2723 = vmatprep.mubr.f32.mxu0 0.0
    %2724 = vmatmul.mubr.f32.gmra.mrb[0].mxu0 %v2654
    %v2725 = vpop.f32.mrb[0].mxu0
    %v2726 = vadd.f32 %v2149, %v2725
    %v2727 = vpop.f32.mrb[0].mxu0
    %v2728 = vadd.f32 %v2153, %v2727
    %2729 = vdwg.mxu0
    %2730 = vmatprep.subr.mxu0 0.0
    %2731 = vmatpush1.msra.mxu0 %v1836
    %2732 = vmatprep.subr.mxu0 0.0
    %2733 = vmatpush1.msra.mxu0 %v1839
    %2734 = vmatprep.subr.mxu0 0.0
    %2735 = vmatpush1.msra.mxu0 %v1842
    %2736 = vmatprep.subr.mxu0 0.0
    %2737 = vmatpush1.msra.mxu0 %v1845
    %2738 = vmatprep.subr.mxu0 0.0
    %2739 = vmatpush1.msra.mxu0 %v1848
    %2740 = vmatprep.subr.mxu0 0.0
    %2741 = vmatpush1.msra.mxu0 %v1851
    %2742 = vmatprep.subr.mxu0 0.0
    %2743 = vmatpush1.msra.mxu0 %v1854
    %2744 = vmatprep.subr.mxu0 0.0
    %2745 = vmatpush1.msra.mxu0 %v1857
    %2746 = vmatprep.subr.mxu0 0.0
    %2747 = vmatpush1.msra.mxu0 %v1860
    %2748 = vmatprep.subr.mxu0 0.0
    %2749 = vmatpush1.msra.mxu0 %v1863
    %2750 = vmatprep.subr.mxu0 0.0
    %2751 = vmatpush1.msra.mxu0 %v1866
    %2752 = vmatprep.subr.mxu0 0.0
    %2753 = vmatpush1.msra.mxu0 %v1869
    %2754 = vmatprep.subr.mxu0 0.0
    %2755 = vmatpush1.msra.mxu0 %v1872
    %2756 = vmatprep.subr.mxu0 0.0
    %2757 = vmatpush1.msra.mxu0 %v1875
    %2758 = vmatprep.subr.mxu0 0.0
    %2759 = vmatpush1.msra.mxu0 %v1878
    %2760 = vmatprep.subr.mxu0 0.0
    %2761 = vmatpush1.msra.mxu0 %v1881
    %2762 = vmatprep.subr.mxu0 0.0
    %2763 = vmatpush1.msra.mxu0 0.0
    %2764 = vmatprep.subr.mxu0 0.0
    %2765 = vmatpush1.msra.mxu0 0.0
    %2766 = vmatprep.subr.mxu0 0.0
    %2767 = vmatpush1.msra.mxu0 0.0
    %2768 = vmatprep.subr.mxu0 0.0
    %2769 = vmatpush1.msra.mxu0 0.0
    %2770 = vmatprep.subr.mxu0 0.0
    %2771 = vmatpush1.msra.mxu0 0.0
    %2772 = vmatprep.subr.mxu0 0.0
    %2773 = vmatpush1.msra.mxu0 0.0
    %2774 = vmatprep.subr.mxu0 0.0
    %2775 = vmatpush1.msra.mxu0 0.0
    %2776 = vmatprep.subr.mxu0 0.0
    %2777 = vmatpush1.msra.mxu0 0.0
    %2778 = vmatprep.subr.mxu0 0.0
    %2779 = vmatpush1.msra.mxu0 0.0
    %2780 = vmatprep.subr.mxu0 0.0
    %2781 = vmatpush1.msra.mxu0 0.0
    %2782 = vmatprep.subr.mxu0 0.0
    %2783 = vmatpush1.msra.mxu0 0.0
    %2784 = vmatprep.subr.mxu0 0.0
    %2785 = vmatpush1.msra.mxu0 0.0
    %2786 = vmatprep.subr.mxu0 0.0
    %2787 = vmatpush1.msra.mxu0 0.0
    %2788 = vmatprep.subr.mxu0 0.0
    %2789 = vmatpush1.msra.mxu0 0.0
    %2790 = vmatprep.subr.mxu0 0.0
    %2791 = vmatpush1.msra.mxu0 0.0
    %2792 = vmatprep.subr.mxu0 0.0
    %2793 = vmatpush1.msra.mxu0 0.0
    %2794 = vmatprep.mubr.f32.mxu0 0.0
    %2795 = vmatmul.mubr.f32.gmra.mrb[0].mxu0 %v2654
    %v2796 = vpop.f32.mrb[0].mxu0
    %v2797 = vadd.f32 %v2157, %v2796
    %v2798 = vpop.f32.mrb[0].mxu0
    %2799 = vdwg.mxu0
    %v2800 = vadd.f32 %v2656, %v2726
    %v2801 = vxor.u32 %v2800, 2147483648
    %v2802 = vmul.f32 %v2801, 1.442695
    %v2803 = vpow.pop %v2802
    %v2804 = vadd.f32 %v2803, 1.0
    %v2805 = vrcp.pop %v2804
    %v2806 = vmul.f32 1.0, %v2805
    %v2807 = vadd.f32 %v2657, %v2728
    %v2808 = vxor.u32 %v2807, 2147483648
    %v2809 = vmul.f32 %v2808, 1.442695
    %v2810 = vpow.pop %v2809
    %v2811 = vadd.f32 %v2810, 1.0
    %v2812 = vrcp.pop %v2811
    %v2813 = vmul.f32 1.0, %v2812
    %v2814 = vmul.f32 %v2806, %v2797
    %v2815 = vadd.f32 %v2658, %v2814
    %v2816 = vtanh.pop %v2815
    %v2817 = vsub.f32 1.0, %v2813
    %v2818 = vmul.f32 %v2817, %v2816
    %v2819 = vmul.f32 %v2813, %v2654
    %v2820 = vadd.f32 %v2818, %v2819
    %2821 = vst [vmem:[#allocation3 + $0x18] sm:$0xff] %v2820
    %v2822 = vld [vmem:[#allocation2 + $0x60] sm:$0xff]
    %v2823 = vld [vmem:[#allocation2 + $0x68] sm:$0xff]
    %v2824 = vld [vmem:[#allocation2 + $0x70] sm:$0xff]
    %2825 = vmatprep.subr.mxu0 %v1835
    %2826 = vmatpush1.msra.mxu0 %v1834
    %2827 = vmatprep.subr.mxu0 %v1838
    %2828 = vmatpush1.msra.mxu0 %v1837
    %2829 = vmatprep.subr.mxu0 %v1841
    %2830 = vmatpush1.msra.mxu0 %v1840
    %2831 = vmatprep.subr.mxu0 %v1844
    %2832 = vmatpush1.msra.mxu0 %v1843
    %2833 = vmatprep.subr.mxu0 %v1847
    %2834 = vmatpush1.msra.mxu0 %v1846
    %2835 = vmatprep.subr.mxu0 %v1850
    %2836 = vmatpush1.msra.mxu0 %v1849
    %2837 = vmatprep.subr.mxu0 %v1853
    %2838 = vmatpush1.msra.mxu0 %v1852
    %2839 = vmatprep.subr.mxu0 %v1856
    %2840 = vmatpush1.msra.mxu0 %v1855
    %2841 = vmatprep.subr.mxu0 %v1859
    %2842 = vmatpush1.msra.mxu0 %v1858
    %2843 = vmatprep.subr.mxu0 %v1862
    %2844 = vmatpush1.msra.mxu0 %v1861
    %2845 = vmatprep.subr.mxu0 %v1865
    %2846 = vmatpush1.msra.mxu0 %v1864
    %2847 = vmatprep.subr.mxu0 %v1868
    %2848 = vmatpush1.msra.mxu0 %v1867
    %2849 = vmatprep.subr.mxu0 %v1871
    %2850 = vmatpush1.msra.mxu0 %v1870
    %2851 = vmatprep.subr.mxu0 %v1874
    %2852 = vmatpush1.msra.mxu0 %v1873
    %2853 = vmatprep.subr.mxu0 %v1877
    %2854 = vmatpush1.msra.mxu0 %v1876
    %2855 = vmatprep.subr.mxu0 %v1880
    %2856 = vmatpush1.msra.mxu0 %v1879
    %2857 = vmatprep.subr.mxu0 0.0
    %2858 = vmatpush1.msra.mxu0 0.0
    %2859 = vmatprep.subr.mxu0 0.0
    %2860 = vmatpush1.msra.mxu0 0.0
    %2861 = vmatprep.subr.mxu0 0.0
    %2862 = vmatpush1.msra.mxu0 0.0
    %2863 = vmatprep.subr.mxu0 0.0
    %2864 = vmatpush1.msra.mxu0 0.0
    %2865 = vmatprep.subr.mxu0 0.0
    %2866 = vmatpush1.msra.mxu0 0.0
    %2867 = vmatprep.subr.mxu0 0.0
    %2868 = vmatpush1.msra.mxu0 0.0
    %2869 = vmatprep.subr.mxu0 0.0
    %2870 = vmatpush1.msra.mxu0 0.0
    %2871 = vmatprep.subr.mxu0 0.0
    %2872 = vmatpush1.msra.mxu0 0.0
    %2873 = vmatprep.subr.mxu0 0.0
    %2874 = vmatpush1.msra.mxu0 0.0
    %2875 = vmatprep.subr.mxu0 0.0
    %2876 = vmatpush1.msra.mxu0 0.0
    %2877 = vmatprep.subr.mxu0 0.0
    %2878 = vmatpush1.msra.mxu0 0.0
    %2879 = vmatprep.subr.mxu0 0.0
    %2880 = vmatpush1.msra.mxu0 0.0
    %2881 = vmatprep.subr.mxu0 0.0
    %2882 = vmatpush1.msra.mxu0 0.0
    %2883 = vmatprep.subr.mxu0 0.0
    %2884 = vmatpush1.msra.mxu0 0.0
    %2885 = vmatprep.subr.mxu0 0.0
    %2886 = vmatpush1.msra.mxu0 0.0
    %2887 = vmatprep.subr.mxu0 0.0
    %2888 = vmatpush1.msra.mxu0 0.0
    %2889 = vmatprep.mubr.f32.mxu0 0.0
    %2890 = vmatmul.mubr.f32.gmra.mrb[0].mxu0 %v2820
    %v2891 = vpop.f32.mrb[0].mxu0
    %v2892 = vadd.f32 %v2149, %v2891
    %v2893 = vpop.f32.mrb[0].mxu0
    %v2894 = vadd.f32 %v2153, %v2893
    %2895 = vdwg.mxu0
    %2896 = vmatprep.subr.mxu0 0.0
    %2897 = vmatpush1.msra.mxu0 %v1836
    %2898 = vmatprep.subr.mxu0 0.0
    %2899 = vmatpush1.msra.mxu0 %v1839
    %2900 = vmatprep.subr.mxu0 0.0
    %2901 = vmatpush1.msra.mxu0 %v1842
    %2902 = vmatprep.subr.mxu0 0.0
    %2903 = vmatpush1.msra.mxu0 %v1845
    %2904 = vmatprep.subr.mxu0 0.0
    %2905 = vmatpush1.msra.mxu0 %v1848
    %2906 = vmatprep.subr.mxu0 0.0
    %2907 = vmatpush1.msra.mxu0 %v1851
    %2908 = vmatprep.subr.mxu0 0.0
    %2909 = vmatpush1.msra.mxu0 %v1854
    %2910 = vmatprep.subr.mxu0 0.0
    %2911 = vmatpush1.msra.mxu0 %v1857
    %2912 = vmatprep.subr.mxu0 0.0
    %2913 = vmatpush1.msra.mxu0 %v1860
    %2914 = vmatprep.subr.mxu0 0.0
    %2915 = vmatpush1.msra.mxu0 %v1863
    %2916 = vmatprep.subr.mxu0 0.0
    %2917 = vmatpush1.msra.mxu0 %v1866
    %2918 = vmatprep.subr.mxu0 0.0
    %2919 = vmatpush1.msra.mxu0 %v1869
    %2920 = vmatprep.subr.mxu0 0.0
    %2921 = vmatpush1.msra.mxu0 %v1872
    %2922 = vmatprep.subr.mxu0 0.0
    %2923 = vmatpush1.msra.mxu0 %v1875
    %2924 = vmatprep.subr.mxu0 0.0
    %2925 = vmatpush1.msra.mxu0 %v1878
    %2926 = vmatprep.subr.mxu0 0.0
    %2927 = vmatpush1.msra.mxu0 %v1881
    %2928 = vmatprep.subr.mxu0 0.0
    %2929 = vmatpush1.msra.mxu0 0.0
    %2930 = vmatprep.subr.mxu0 0.0
    %2931 = vmatpush1.msra.mxu0 0.0
    %2932 = vmatprep.subr.mxu0 0.0
    %2933 = vmatpush1.msra.mxu0 0.0
    %2934 = vmatprep.subr.mxu0 0.0
    %2935 = vmatpush1.msra.mxu0 0.0
    %2936 = vmatprep.subr.mxu0 0.0
    %2937 = vmatpush1.msra.mxu0 0.0
    %2938 = vmatprep.subr.mxu0 0.0
    %2939 = vmatpush1.msra.mxu0 0.0
    %2940 = vmatprep.subr.mxu0 0.0
    %2941 = vmatpush1.msra.mxu0 0.0
    %2942 = vmatprep.subr.mxu0 0.0
    %2943 = vmatpush1.msra.mxu0 0.0
    %2944 = vmatprep.subr.mxu0 0.0
    %2945 = vmatpush1.msra.mxu0 0.0
    %2946 = vmatprep.subr.mxu0 0.0
    %2947 = vmatpush1.msra.mxu0 0.0
    %2948 = vmatprep.subr.mxu0 0.0
    %2949 = vmatpush1.msra.mxu0 0.0
    %2950 = vmatprep.subr.mxu0 0.0
    %2951 = vmatpush1.msra.mxu0 0.0
    %2952 = vmatprep.subr.mxu0 0.0
    %2953 = vmatpush1.msra.mxu0 0.0
    %2954 = vmatprep.subr.mxu0 0.0
    %2955 = vmatpush1.msra.mxu0 0.0
    %2956 = vmatprep.subr.mxu0 0.0
    %2957 = vmatpush1.msra.mxu0 0.0
    %2958 = vmatprep.subr.mxu0 0.0
    %2959 = vmatpush1.msra.mxu0 0.0
    %2960 = vmatprep.mubr.f32.mxu0 0.0
    %2961 = vmatmul.mubr.f32.gmra.mrb[0].mxu0 %v2820
    %v2962 = vpop.f32.mrb[0].mxu0
    %v2963 = vadd.f32 %v2157, %v2962
    %v2964 = vpop.f32.mrb[0].mxu0
    %2965 = vdwg.mxu0
    %v2966 = vadd.f32 %v2822, %v2892
    %v2967 = vxor.u32 %v2966, 2147483648
    %v2968 = vmul.f32 %v2967, 1.442695
    %v2969 = vpow.pop %v2968
    %v2970 = vadd.f32 %v2969, 1.0
    %v2971 = vrcp.pop %v2970
    %v2972 = vmul.f32 1.0, %v2971
    %v2973 = vadd.f32 %v2823, %v2894
    %v2974 = vxor.u32 %v2973, 2147483648
    %v2975 = vmul.f32 %v2974, 1.442695
    %v2976 = vpow.pop %v2975
    %v2977 = vadd.f32 %v2976, 1.0
    %v2978 = vrcp.pop %v2977
    %v2979 = vmul.f32 1.0, %v2978
    %v2980 = vmul.f32 %v2972, %v2963
    %v2981 = vadd.f32 %v2824, %v2980
    %v2982 = vtanh.pop %v2981
    %v2983 = vsub.f32 1.0, %v2979
    %v2984 = vmul.f32 %v2983, %v2982
    %v2985 = vmul.f32 %v2979, %v2820
    %v2986 = vadd.f32 %v2984, %v2985
    %2987 = vst [vmem:[#allocation3 + $0x20] sm:$0xff] %v2986
    %v2988 = vld [vmem:[#allocation2 + $0x78] sm:$0xff]
    %v2989 = vld [vmem:[#allocation2 + $0x80] sm:$0xff]
    %v2990 = vld [vmem:[#allocation2 + $0x88] sm:$0xff]
    %2991 = vmatprep.subr.mxu0 %v1835
    %2992 = vmatpush1.msra.mxu0 %v1834
    %2993 = vmatprep.subr.mxu0 %v1838
    %2994 = vmatpush1.msra.mxu0 %v1837
    %2995 = vmatprep.subr.mxu0 %v1841
    %2996 = vmatpush1.msra.mxu0 %v1840
    %2997 = vmatprep.subr.mxu0 %v1844
    %2998 = vmatpush1.msra.mxu0 %v1843
    %2999 = vmatprep.subr.mxu0 %v1847
    %3000 = vmatpush1.msra.mxu0 %v1846
    %3001 = vmatprep.subr.mxu0 %v1850
    %3002 = vmatpush1.msra.mxu0 %v1849
    %3003 = vmatprep.subr.mxu0 %v1853
    %3004 = vmatpush1.msra.mxu0 %v1852
    %3005 = vmatprep.subr.mxu0 %v1856
    %3006 = vmatpush1.msra.mxu0 %v1855
    %3007 = vmatprep.subr.mxu0 %v1859
    %3008 = vmatpush1.msra.mxu0 %v1858
    %3009 = vmatprep.subr.mxu0 %v1862
    %3010 = vmatpush1.msra.mxu0 %v1861
    %3011 = vmatprep.subr.mxu0 %v1865
    %3012 = vmatpush1.msra.mxu0 %v1864
    %3013 = vmatprep.subr.mxu0 %v1868
    %3014 = vmatpush1.msra.mxu0 %v1867
    %3015 = vmatprep.subr.mxu0 %v1871
    %3016 = vmatpush1.msra.mxu0 %v1870
    %3017 = vmatprep.subr.mxu0 %v1874
    %3018 = vmatpush1.msra.mxu0 %v1873
    %3019 = vmatprep.subr.mxu0 %v1877
    %3020 = vmatpush1.msra.mxu0 %v1876
    %3021 = vmatprep.subr.mxu0 %v1880
    %3022 = vmatpush1.msra.mxu0 %v1879
    %3023 = vmatprep.subr.mxu0 0.0
    %3024 = vmatpush1.msra.mxu0 0.0
    %3025 = vmatprep.subr.mxu0 0.0
    %3026 = vmatpush1.msra.mxu0 0.0
    %3027 = vmatprep.subr.mxu0 0.0
    %3028 = vmatpush1.msra.mxu0 0.0
    %3029 = vmatprep.subr.mxu0 0.0
    %3030 = vmatpush1.msra.mxu0 0.0
    %3031 = vmatprep.subr.mxu0 0.0
    %3032 = vmatpush1.msra.mxu0 0.0
    %3033 = vmatprep.subr.mxu0 0.0
    %3034 = vmatpush1.msra.mxu0 0.0
    %3035 = vmatprep.subr.mxu0 0.0
    %3036 = vmatpush1.msra.mxu0 0.0
    %3037 = vmatprep.subr.mxu0 0.0
    %3038 = vmatpush1.msra.mxu0 0.0
    %3039 = vmatprep.subr.mxu0 0.0
    %3040 = vmatpush1.msra.mxu0 0.0
    %3041 = vmatprep.subr.mxu0 0.0
    %3042 = vmatpush1.msra.mxu0 0.0
    %3043 = vmatprep.subr.mxu0 0.0
    %3044 = vmatpush1.msra.mxu0 0.0
    %3045 = vmatprep.subr.mxu0 0.0
    %3046 = vmatpush1.msra.mxu0 0.0
    %3047 = vmatprep.subr.mxu0 0.0
    %3048 = vmatpush1.msra.mxu0 0.0
    %3049 = vmatprep.subr.mxu0 0.0
    %3050 = vmatpush1.msra.mxu0 0.0
    %3051 = vmatprep.subr.mxu0 0.0
    %3052 = vmatpush1.msra.mxu0 0.0
    %3053 = vmatprep.subr.mxu0 0.0
    %3054 = vmatpush1.msra.mxu0 0.0
    %3055 = vmatprep.mubr.f32.mxu0 0.0
    %3056 = vmatmul.mubr.f32.gmra.mrb[0].mxu0 %v2986
    %v3057 = vpop.f32.mrb[0].mxu0
    %v3058 = vadd.f32 %v2149, %v3057
    %v3059 = vpop.f32.mrb[0].mxu0
    %v3060 = vadd.f32 %v2153, %v3059
    %3061 = vdwg.mxu0
    %3062 = vmatprep.subr.mxu0 0.0
    %3063 = vmatpush1.msra.mxu0 %v1836
    %3064 = vmatprep.subr.mxu0 0.0
    %3065 = vmatpush1.msra.mxu0 %v1839
    %3066 = vmatprep.subr.mxu0 0.0
    %3067 = vmatpush1.msra.mxu0 %v1842
    %3068 = vmatprep.subr.mxu0 0.0
    %3069 = vmatpush1.msra.mxu0 %v1845
    %3070 = vmatprep.subr.mxu0 0.0
    %3071 = vmatpush1.msra.mxu0 %v1848
    %3072 = vmatprep.subr.mxu0 0.0
    %3073 = vmatpush1.msra.mxu0 %v1851
    %3074 = vmatprep.subr.mxu0 0.0
    %3075 = vmatpush1.msra.mxu0 %v1854
    %3076 = vmatprep.subr.mxu0 0.0
    %3077 = vmatpush1.msra.mxu0 %v1857
    %3078 = vmatprep.subr.mxu0 0.0
    %3079 = vmatpush1.msra.mxu0 %v1860
    %3080 = vmatprep.subr.mxu0 0.0
    %3081 = vmatpush1.msra.mxu0 %v1863
    %3082 = vmatprep.subr.mxu0 0.0
    %3083 = vmatpush1.msra.mxu0 %v1866
    %3084 = vmatprep.subr.mxu0 0.0
    %3085 = vmatpush1.msra.mxu0 %v1869
    %3086 = vmatprep.subr.mxu0 0.0
    %3087 = vmatpush1.msra.mxu0 %v1872
    %3088 = vmatprep.subr.mxu0 0.0
    %3089 = vmatpush1.msra.mxu0 %v1875
    %3090 = vmatprep.subr.mxu0 0.0
    %3091 = vmatpush1.msra.mxu0 %v1878
    %3092 = vmatprep.subr.mxu0 0.0
    %3093 = vmatpush1.msra.mxu0 %v1881
    %3094 = vmatprep.subr.mxu0 0.0
    %3095 = vmatpush1.msra.mxu0 0.0
    %3096 = vmatprep.subr.mxu0 0.0
    %3097 = vmatpush1.msra.mxu0 0.0
    %3098 = vmatprep.subr.mxu0 0.0
    %3099 = vmatpush1.msra.mxu0 0.0
    %3100 = vmatprep.subr.mxu0 0.0
    %3101 = vmatpush1.msra.mxu0 0.0
    %3102 = vmatprep.subr.mxu0 0.0
    %3103 = vmatpush1.msra.mxu0 0.0
    %3104 = vmatprep.subr.mxu0 0.0
    %3105 = vmatpush1.msra.mxu0 0.0
    %3106 = vmatprep.subr.mxu0 0.0
    %3107 = vmatpush1.msra.mxu0 0.0
    %3108 = vmatprep.subr.mxu0 0.0
    %3109 = vmatpush1.msra.mxu0 0.0
    %3110 = vmatprep.subr.mxu0 0.0
    %3111 = vmatpush1.msra.mxu0 0.0
    %3112 = vmatprep.subr.mxu0 0.0
    %3113 = vmatpush1.msra.mxu0 0.0
    %3114 = vmatprep.subr.mxu0 0.0
    %3115 = vmatpush1.msra.mxu0 0.0
    %3116 = vmatprep.subr.mxu0 0.0
    %3117 = vmatpush1.msra.mxu0 0.0
    %3118 = vmatprep.subr.mxu0 0.0
    %3119 = vmatpush1.msra.mxu0 0.0
    %3120 = vmatprep.subr.mxu0 0.0
    %3121 = vmatpush1.msra.mxu0 0.0
    %3122 = vmatprep.subr.mxu0 0.0
    %3123 = vmatpush1.msra.mxu0 0.0
    %3124 = vmatprep.subr.mxu0 0.0
    %3125 = vmatpush1.msra.mxu0 0.0
    %3126 = vmatprep.mubr.f32.mxu0 0.0
    %3127 = vmatmul.mubr.f32.gmra.mrb[0].mxu0 %v2986
    %v3128 = vpop.f32.mrb[0].mxu0
    %v3129 = vadd.f32 %v2157, %v3128
    %v3130 = vpop.f32.mrb[0].mxu0
    %3131 = vdwg.mxu0
    %v3132 = vadd.f32 %v2988, %v3058
    %v3133 = vxor.u32 %v3132, 2147483648
    %v3134 = vmul.f32 %v3133, 1.442695
    %v3135 = vpow.pop %v3134
    %v3136 = vadd.f32 %v3135, 1.0
    %v3137 = vrcp.pop %v3136
    %v3138 = vmul.f32 1.0, %v3137
    %v3139 = vadd.f32 %v2989, %v3060
    %v3140 = vxor.u32 %v3139, 2147483648
    %v3141 = vmul.f32 %v3140, 1.442695
    %v3142 = vpow.pop %v3141
    %v3143 = vadd.f32 %v3142, 1.0
    %v3144 = vrcp.pop %v3143
    %v3145 = vmul.f32 1.0, %v3144
    %v3146 = vmul.f32 %v3138, %v3129
    %v3147 = vadd.f32 %v2990, %v3146
    %v3148 = vtanh.pop %v3147
    %v3149 = vsub.f32 1.0, %v3145
    %v3150 = vmul.f32 %v3149, %v3148
    %v3151 = vmul.f32 %v3145, %v2986
    %v3152 = vadd.f32 %v3150, %v3151
    %3153 = vst [vmem:[#allocation3 + $0x28] sm:$0xff] %v3152
    %v3154 = vld [vmem:[#allocation2 + $0x90] sm:$0xff]
    %v3155 = vld [vmem:[#allocation2 + $0x98] sm:$0xff]
    %v3156 = vld [vmem:[#allocation2 + $0xa0] sm:$0xff]
    %3157 = vmatprep.subr.mxu0 %v1835
    %3158 = vmatpush1.msra.mxu0 %v1834
    %3159 = vmatprep.subr.mxu0 %v1838
    %3160 = vmatpush1.msra.mxu0 %v1837
    %3161 = vmatprep.subr.mxu0 %v1841
    %3162 = vmatpush1.msra.mxu0 %v1840
    %3163 = vmatprep.subr.mxu0 %v1844
    %3164 = vmatpush1.msra.mxu0 %v1843
    %3165 = vmatprep.subr.mxu0 %v1847
    %3166 = vmatpush1.msra.mxu0 %v1846
    %3167 = vmatprep.subr.mxu0 %v1850
    %3168 = vmatpush1.msra.mxu0 %v1849
    %3169 = vmatprep.subr.mxu0 %v1853
    %3170 = vmatpush1.msra.mxu0 %v1852
    %3171 = vmatprep.subr.mxu0 %v1856
    %3172 = vmatpush1.msra.mxu0 %v1855
    %3173 = vmatprep.subr.mxu0 %v1859
    %3174 = vmatpush1.msra.mxu0 %v1858
    %3175 = vmatprep.subr.mxu0 %v1862
    %3176 = vmatpush1.msra.mxu0 %v1861
    %3177 = vmatprep.subr.mxu0 %v1865
    %3178 = vmatpush1.msra.mxu0 %v1864
    %3179 = vmatprep.subr.mxu0 %v1868
    %3180 = vmatpush1.msra.mxu0 %v1867
    %3181 = vmatprep.subr.mxu0 %v1871
    %3182 = vmatpush1.msra.mxu0 %v1870
    %3183 = vmatprep.subr.mxu0 %v1874
    %3184 = vmatpush1.msra.mxu0 %v1873
    %3185 = vmatprep.subr.mxu0 %v1877
    %3186 = vmatpush1.msra.mxu0 %v1876
    %3187 = vmatprep.subr.mxu0 %v1880
    %3188 = vmatpush1.msra.mxu0 %v1879
    %3189 = vmatprep.subr.mxu0 0.0
    %3190 = vmatpush1.msra.mxu0 0.0
    %3191 = vmatprep.subr.mxu0 0.0
    %3192 = vmatpush1.msra.mxu0 0.0
    %3193 = vmatprep.subr.mxu0 0.0
    %3194 = vmatpush1.msra.mxu0 0.0
    %3195 = vmatprep.subr.mxu0 0.0
    %3196 = vmatpush1.msra.mxu0 0.0
    %3197 = vmatprep.subr.mxu0 0.0
    %3198 = vmatpush1.msra.mxu0 0.0
    %3199 = vmatprep.subr.mxu0 0.0
    %3200 = vmatpush1.msra.mxu0 0.0
    %3201 = vmatprep.subr.mxu0 0.0
    %3202 = vmatpush1.msra.mxu0 0.0
    %3203 = vmatprep.subr.mxu0 0.0
    %3204 = vmatpush1.msra.mxu0 0.0
    %3205 = vmatprep.subr.mxu0 0.0
    %3206 = vmatpush1.msra.mxu0 0.0
    %3207 = vmatprep.subr.mxu0 0.0
    %3208 = vmatpush1.msra.mxu0 0.0
    %3209 = vmatprep.subr.mxu0 0.0
    %3210 = vmatpush1.msra.mxu0 0.0
    %3211 = vmatprep.subr.mxu0 0.0
    %3212 = vmatpush1.msra.mxu0 0.0
    %3213 = vmatprep.subr.mxu0 0.0
    %3214 = vmatpush1.msra.mxu0 0.0
    %3215 = vmatprep.subr.mxu0 0.0
    %3216 = vmatpush1.msra.mxu0 0.0
    %3217 = vmatprep.subr.mxu0 0.0
    %3218 = vmatpush1.msra.mxu0 0.0
    %3219 = vmatprep.subr.mxu0 0.0
    %3220 = vmatpush1.msra.mxu0 0.0
    %3221 = vmatprep.mubr.f32.mxu0 0.0
    %3222 = vmatmul.mubr.f32.gmra.mrb[0].mxu0 %v3152
    %v3223 = vpop.f32.mrb[0].mxu0
    %v3224 = vadd.f32 %v2149, %v3223
    %v3225 = vpop.f32.mrb[0].mxu0
    %v3226 = vadd.f32 %v2153, %v3225
    %3227 = vdwg.mxu0
    %3228 = vmatprep.subr.mxu0 0.0
    %3229 = vmatpush1.msra.mxu0 %v1836
    %3230 = vmatprep.subr.mxu0 0.0
    %3231 = vmatpush1.msra.mxu0 %v1839
    %3232 = vmatprep.subr.mxu0 0.0
    %3233 = vmatpush1.msra.mxu0 %v1842
    %3234 = vmatprep.subr.mxu0 0.0
    %3235 = vmatpush1.msra.mxu0 %v1845
    %3236 = vmatprep.subr.mxu0 0.0
    %3237 = vmatpush1.msra.mxu0 %v1848
    %3238 = vmatprep.subr.mxu0 0.0
    %3239 = vmatpush1.msra.mxu0 %v1851
    %3240 = vmatprep.subr.mxu0 0.0
    %3241 = vmatpush1.msra.mxu0 %v1854
    %3242 = vmatprep.subr.mxu0 0.0
    %3243 = vmatpush1.msra.mxu0 %v1857
    %3244 = vmatprep.subr.mxu0 0.0
    %3245 = vmatpush1.msra.mxu0 %v1860
    %3246 = vmatprep.subr.mxu0 0.0
    %3247 = vmatpush1.msra.mxu0 %v1863
    %3248 = vmatprep.subr.mxu0 0.0
    %3249 = vmatpush1.msra.mxu0 %v1866
    %3250 = vmatprep.subr.mxu0 0.0
    %3251 = vmatpush1.msra.mxu0 %v1869
    %3252 = vmatprep.subr.mxu0 0.0
    %3253 = vmatpush1.msra.mxu0 %v1872
    %3254 = vmatprep.subr.mxu0 0.0
    %3255 = vmatpush1.msra.mxu0 %v1875
    %3256 = vmatprep.subr.mxu0 0.0
    %3257 = vmatpush1.msra.mxu0 %v1878
    %3258 = vmatprep.subr.mxu0 0.0
    %3259 = vmatpush1.msra.mxu0 %v1881
    %3260 = vmatprep.subr.mxu0 0.0
    %3261 = vmatpush1.msra.mxu0 0.0
    %3262 = vmatprep.subr.mxu0 0.0
    %3263 = vmatpush1.msra.mxu0 0.0
    %3264 = vmatprep.subr.mxu0 0.0
    %3265 = vmatpush1.msra.mxu0 0.0
    %3266 = vmatprep.subr.mxu0 0.0
    %3267 = vmatpush1.msra.mxu0 0.0
    %3268 = vmatprep.subr.mxu0 0.0
    %3269 = vmatpush1.msra.mxu0 0.0
    %3270 = vmatprep.subr.mxu0 0.0
    %3271 = vmatpush1.msra.mxu0 0.0
    %3272 = vmatprep.subr.mxu0 0.0
    %3273 = vmatpush1.msra.mxu0 0.0
    %3274 = vmatprep.subr.mxu0 0.0
    %3275 = vmatpush1.msra.mxu0 0.0
    %3276 = vmatprep.subr.mxu0 0.0
    %3277 = vmatpush1.msra.mxu0 0.0
    %3278 = vmatprep.subr.mxu0 0.0
    %3279 = vmatpush1.msra.mxu0 0.0
    %3280 = vmatprep.subr.mxu0 0.0
    %3281 = vmatpush1.msra.mxu0 0.0
    %3282 = vmatprep.subr.mxu0 0.0
    %3283 = vmatpush1.msra.mxu0 0.0
    %3284 = vmatprep.subr.mxu0 0.0
    %3285 = vmatpush1.msra.mxu0 0.0
    %3286 = vmatprep.subr.mxu0 0.0
    %3287 = vmatpush1.msra.mxu0 0.0
    %3288 = vmatprep.subr.mxu0 0.0
    %3289 = vmatpush1.msra.mxu0 0.0
    %3290 = vmatprep.subr.mxu0 0.0
    %3291 = vmatpush1.msra.mxu0 0.0
    %3292 = vmatprep.mubr.f32.mxu0 0.0
    %3293 = vmatmul.mubr.f32.gmra.mrb[0].mxu0 %v3152
    %v3294 = vpop.f32.mrb[0].mxu0
    %v3295 = vadd.f32 %v2157, %v3294
    %v3296 = vpop.f32.mrb[0].mxu0
    %3297 = vdwg.mxu0
    %v3298 = vadd.f32 %v3154, %v3224
    %v3299 = vxor.u32 %v3298, 2147483648
    %v3300 = vmul.f32 %v3299, 1.442695
    %v3301 = vpow.pop %v3300
    %v3302 = vadd.f32 %v3301, 1.0
    %v3303 = vrcp.pop %v3302
    %v3304 = vmul.f32 1.0, %v3303
    %v3305 = vadd.f32 %v3155, %v3226
    %v3306 = vxor.u32 %v3305, 2147483648
    %v3307 = vmul.f32 %v3306, 1.442695
    %v3308 = vpow.pop %v3307
    %v3309 = vadd.f32 %v3308, 1.0
    %v3310 = vrcp.pop %v3309
    %v3311 = vmul.f32 1.0, %v3310
    %v3312 = vmul.f32 %v3304, %v3295
    %v3313 = vadd.f32 %v3156, %v3312
    %v3314 = vtanh.pop %v3313
    %v3315 = vsub.f32 1.0, %v3311
    %v3316 = vmul.f32 %v3315, %v3314
    %v3317 = vmul.f32 %v3311, %v3152
    %v3318 = vadd.f32 %v3316, %v3317
    %3319 = vst [vmem:[#allocation3 + $0x30] sm:$0xff] %v3318
    %v3320 = vld [vmem:[#allocation2 + $0xa8] sm:$0xff]
    %v3321 = vld [vmem:[#allocation2 + $0xb0] sm:$0xff]
    %v3322 = vld [vmem:[#allocation2 + $0xb8] sm:$0xff]
    %3323 = vmatprep.subr.mxu0 %v1835
    %3324 = vmatpush1.msra.mxu0 %v1834
    %3325 = vmatprep.subr.mxu0 %v1838
    %3326 = vmatpush1.msra.mxu0 %v1837
    %3327 = vmatprep.subr.mxu0 %v1841
    %3328 = vmatpush1.msra.mxu0 %v1840
    %3329 = vmatprep.subr.mxu0 %v1844
    %3330 = vmatpush1.msra.mxu0 %v1843
    %3331 = vmatprep.subr.mxu0 %v1847
    %3332 = vmatpush1.msra.mxu0 %v1846
    %3333 = vmatprep.subr.mxu0 %v1850
    %3334 = vmatpush1.msra.mxu0 %v1849
    %3335 = vmatprep.subr.mxu0 %v1853
    %3336 = vmatpush1.msra.mxu0 %v1852
    %3337 = vmatprep.subr.mxu0 %v1856
    %3338 = vmatpush1.msra.mxu0 %v1855
    %3339 = vmatprep.subr.mxu0 %v1859
    %3340 = vmatpush1.msra.mxu0 %v1858
    %3341 = vmatprep.subr.mxu0 %v1862
    %3342 = vmatpush1.msra.mxu0 %v1861
    %3343 = vmatprep.subr.mxu0 %v1865
    %3344 = vmatpush1.msra.mxu0 %v1864
    %3345 = vmatprep.subr.mxu0 %v1868
    %3346 = vmatpush1.msra.mxu0 %v1867
    %3347 = vmatprep.subr.mxu0 %v1871
    %3348 = vmatpush1.msra.mxu0 %v1870
    %3349 = vmatprep.subr.mxu0 %v1874
    %3350 = vmatpush1.msra.mxu0 %v1873
    %3351 = vmatprep.subr.mxu0 %v1877
    %3352 = vmatpush1.msra.mxu0 %v1876
    %3353 = vmatprep.subr.mxu0 %v1880
    %3354 = vmatpush1.msra.mxu0 %v1879
    %3355 = vmatprep.subr.mxu0 0.0
    %3356 = vmatpush1.msra.mxu0 0.0
    %3357 = vmatprep.subr.mxu0 0.0
    %3358 = vmatpush1.msra.mxu0 0.0
    %3359 = vmatprep.subr.mxu0 0.0
    %3360 = vmatpush1.msra.mxu0 0.0
    %3361 = vmatprep.subr.mxu0 0.0
    %3362 = vmatpush1.msra.mxu0 0.0
    %3363 = vmatprep.subr.mxu0 0.0
    %3364 = vmatpush1.msra.mxu0 0.0
    %3365 = vmatprep.subr.mxu0 0.0
    %3366 = vmatpush1.msra.mxu0 0.0
    %3367 = vmatprep.subr.mxu0 0.0
    %3368 = vmatpush1.msra.mxu0 0.0
    %3369 = vmatprep.subr.mxu0 0.0
    %3370 = vmatpush1.msra.mxu0 0.0
    %3371 = vmatprep.subr.mxu0 0.0
    %3372 = vmatpush1.msra.mxu0 0.0
    %3373 = vmatprep.subr.mxu0 0.0
    %3374 = vmatpush1.msra.mxu0 0.0
    %3375 = vmatprep.subr.mxu0 0.0
    %3376 = vmatpush1.msra.mxu0 0.0
    %3377 = vmatprep.subr.mxu0 0.0
    %3378 = vmatpush1.msra.mxu0 0.0
    %3379 = vmatprep.subr.mxu0 0.0
    %3380 = vmatpush1.msra.mxu0 0.0
    %3381 = vmatprep.subr.mxu0 0.0
    %3382 = vmatpush1.msra.mxu0 0.0
    %3383 = vmatprep.subr.mxu0 0.0
    %3384 = vmatpush1.msra.mxu0 0.0
    %3385 = vmatprep.subr.mxu0 0.0
    %3386 = vmatpush1.msra.mxu0 0.0
    %3387 = vmatprep.mubr.f32.mxu0 0.0
    %3388 = vmatmul.mubr.f32.gmra.mrb[0].mxu0 %v3318
    %v3389 = vpop.f32.mrb[0].mxu0
    %v3390 = vadd.f32 %v2149, %v3389
    %v3391 = vpop.f32.mrb[0].mxu0
    %v3392 = vadd.f32 %v2153, %v3391
    %3393 = vdwg.mxu0
    %3394 = vmatprep.subr.mxu0 0.0
    %3395 = vmatpush1.msra.mxu0 %v1836
    %3396 = vmatprep.subr.mxu0 0.0
    %3397 = vmatpush1.msra.mxu0 %v1839
    %3398 = vmatprep.subr.mxu0 0.0
    %3399 = vmatpush1.msra.mxu0 %v1842
    %3400 = vmatprep.subr.mxu0 0.0
    %3401 = vmatpush1.msra.mxu0 %v1845
    %3402 = vmatprep.subr.mxu0 0.0
    %3403 = vmatpush1.msra.mxu0 %v1848
    %3404 = vmatprep.subr.mxu0 0.0
    %3405 = vmatpush1.msra.mxu0 %v1851
    %3406 = vmatprep.subr.mxu0 0.0
    %3407 = vmatpush1.msra.mxu0 %v1854
    %3408 = vmatprep.subr.mxu0 0.0
    %3409 = vmatpush1.msra.mxu0 %v1857
    %3410 = vmatprep.subr.mxu0 0.0
    %3411 = vmatpush1.msra.mxu0 %v1860
    %3412 = vmatprep.subr.mxu0 0.0
    %3413 = vmatpush1.msra.mxu0 %v1863
    %3414 = vmatprep.subr.mxu0 0.0
    %3415 = vmatpush1.msra.mxu0 %v1866
    %3416 = vmatprep.subr.mxu0 0.0
    %3417 = vmatpush1.msra.mxu0 %v1869
    %3418 = vmatprep.subr.mxu0 0.0
    %3419 = vmatpush1.msra.mxu0 %v1872
    %3420 = vmatprep.subr.mxu0 0.0
    %3421 = vmatpush1.msra.mxu0 %v1875
    %3422 = vmatprep.subr.mxu0 0.0
    %3423 = vmatpush1.msra.mxu0 %v1878
    %3424 = vmatprep.subr.mxu0 0.0
    %3425 = vmatpush1.msra.mxu0 %v1881
    %3426 = vmatprep.subr.mxu0 0.0
    %3427 = vmatpush1.msra.mxu0 0.0
    %3428 = vmatprep.subr.mxu0 0.0
    %3429 = vmatpush1.msra.mxu0 0.0
    %3430 = vmatprep.subr.mxu0 0.0
    %3431 = vmatpush1.msra.mxu0 0.0
    %3432 = vmatprep.subr.mxu0 0.0
    %3433 = vmatpush1.msra.mxu0 0.0
    %3434 = vmatprep.subr.mxu0 0.0
    %3435 = vmatpush1.msra.mxu0 0.0
    %3436 = vmatprep.subr.mxu0 0.0
    %3437 = vmatpush1.msra.mxu0 0.0
    %3438 = vmatprep.subr.mxu0 0.0
    %3439 = vmatpush1.msra.mxu0 0.0
    %3440 = vmatprep.subr.mxu0 0.0
    %3441 = vmatpush1.msra.mxu0 0.0
    %3442 = vmatprep.subr.mxu0 0.0
    %3443 = vmatpush1.msra.mxu0 0.0
    %3444 = vmatprep.subr.mxu0 0.0
    %3445 = vmatpush1.msra.mxu0 0.0
    %3446 = vmatprep.subr.mxu0 0.0
    %3447 = vmatpush1.msra.mxu0 0.0
    %3448 = vmatprep.subr.mxu0 0.0
    %3449 = vmatpush1.msra.mxu0 0.0
    %3450 = vmatprep.subr.mxu0 0.0
    %3451 = vmatpush1.msra.mxu0 0.0
    %3452 = vmatprep.subr.mxu0 0.0
    %3453 = vmatpush1.msra.mxu0 0.0
    %3454 = vmatprep.subr.mxu0 0.0
    %3455 = vmatpush1.msra.mxu0 0.0
    %3456 = vmatprep.subr.mxu0 0.0
    %3457 = vmatpush1.msra.mxu0 0.0
    %3458 = vmatprep.mubr.f32.mxu0 0.0
    %3459 = vmatmul.mubr.f32.gmra.mrb[0].mxu0 %v3318
    %v3460 = vpop.f32.mrb[0].mxu0
    %v3461 = vadd.f32 %v2157, %v3460
    %v3462 = vpop.f32.mrb[0].mxu0
    %3463 = vdwg.mxu0
    %v3464 = vadd.f32 %v3320, %v3390
    %v3465 = vxor.u32 %v3464, 2147483648
    %v3466 = vmul.f32 %v3465, 1.442695
    %v3467 = vpow.pop %v3466
    %v3468 = vadd.f32 %v3467, 1.0
    %v3469 = vrcp.pop %v3468
    %v3470 = vmul.f32 1.0, %v3469
    %v3471 = vadd.f32 %v3321, %v3392
    %v3472 = vxor.u32 %v3471, 2147483648
    %v3473 = vmul.f32 %v3472, 1.442695
    %v3474 = vpow.pop %v3473
    %v3475 = vadd.f32 %v3474, 1.0
    %v3476 = vrcp.pop %v3475
    %v3477 = vmul.f32 1.0, %v3476
    %v3478 = vmul.f32 %v3470, %v3461
    %v3479 = vadd.f32 %v3322, %v3478
    %v3480 = vtanh.pop %v3479
    %v3481 = vsub.f32 1.0, %v3477
    %v3482 = vmul.f32 %v3481, %v3480
    %v3483 = vmul.f32 %v3477, %v3318
    %v3484 = vadd.f32 %v3482, %v3483
    %3485 = vst [vmem:[#allocation3 + $0x38] sm:$0xff] %v3484
    %v3486 = vld [vmem:[#allocation3] sm:$0xff]
    %v3487 = vld [vmem:[#allocation3 + $0x8] sm:$0xff]
    %v3488 = vld [vmem:[#allocation3 + $0x10] sm:$0xff]
    %v3489 = vld [vmem:[#allocation3 + $0x18] sm:$0xff]
    %v3490 = vld [vmem:[#allocation3 + $0x20] sm:$0xff]
    %v3491 = vld [vmem:[#allocation3 + $0x28] sm:$0xff]
    %v3492 = vld [vmem:[#allocation3 + $0x30] sm:$0xff]
    %v3493 = vld [vmem:[#allocation3 + $0x38] sm:$0xff]
    %v3494 = vld [vmem:[%s9] sm:$0xff]
    %v3495 = vld [vmem:[%s9 + $0x8] sm:$0xff]
    %v3496 = vld [vmem:[%s9 + $0x10] sm:$0xff]
    %v3497 = vld [vmem:[%s9 + $0x18] sm:$0xff]
    %v3498 = vld [vmem:[%s9 + $0x20] sm:$0xff]
    %v3499 = vld [vmem:[%s9 + $0x28] sm:$0xff]
    %v3500 = vld [vmem:[%s9 + $0x30] sm:$0xff]
    %v3501 = vld [vmem:[%s9 + $0x38] sm:$0xff]
    %v3502 = vld [vmem:[%s9 + $0x40] sm:$0xff]
    %v3503 = vld [vmem:[%s9 + $0x48] sm:$0xff]
    %v3504 = vld [vmem:[%s9 + $0x50] sm:$0xff]
    %v3505 = vld [vmem:[%s9 + $0x58] sm:$0xff]
    %v3506 = vld [vmem:[%s9 + $0x60] sm:$0xff]
    %v3507 = vld [vmem:[%s9 + $0x68] sm:$0xff]
    %v3508 = vld [vmem:[%s9 + $0x70] sm:$0xff]
    %v3509 = vld [vmem:[%s9 + $0x78] sm:$0xff]
    %v3510 = vld [vmem:[%s10] sm:$0x1]
    %v3512 = vlaneseq
    %v3513 = vshrl.u32 %v3512, 7
    %v3514 = vsub.s32 0, %v3513
    %v3515 = vrot.slane %v3510, %v3514
    %3517 = vmatprep.subr.mxu0 0.0
    %3518 = vmatpush1.msra.mxu0 %v3494
    %3519 = vmatprep.subr.mxu0 0.0
    %3520 = vmatpush1.msra.mxu0 %v3495
    %3521 = vmatprep.subr.mxu0 0.0
    %3522 = vmatpush1.msra.mxu0 %v3496
    %3523 = vmatprep.subr.mxu0 0.0
    %3524 = vmatpush1.msra.mxu0 %v3497
    %3525 = vmatprep.subr.mxu0 0.0
    %3526 = vmatpush1.msra.mxu0 %v3498
    %3527 = vmatprep.subr.mxu0 0.0
    %3528 = vmatpush1.msra.mxu0 %v3499
    %3529 = vmatprep.subr.mxu0 0.0
    %3530 = vmatpush1.msra.mxu0 %v3500
    %3531 = vmatprep.subr.mxu0 0.0
    %3532 = vmatpush1.msra.mxu0 %v3501
    %3533 = vmatprep.subr.mxu0 0.0
    %3534 = vmatpush1.msra.mxu0 %v3502
    %3535 = vmatprep.subr.mxu0 0.0
    %3536 = vmatpush1.msra.mxu0 %v3503
    %3537 = vmatprep.subr.mxu0 0.0
    %3538 = vmatpush1.msra.mxu0 %v3504
    %3539 = vmatprep.subr.mxu0 0.0
    %3540 = vmatpush1.msra.mxu0 %v3505
    %3541 = vmatprep.subr.mxu0 0.0
    %3542 = vmatpush1.msra.mxu0 %v3506
    %3543 = vmatprep.subr.mxu0 0.0
    %3544 = vmatpush1.msra.mxu0 %v3507
    %3545 = vmatprep.subr.mxu0 0.0
    %3546 = vmatpush1.msra.mxu0 %v3508
    %3547 = vmatprep.subr.mxu0 0.0
    %3548 = vmatpush1.msra.mxu0 %v3509
    %3549 = vmatprep.subr.mxu0 0.0
    %3550 = vmatpush1.msra.mxu0 0.0
    %3551 = vmatprep.subr.mxu0 0.0
    %3552 = vmatpush1.msra.mxu0 0.0
    %3553 = vmatprep.subr.mxu0 0.0
    %3554 = vmatpush1.msra.mxu0 0.0
    %3555 = vmatprep.subr.mxu0 0.0
    %3556 = vmatpush1.msra.mxu0 0.0
    %3557 = vmatprep.subr.mxu0 0.0
    %3558 = vmatpush1.msra.mxu0 0.0
    %3559 = vmatprep.subr.mxu0 0.0
    %3560 = vmatpush1.msra.mxu0 0.0
    %3561 = vmatprep.subr.mxu0 0.0
    %3562 = vmatpush1.msra.mxu0 0.0
    %3563 = vmatprep.subr.mxu0 0.0
    %3564 = vmatpush1.msra.mxu0 0.0
    %3565 = vmatprep.subr.mxu0 0.0
    %3566 = vmatpush1.msra.mxu0 0.0
    %3567 = vmatprep.subr.mxu0 0.0
    %3568 = vmatpush1.msra.mxu0 0.0
    %3569 = vmatprep.subr.mxu0 0.0
    %3570 = vmatpush1.msra.mxu0 0.0
    %3571 = vmatprep.subr.mxu0 0.0
    %3572 = vmatpush1.msra.mxu0 0.0
    %3573 = vmatprep.subr.mxu0 0.0
    %3574 = vmatpush1.msra.mxu0 0.0
    %3575 = vmatprep.subr.mxu0 0.0
    %3576 = vmatpush1.msra.mxu0 0.0
    %3577 = vmatprep.subr.mxu0 0.0
    %3578 = vmatpush1.msra.mxu0 0.0
    %3579 = vmatprep.subr.mxu0 0.0
    %3580 = vmatpush1.msra.mxu0 0.0
    %3581 = vmatprep.mubr.f32.mxu0 0.0
    %3582 = vmatmul.mubr.f32.gmra.mrb[0].mxu0 %v3486
    %v3583 = vpop.f32.mrb[0].mxu0
    %v3584 = vadd.f32 %v3515, %v3583
    %v3585 = vpop.f32.mrb[0].mxu0
    %3586 = vmatprep.mubr.f32.mxu0 0.0
    %3587 = vmatmul.mubr.f32.gmra.mrb[0].mxu0 %v3487
    %v3588 = vpop.f32.mrb[0].mxu0
    %v3589 = vadd.f32 %v3515, %v3588
    %v3590 = vpop.f32.mrb[0].mxu0
    %3591 = vmatprep.mubr.f32.mxu0 0.0
    %3592 = vmatmul.mubr.f32.gmra.mrb[0].mxu0 %v3488
    %v3593 = vpop.f32.mrb[0].mxu0
    %v3594 = vadd.f32 %v3515, %v3593
    %v3595 = vpop.f32.mrb[0].mxu0
    %3596 = vmatprep.mubr.f32.mxu0 0.0
    %3597 = vmatmul.mubr.f32.gmra.mrb[0].mxu0 %v3489
    %v3598 = vpop.f32.mrb[0].mxu0
    %v3599 = vadd.f32 %v3515, %v3598
    %v3600 = vpop.f32.mrb[0].mxu0
    %3601 = vmatprep.mubr.f32.mxu0 0.0
    %3602 = vmatmul.mubr.f32.gmra.mrb[0].mxu0 %v3490
    %v3603 = vpop.f32.mrb[0].mxu0
    %v3604 = vadd.f32 %v3515, %v3603
    %v3605 = vpop.f32.mrb[0].mxu0
    %3606 = vmatprep.mubr.f32.mxu0 0.0
    %3607 = vmatmul.mubr.f32.gmra.mrb[0].mxu0 %v3491
    %v3608 = vpop.f32.mrb[0].mxu0
    %v3609 = vadd.f32 %v3515, %v3608
    %v3610 = vpop.f32.mrb[0].mxu0
    %3611 = vmatprep.mubr.f32.mxu0 0.0
    %3612 = vmatmul.mubr.f32.gmra.mrb[0].mxu0 %v3492
    %v3613 = vpop.f32.mrb[0].mxu0
    %v3614 = vadd.f32 %v3515, %v3613
    %v3615 = vpop.f32.mrb[0].mxu0
    %3616 = vmatprep.mubr.f32.mxu0 0.0
    %3617 = vmatmul.mubr.f32.gmra.mrb[0].mxu0 %v3493
    %v3618 = vpop.f32.mrb[0].mxu0
    %v3619 = vadd.f32 %v3515, %v3618
    %v3620 = vpop.f32.mrb[0].mxu0
    %3621 = vdwg.mxu0
    %v3622 = vld [vmem:[%s11] sm:$0xff]
    %v3623 = vld [vmem:[%s11 + $0x8] sm:$0xff]
    %v3624 = vld [vmem:[#allocation4] sm:$0x1]
    %v3626 = vlaneseq
    %v3627 = vshrl.u32 %v3626, 7
    %v3628 = vsub.s32 0, %v3627
    %v3629 = vrot.slane %v3624, %v3628
    %v3632 = vsel %vm167, %v3584, 0
    %v3635 = vsel %vm167, %v3589, 0
    %v3638 = vsel %vm167, %v3594, 0
    %v3641 = vsel %vm167, %v3599, 0
    %v3644 = vsel %vm167, %v3604, 0
    %v3647 = vsel %vm167, %v3609, 0
    %v3650 = vsel %vm167, %v3614, 0
    %v3653 = vsel %vm167, %v3619, 0
    %3655 = vmatprep.subr.mxu0 0.0
    %3656 = vmatpush1.msra.mxu0 %v3622
    %3657 = vmatprep.subr.mxu0 0.0
    %3658 = vmatpush1.msra.mxu0 %v3623
    %3659 = vmatprep.subr.mxu0 0.0
    %3660 = vmatpush1.msra.mxu0 0.0
    %3661 = vmatprep.subr.mxu0 0.0
    %3662 = vmatpush1.msra.mxu0 0.0
    %3663 = vmatprep.subr.mxu0 0.0
    %3664 = vmatpush1.msra.mxu0 0.0
    %3665 = vmatprep.subr.mxu0 0.0
    %3666 = vmatpush1.msra.mxu0 0.0
    %3667 = vmatprep.subr.mxu0 0.0
    %3668 = vmatpush1.msra.mxu0 0.0
    %3669 = vmatprep.subr.mxu0 0.0
    %3670 = vmatpush1.msra.mxu0 0.0
    %3671 = vmatprep.subr.mxu0 0.0
    %3672 = vmatpush1.msra.mxu0 0.0
    %3673 = vmatprep.subr.mxu0 0.0
    %3674 = vmatpush1.msra.mxu0 0.0
    %3675 = vmatprep.subr.mxu0 0.0
    %3676 = vmatpush1.msra.mxu0 0.0
    %3677 = vmatprep.subr.mxu0 0.0
    %3678 = vmatpush1.msra.mxu0 0.0
    %3679 = vmatprep.subr.mxu0 0.0
    %3680 = vmatpush1.msra.mxu0 0.0
    %3681 = vmatprep.subr.mxu0 0.0
    %3682 = vmatpush1.msra.mxu0 0.0
    %3683 = vmatprep.subr.mxu0 0.0
    %3684 = vmatpush1.msra.mxu0 0.0
    %3685 = vmatprep.subr.mxu0 0.0
    %3686 = vmatpush1.msra.mxu0 0.0
    %3687 = vmatprep.subr.mxu0 0.0
    %3688 = vmatpush1.msra.mxu0 0.0
    %3689 = vmatprep.subr.mxu0 0.0
    %3690 = vmatpush1.msra.mxu0 0.0
    %3691 = vmatprep.subr.mxu0 0.0
    %3692 = vmatpush1.msra.mxu0 0.0
    %3693 = vmatprep.subr.mxu0 0.0
    %3694 = vmatpush1.msra.mxu0 0.0
    %3695 = vmatprep.subr.mxu0 0.0
    %3696 = vmatpush1.msra.mxu0 0.0
    %3697 = vmatprep.subr.mxu0 0.0
    %3698 = vmatpush1.msra.mxu0 0.0
    %3699 = vmatprep.subr.mxu0 0.0
    %3700 = vmatpush1.msra.mxu0 0.0
    %3701 = vmatprep.subr.mxu0 0.0
    %3702 = vmatpush1.msra.mxu0 0.0
    %3703 = vmatprep.subr.mxu0 0.0
    %3704 = vmatpush1.msra.mxu0 0.0
    %3705 = vmatprep.subr.mxu0 0.0
    %3706 = vmatpush1.msra.mxu0 0.0
    %3707 = vmatprep.subr.mxu0 0.0
    %3708 = vmatpush1.msra.mxu0 0.0
    %3709 = vmatprep.subr.mxu0 0.0
    %3710 = vmatpush1.msra.mxu0 0.0
    %3711 = vmatprep.subr.mxu0 0.0
    %3712 = vmatpush1.msra.mxu0 0.0
    %3713 = vmatprep.subr.mxu0 0.0
    %3714 = vmatpush1.msra.mxu0 0.0
    %3715 = vmatprep.subr.mxu0 0.0
    %3716 = vmatpush1.msra.mxu0 0.0
    %3717 = vmatprep.subr.mxu0 0.0
    %3718 = vmatpush1.msra.mxu0 0.0
    %3719 = vmatprep.mubr.f32.mxu0 0.0
    %3720 = vmatmul.mubr.f32.gmra.mrb[0].mxu0 %v3632
    %v3721 = vpop.f32.mrb[0].mxu0
    %v3722 = vadd.f32 %v3629, %v3721
    %v3723 = vpop.f32.mrb[0].mxu0
    %3724 = vmatprep.mubr.f32.mxu0 0.0
    %3725 = vmatmul.mubr.f32.gmra.mrb[0].mxu0 %v3635
    %v3726 = vpop.f32.mrb[0].mxu0
    %v3727 = vadd.f32 %v3629, %v3726
    %v3728 = vpop.f32.mrb[0].mxu0
    %3729 = vmatprep.mubr.f32.mxu0 0.0
    %3730 = vmatmul.mubr.f32.gmra.mrb[0].mxu0 %v3638
    %v3731 = vpop.f32.mrb[0].mxu0
    %v3732 = vadd.f32 %v3629, %v3731
    %v3733 = vpop.f32.mrb[0].mxu0
    %3734 = vmatprep.mubr.f32.mxu0 0.0
    %3735 = vmatmul.mubr.f32.gmra.mrb[0].mxu0 %v3641
    %v3736 = vpop.f32.mrb[0].mxu0
    %v3737 = vadd.f32 %v3629, %v3736
    %v3738 = vpop.f32.mrb[0].mxu0
    %3739 = vmatprep.mubr.f32.mxu0 0.0
    %3740 = vmatmul.mubr.f32.gmra.mrb[0].mxu0 %v3644
    %v3741 = vpop.f32.mrb[0].mxu0
    %v3742 = vadd.f32 %v3629, %v3741
    %v3743 = vpop.f32.mrb[0].mxu0
    %3744 = vmatprep.mubr.f32.mxu0 0.0
    %3745 = vmatmul.mubr.f32.gmra.mrb[0].mxu0 %v3647
    %v3746 = vpop.f32.mrb[0].mxu0
    %v3747 = vadd.f32 %v3629, %v3746
    %v3748 = vpop.f32.mrb[0].mxu0
    %3749 = vmatprep.mubr.f32.mxu0 0.0
    %3750 = vmatmul.mubr.f32.gmra.mrb[0].mxu0 %v3650
    %v3751 = vpop.f32.mrb[0].mxu0
    %v3752 = vadd.f32 %v3629, %v3751
    %v3753 = vpop.f32.mrb[0].mxu0
    %3754 = vmatprep.mubr.f32.mxu0 0.0
    %3755 = vmatmul.mubr.f32.gmra.mrb[0].mxu0 %v3653
    %v3756 = vpop.f32.mrb[0].mxu0
    %v3757 = vadd.f32 %v3629, %v3756
    %v3758 = vpop.f32.mrb[0].mxu0
    %3759 = vdwg.mxu0
    %vm3760 = vcmask 7168
    %3761 = vst.msk [vmem:[%s13] sm:$0xff] %vm3760, %v3722
    %3762 = vst.msk [vmem:[%s13 + $0x8] sm:$0xff] %vm3760, %v3727
    %3763 = vst.msk [vmem:[%s13 + $0x10] sm:$0xff] %vm3760, %v3732
    %3764 = vst.msk [vmem:[%s13 + $0x18] sm:$0xff] %vm3760, %v3737
    %3765 = vst.msk [vmem:[%s13 + $0x20] sm:$0xff] %vm3760, %v3742
    %3766 = vst.msk [vmem:[%s13 + $0x28] sm:$0xff] %vm3760, %v3747
    %3767 = vst.msk [vmem:[%s13 + $0x30] sm:$0xff] %vm3760, %v3752
    %3768 = vst.msk [vmem:[%s13 + $0x38] sm:$0xff] %vm3760, %v3757
    // Predicated region
    $region66: #{tpu_custom_call.1} parent=1 // pred_check
      _
    $region67: #{tpu_custom_call.1} parent=1 // pred_check_branch
      %3770 = sbr.rel (0) target = $region69
    $region68: #{tpu_custom_call.1} parent=1 // pred_region
      _
    $region69: #{tpu_custom_call.1} parent=1 // pred_fallthru
      _
    // Predicated region
    $region70: #{tpu_custom_call.1} parent=1 // pred_check
      _
    $region71: #{tpu_custom_call.1} parent=1 // pred_check_branch
      %3772 = sbr.rel (0) target = $region73
    $region72: #{tpu_custom_call.1} parent=1 // pred_region
      _
    $region73: #{tpu_custom_call.1} parent=1 // pred_fallthru
      _
    %3773 = vsyncpa [#allocation6], 1
    %3774 = vsyncpa [#allocation8], 1

</llo_original>
